<compile_context>
chip_gen: v5e
topology: v5e:2x2
jax: 0.10.0
libtpu: 0.0.40
codegen_flags: <defaults>
</compile_context>

<pallas_src>
import functools

import jax
import jax.numpy as jnp
from jax.experimental import pallas as pl
from jax.experimental.pallas import tpu as pltpu

# ---- static model config (Encodec-like defaults at toy scale) -----------------------
CHANNELS = 1        # audio channels (mono)
N_FILTERS = 32      # first conv width
DIMENSION = 128     # quantizer / bottleneck dimension (lane-dense)
N_Q = 4             # number of residual codebooks
BINS = 128          # codebook size (power of two, lane-dense)
TILE_F = 512        # bottleneck frames per tile for the fused encoder / decoder
TILE_N = 512        # rows per tile for the RVQ
VMEM_LIMIT = 32 * 1024 * 1024


def _round_up(x, m):
    return (x + m - 1) // m * m


def _pick_frame_tile(t_f):
    """Largest frame tile <= TILE_F that divides t_f.  TODO(synk): ragged tail tiles."""
    if t_f <= TILE_F:
        return t_f
    for f in range(TILE_F, 7, -8):
        if t_f % f == 0:
            return f
    return t_f


def _elu(v):
    # exp only on the non-positive side (no inf for large positive activations)
    return jnp.where(v > 0.0, v, jnp.exp(jnp.minimum(v, 0.0)) - 1.0)


# ----------------------------------------------------------------------------------
# Pallas kernel 1: fused encoder  (causal Conv1d(k=4,s=2)+ELU -> Conv1d(k=4,s=2))
# ----------------------------------------------------------------------------------
def _encoder_kernel(x_ref, w1_ref, b1_ref, w2_ref, b2_ref, o_ref, xcar, hcar, *, f):
    """One tile of f bottleneck frames.

    Input rows are waveform quads xq[v] = x[4v:4v+4].  The carries hold xq[f0-1] and the
    previous (post-ELU) enc1 output pair (h1[2f0-2] | h1[2f0-1]), so every HBM byte is
    read once and the causal left padding is a zero carry at the first time tile.
    """
    ti = pl.program_id(1)

    @pl.when(ti == 0)
    def _():
        xcar[...] = jnp.zeros((1, 4), jnp.float32)
        hcar[...] = jnp.zeros((1, 2 * N_FILTERS), jnp.float32)

    xq = x_ref[0]                                                        # [f, 4] bf16
    xprev = jnp.concatenate([xcar[...].astype(xq.dtype), xq[:f - 1]], axis=0)
    x8 = jnp.concatenate([xprev, xq], axis=1)                            # [f, 8]
    # enc1: both taps + even/odd output rows in one K=8 matmul -> [h1_even | h1_odd]
    h = jnp.dot(x8, w1_ref[...], preferred_element_type=jnp.float32) + b1_ref[...]
    h = _elu(h).astype(jnp.bfloat16)                                     # [f, 64]
    hprev = jnp.concatenate([hcar[...].astype(h.dtype), h[:f - 1]], axis=0)
    h128 = jnp.concatenate([hprev, h], axis=1)                           # [f, 128]
    # enc2: all four taps in one K=128 matmul
    emb = jnp.dot(h128, w2_ref[...], preferred_element_type=jnp.float32) + b2_ref[...]
    o_ref[0] = emb.astype(o_ref.dtype)                                   # bf16 out

    xcar[...] = xq[f - 1:f].astype(jnp.float32)
    hcar[...] = h[f - 1:f].astype(jnp.float32)


def _pallas_encoder(xq, params, f):
    bsz, t_f, _ = xq.shape
    nt = t_f // f
    kernel = functools.partial(_encoder_kernel, f=f)
    return pl.pallas_call(
        kernel,
        out_shape=jax.ShapeDtypeStruct((bsz, t_f, DIMENSION), jnp.bfloat16),
        grid=(bsz, nt),
        in_specs=[
            pl.BlockSpec((1, f, 4), lambda b, i: (b, i, 0)),              # streamed quads
            pl.BlockSpec((8, 2 * N_FILTERS), lambda b, i: (0, 0)),        # resident weights
            pl.BlockSpec((1, 2 * N_FILTERS), lambda b, i: (0, 0)),
            pl.BlockSpec((4 * N_FILTERS, DIMENSION), lambda b, i: (0, 0)),
            pl.BlockSpec((1, DIMENSION), lambda b, i: (0, 0)),
        ],
        out_specs=pl.BlockSpec((1, f, DIMENSION), lambda b, i: (b, i, 0)),
        scratch_shapes=[pltpu.VMEM((1, 4), jnp.float32),                  # xq carry
                        pltpu.VMEM((1, 2 * N_FILTERS), jnp.float32)],     # h1 pair carry
        compiler_params=pltpu.CompilerParams(
            dimension_semantics=("parallel", "arbitrary"),                # batch / time(carry)
            vmem_limit_bytes=VMEM_LIMIT),
    )(xq, params["enc1_w"], params["enc1_b"], params["enc2_w"], params["enc2_b"])


# ----------------------------------------------------------------------------------
# Pallas kernel 2: fused decoder (ConvT(k=4,s=2)+ELU -> ConvT(k=4,s=2), causal trim)
# ----------------------------------------------------------------------------------
def _decoder_kernel(q_ref, w1_ref, b1_ref, w2_ref, b2_ref, o_ref, qcar, ocar, *, f):
    """One tile of f bottleneck frames -> 4f waveform samples ([f, 4] output rows)."""
    ti = pl.program_id(1)

    @pl.when(ti == 0)
    def _():
        qcar[...] = jnp.zeros((1, DIMENSION), jnp.float32)
        ocar[...] = jnp.zeros((1, N_FILTERS), jnp.float32)

    qb = q_ref[0]                                                        # [f, 128] bf16
    qprev = jnp.concatenate([qcar[...].astype(qb.dtype), qb[:f - 1]], axis=0)
    x2 = jnp.concatenate([qprev, qb], axis=1)                            # [f, 256]
    # dec1: both taps + even/odd output rows in one K=256 matmul -> [d1_even | d1_odd]
    eo = jnp.dot(x2, w1_ref[...], preferred_element_type=jnp.float32) + b1_ref[...]
    eo = _elu(eo)                                                        # [f, 64] f32
    d_even = eo[:, :N_FILTERS]
    d_odd = eo[:, N_FILTERS:2 * N_FILTERS]
    d_odd_prev = jnp.concatenate([ocar[...], d_odd[:f - 1]], axis=0)     # d1_odd[frame-1]
    z = jnp.concatenate([d_even, d_odd, d_odd_prev], axis=1)             # [f, 96] f32
    # dec2: all taps / both output pairs in one K=96 matmul -> 4 waveform samples per row
    y = jnp.dot(z, w2_ref[...], preferred_element_type=jnp.float32) + b2_ref[...]
    o_ref[0] = y.astype(o_ref.dtype)                                     # [f, 4] f32

    qcar[...] = qb[f - 1:f].astype(jnp.float32)
    ocar[...] = d_odd[f - 1:f]


def _pallas_decoder(q, params, f):
    bsz, t_f, _ = q.shape
    nt = t_f // f
    kernel = functools.partial(_decoder_kernel, f=f)
    return pl.pallas_call(
        kernel,
        out_shape=jax.ShapeDtypeStruct((bsz, t_f, 4), jnp.float32),
        grid=(bsz, nt),
        in_specs=[
            pl.BlockSpec((1, f, DIMENSION), lambda b, i: (b, i, 0)),      # streamed quant
            pl.BlockSpec((2 * DIMENSION, 2 * N_FILTERS), lambda b, i: (0, 0)),
            pl.BlockSpec((1, 2 * N_FILTERS), lambda b, i: (0, 0)),
            pl.BlockSpec((3 * N_FILTERS, 4), lambda b, i: (0, 0)),
            pl.BlockSpec((1, 4), lambda b, i: (0, 0)),
        ],
        out_specs=pl.BlockSpec((1, f, 4), lambda b, i: (b, i, 0)),        # exact-size waveform
        scratch_shapes=[pltpu.VMEM((1, DIMENSION), jnp.float32),          # q carry
                        pltpu.VMEM((1, N_FILTERS), jnp.float32)],         # d1_odd carry
        compiler_params=pltpu.CompilerParams(
            dimension_semantics=("parallel", "arbitrary"),
            vmem_limit_bytes=VMEM_LIMIT),
    )(q, params["dec1_w"], params["dec1_b"], params["dec2_w"], params["dec2_b"])


# ----------------------------------------------------------------------------------
# Pallas kernel 3: Residual Vector Quantizer (row-tiled, single bf16 codebook copy)
# ----------------------------------------------------------------------------------
def _rvq_kernel(x_ref, cbt_ref, cbsq_ref, q_ref, lp_ref, *, n_q, bins, tile_n, n_valid):
    tile = pl.program_id(0)
    res = x_ref[...].astype(jnp.float32)                       # [tile_n, D] residual
    quant = jnp.zeros_like(res)
    lane_iota = jax.lax.broadcasted_iota(jnp.int32, (tile_n, bins), 1)
    row_ids = tile * tile_n + jax.lax.broadcasted_iota(jnp.int32, (tile_n, 1), 0)
    valid = (row_ids < n_valid).astype(jnp.float32)            # mask rows padded for tiling
    sse = jnp.float32(0.0)

    for qi in range(n_q):                                      # n_q small -> unrolled
        cbt = cbt_ref[qi]                                      # [D, bins] bf16, resident
        # argmin_b ||res - c_b||^2 == argmin_b (||c_b||^2 - 2 res.c_b); bf16 MXU matmuls,
        # f32 distances / argmin / loss.
        cross = jnp.dot(res.astype(jnp.bfloat16), cbt,
                        preferred_element_type=jnp.float32)    # [tile_n, bins]
        dist = cbsq_ref[qi] - 2.0 * cross
        min_d = jnp.min(dist, axis=1, keepdims=True)
        cand = jnp.where(dist <= min_d, lane_iota, bins)       # first-minimum argmin
        idx = jnp.min(cand, axis=1, keepdims=True)             # [tile_n, 1]
        onehot = (lane_iota == idx).astype(jnp.bfloat16)
        # dequant lookup via the same transposed codebook (contract the bins axis)
        qvec = jax.lax.dot_general(onehot, cbt,
                                   dimension_numbers=(((1,), (1,)), ((), ())),
                                   preferred_element_type=jnp.float32)   # [tile_n, D]
        diff = qvec - res
        sse = sse + jnp.sum(valid * diff * diff)
        quant = quant + qvec
        res = res - qvec

    q_ref[...] = quant.astype(q_ref.dtype)                     # bf16 out (decoder input)
    lane0 = jax.lax.broadcasted_iota(jnp.int32, (1, 128), 1) == 0
    lp_ref[0] = jnp.where(lane0, sse, 0.0)                     # per-tile SSE in lane 0 only


def _pallas_rvq(x_flat, cb_t, cb_sq):
    n, d = x_flat.shape
    n_q, _, bins = cb_t.shape
    tile_n = min(TILE_N, _round_up(n, 8))
    n_pad = _round_up(n, tile_n)
    if n_pad > n:
        x_flat = jnp.pad(x_flat, ((0, n_pad - n), (0, 0)))
    nt = n_pad // tile_n
    kernel = functools.partial(_rvq_kernel, n_q=n_q, bins=bins, tile_n=tile_n, n_valid=n)
    quant, loss_parts = pl.pallas_call(
        kernel,
        out_shape=(jax.ShapeDtypeStruct((n_pad, d), jnp.bfloat16),
                   jax.ShapeDtypeStruct((nt, 1, 128), jnp.float32)),
        grid=(nt,),
        in_specs=[
            pl.BlockSpec((tile_n, d), lambda i: (i, 0)),           # streamed rows (bf16)
            pl.BlockSpec((n_q, d, bins), lambda i: (0, 0, 0)),     # resident bf16 codebook^T
            pl.BlockSpec((n_q, 1, bins), lambda i: (0, 0, 0)),     # resident ||c||^2 (f32)
        ],
        out_specs=(pl.BlockSpec((tile_n, d), lambda i: (i, 0)),
                   pl.BlockSpec((1, 1, 128), lambda i: (i, 0, 0))),
        compiler_params=pltpu.CompilerParams(
            dimension_semantics=("parallel",),
            vmem_limit_bytes=VMEM_LIMIT),
    )(x_flat, cb_t, cb_sq)
    # mean over stages of MSE(quantized_stage, residual) = sum(SSE) / (n_q * N * D)
    loss = jnp.sum(loss_parts) / float(n_q * n * d)
    return quant[:n], loss


# ----------------------------------------------------------------------------------
# Encodec_RVQ forward: encode -> RVQ -> decode, returns (reconstruction, commitment loss)
# ----------------------------------------------------------------------------------
def encodec_rvq_forward(x_ncl, params):
    bsz, ch, t = x_ncl.shape
    assert ch == CHANNELS == 1, "toy stand-in is mono"            # TODO(synk): stereo
    assert t % 4 == 0, "toy model uses two stride-2 layers"
    t_f = t // 4
    f = _pick_frame_tile(t_f)
    assert t_f % f == 0

    # waveform quads: row v = x[4v:4v+4]   (channels-last, mono -> 4 lanes per frame)
    xq = x_ncl[:, 0, :].reshape(bsz, t_f, 4).astype(jnp.bfloat16)

    # -------- fused encoder (segment=None, normalize=False) ---------------------------
    emb = _pallas_encoder(xq, params, f)                          # [B, t_f, 128] bf16

    # -------- residual vector quantizer (quantized value + commitment penalty) --------
    quant_flat, loss = _pallas_rvq(emb.reshape(bsz * t_f, DIMENSION),
                                   params["cb_t"], params["cb_sq"])
    quant = quant_flat.reshape(bsz, t_f, DIMENSION)               # bf16

    # -------- fused decoder (causal ConvTranspose stack, right-trim k-s) --------------
    y4 = _pallas_decoder(quant, params, f)                        # [B, t_f, 4] f32
    y_ncl = y4.reshape(bsz, 1, t)                                 # NLC quads -> NCL wave
    return y_ncl[:, :, :t], jnp.reshape(loss, (1,))


# ----------------------------------------------------------------------------------
# Parameter construction (kernel-ready packed layouts; conv taps derived explicitly)
# ----------------------------------------------------------------------------------
def init_params(key):
    ks = jax.random.split(key, 9)
    std = 0.02
    nf, dim = N_FILTERS, DIMENSION

    # raw conv taps: Conv1d weight[j]: [cin, cout]; ConvTranspose1d weight[j]: [cin, cout]
    w_e1 = jax.random.normal(ks[0], (4, CHANNELS, nf), jnp.float32) * std
    b_e1 = jax.random.normal(ks[1], (nf,), jnp.float32) * std
    w_e2 = jax.random.normal(ks[2], (4, nf, dim), jnp.float32) * std
    b_e2 = jax.random.normal(ks[3], (dim,), jnp.float32) * std
    w_d1 = jax.random.normal(ks[4], (4, dim, nf), jnp.float32) * std
    b_d1 = jax.random.normal(ks[5], (nf,), jnp.float32) * std
    w_d2 = jax.random.normal(ks[6], (4, nf, CHANNELS), jnp.float32) * std
    b_d2 = jax.random.normal(ks[7], (CHANNELS,), jnp.float32) * std
    codebooks = jax.random.normal(ks[8], (N_Q, BINS, dim), jnp.float32)

    # enc1 packed [8, 2*nf]: input lanes = [xq[v-1](4) | xq[v](4)],
    # output lanes = [h1_even | h1_odd]  (h1[t] = sum_j W[j] x[2t-2+j]).
    w1 = jnp.zeros((8, 2 * nf), jnp.float32)
    w1 = w1.at[2, :nf].set(w_e1[0, 0]).at[3, :nf].set(w_e1[1, 0])
    w1 = w1.at[4, :nf].set(w_e1[2, 0]).at[5, :nf].set(w_e1[3, 0])
    w1 = w1.at[4, nf:].set(w_e1[0, 0]).at[5, nf:].set(w_e1[1, 0])
    w1 = w1.at[6, nf:].set(w_e1[2, 0]).at[7, nf:].set(w_e1[3, 0])
    b1 = jnp.concatenate([b_e1, b_e1])[None, :]

    # enc2 packed [4*nf, dim]: input lanes = [h_e[f-1] | h_o[f-1] | h_e[f] | h_o[f]]
    w2 = jnp.concatenate([w_e2[0], w_e2[1], w_e2[2], w_e2[3]], axis=0)
    b2 = b_e2[None, :]

    # dec1 packed [2*dim, 2*nf]: input lanes = [q[p-1] | q[p]], outputs [d1_even | d1_odd]
    # (ConvT: d1[2p] = q[p] Wt0 + q[p-1] Wt2 ; d1[2p+1] = q[p] Wt1 + q[p-1] Wt3)
    wd1 = jnp.zeros((2 * dim, 2 * nf), jnp.float32)
    wd1 = wd1.at[:dim, :nf].set(w_d1[2]).at[:dim, nf:].set(w_d1[3])
    wd1 = wd1.at[dim:, :nf].set(w_d1[0]).at[dim:, nf:].set(w_d1[1])
    bd1 = jnp.concatenate([b_d1, b_d1])[None, :]

    # dec2 packed [3*nf, 4]: input lanes = [d1_even[f] | d1_odd[f] | d1_odd[f-1]],
    # output lanes = the 4 waveform samples of bottleneck frame f.
    wd2 = jnp.zeros((3 * nf, 4), jnp.float32)
    wd2 = wd2.at[:nf, 0].set(w_d2[0, :, 0]).at[:nf, 1].set(w_d2[1, :, 0])
    wd2 = wd2.at[:nf, 2].set(w_d2[2, :, 0]).at[:nf, 3].set(w_d2[3, :, 0])
    wd2 = wd2.at[nf:2 * nf, 2].set(w_d2[0, :, 0]).at[nf:2 * nf, 3].set(w_d2[1, :, 0])
    wd2 = wd2.at[2 * nf:, 0].set(w_d2[2, :, 0]).at[2 * nf:, 1].set(w_d2[3, :, 0])
    bd2 = jnp.full((1, 4), b_d2[0], jnp.float32)

    return {
        "enc1_w": w1.astype(jnp.bfloat16), "enc1_b": b1,
        "enc2_w": w2.astype(jnp.bfloat16), "enc2_b": b2,
        "dec1_w": wd1.astype(jnp.bfloat16), "dec1_b": bd1,
        "dec2_w": wd2, "dec2_b": bd2,                                   # final layer kept f32
        "cb_t": jnp.transpose(codebooks, (0, 2, 1)).astype(jnp.bfloat16),  # [n_q, D, bins]
        "cb_sq": jnp.sum(codebooks * codebooks, -1)[:, None, :],           # [n_q, 1, bins]
    }


if __name__ == "__main__":
    key = jax.random.PRNGKey(0)
    k_x, k_p = jax.random.split(key)

    B, C, T = 2, 1, 160                       # small mono waveform
    x = jax.random.normal(k_x, (B, C, T), dtype=jnp.float32)
    params = init_params(k_p)

    fwd = jax.jit(encodec_rvq_forward)
    y_hat, loss_commit = fwd(x, params)
    jax.block_until_ready((y_hat, loss_commit))

    assert y_hat.shape == (B, C, T), y_hat.shape
    assert loss_commit.shape == (1,), loss_commit.shape
    assert bool(jnp.all(jnp.isfinite(y_hat))) and bool(jnp.isfinite(loss_commit[0]))
    # TODO(synk): full SEANet residual blocks / LSTM and bandwidth-dependent n_q selection
    # are not modeled; this covers the conv stacks + RVQ + commitment-loss forward path.
    print("KERNEL_OK")
</pallas_src>

<mosaic_0001>
module attributes {stable_mosaic.version = 11 : i64} {
  func.func @_rvq_kernel(%arg0: i32, %arg1: memref<80x128xbf16, #tpu.memory_space<vmem>>, %arg2: memref<4x128x128xbf16, #tpu.memory_space<vmem>>, %arg3: memref<4x1x128xf32, #tpu.memory_space<vmem>>, %arg4: memref<80x128xbf16, #tpu.memory_space<vmem>>, %arg5: memref<1x1x128xf32, #tpu.memory_space<vmem>>) attributes {dimension_semantics = [#tpu.dimension_semantics<parallel>], iteration_bounds = array<i64: 1>, scalar_prefetch = 0 : i64, scratch_operands = 0 : i64, tpu.core_type = #tpu.core_type<tc>, window_params = [{transform_indices = @transform_0, window_bounds = array<i64: 80, 128>}, {pipeline_mode = #tpu.pipeline_mode<synchronous>, transform_indices = @transform_1, window_bounds = array<i64: 4, 128, 128>}, {pipeline_mode = #tpu.pipeline_mode<synchronous>, transform_indices = @transform_2, window_bounds = array<i64: 4, 1, 128>}, {transform_indices = @transform_3, window_bounds = array<i64: 80, 128>}, {transform_indices = @transform_4, window_bounds = array<i64: 1, 1, 128>}]} {
    %c0 = arith.constant 0 : index
    %c0_0 = arith.constant 0 : index
    %0 = vector.load %arg1[%c0, %c0_0] : memref<80x128xbf16, #tpu.memory_space<vmem>>, vector<80x128xbf16>
    %1 = arith.extf %0 : vector<80x128xbf16> to vector<80x128xf32>
    %cst = arith.constant 0.000000e+00 : f32
    %2 = vector.broadcast %cst : f32 to vector<80x128xf32>
    %3 = tpu.iota {dimensions = array<i32: 1>} : vector<80x128xi32>
    %c80_i32 = arith.constant 80 : i32
    %4 = arith.muli %arg0, %c80_i32 : i32
    %5 = tpu.iota {dimensions = array<i32: 0>} : vector<80x1xi32>
    %6 = vector.broadcast %4 : i32 to vector<80x1xi32>
    %7 = arith.addi %6, %5 : vector<80x1xi32>
    %c80_i32_1 = arith.constant 80 : i32
    %8 = vector.broadcast %c80_i32_1 : i32 to vector<80x1xi32>
    %9 = arith.cmpi slt, %7, %8 : vector<80x1xi32>
    %10 = arith.extui %9 : vector<80x1xi1> to vector<80x1xi32>
    %11 = arith.sitofp %10 : vector<80x1xi32> to vector<80x1xf32>
    %c0_2 = arith.constant 0 : index
    %c0_3 = arith.constant 0 : index
    %c0_4 = arith.constant 0 : index
    %12 = vector.load %arg2[%c0_2, %c0_3, %c0_4] : memref<4x128x128xbf16, #tpu.memory_space<vmem>>, vector<1x128x128xbf16>
    %13 = vector.shape_cast %12 : vector<1x128x128xbf16> to vector<128x128xbf16>
    %14 = arith.truncf %1 : vector<80x128xf32> to vector<80x128xbf16>
    %cst_5 = arith.constant dense<0.000000e+00> : vector<80x128xf32>
    %15 = tpu.matmul %14, %13, %cst_5 {dimension_numbers = #tpu.dot_dimension_numbers<[1], [0], [0], [1], [0, 0, 1, 1], [], []>} : vector<80x128xbf16>, vector<128x128xbf16>, vector<80x128xf32> -> vector<80x128xf32>
    %c0_6 = arith.constant 0 : index
    %c0_7 = arith.constant 0 : index
    %c0_8 = arith.constant 0 : index
    %16 = vector.load %arg3[%c0_6, %c0_7, %c0_8] : memref<4x1x128xf32, #tpu.memory_space<vmem>>, vector<1x1x128xf32>
    %17 = vector.shape_cast %16 : vector<1x1x128xf32> to vector<1x128xf32>
    %cst_9 = arith.constant 2.000000e+00 : f32
    %18 = vector.broadcast %cst_9 : f32 to vector<80x128xf32>
    %19 = arith.mulf %18, %15 : vector<80x128xf32>
    %20 = vector.broadcast %17 : vector<1x128xf32> to vector<80x128xf32>
    %21 = arith.subf %20, %19 : vector<80x128xf32>
    %cst_10 = arith.constant dense<0x7F800000> : vector<80xf32>
    %22 = vector.multi_reduction <minimumf>, %21, %cst_10 [1] : vector<80x128xf32> to vector<80xf32>
    %23 = vector.shape_cast %22 : vector<80xf32> to vector<80x1xf32>
    %24 = vector.broadcast %23 : vector<80x1xf32> to vector<80x128xf32>
    %25 = arith.cmpf ole, %21, %24 : vector<80x128xf32>
    %c128_i32 = arith.constant 128 : i32
    %26 = vector.broadcast %c128_i32 : i32 to vector<80x128xi32>
    %27 = arith.select %25, %3, %26 : vector<80x128xi1>, vector<80x128xi32>
    %cst_11 = arith.constant dense<2147483647> : vector<80xi32>
    %28 = vector.multi_reduction <minsi>, %27, %cst_11 [1] : vector<80x128xi32> to vector<80xi32>
    %29 = vector.shape_cast %28 : vector<80xi32> to vector<80x1xi32>
    %30 = vector.broadcast %29 : vector<80x1xi32> to vector<80x128xi32>
    %31 = arith.cmpi eq, %3, %30 : vector<80x128xi32>
    %32 = arith.extui %31 : vector<80x128xi1> to vector<80x128xi32>
    %33 = arith.sitofp %32 : vector<80x128xi32> to vector<80x128xf32>
    %34 = arith.truncf %33 : vector<80x128xf32> to vector<80x128xbf16>
    %cst_12 = arith.constant dense<0.000000e+00> : vector<80x128xf32>
    %35 = tpu.matmul %34, %13, %cst_12 {dimension_numbers = #tpu.dot_dimension_numbers<[1], [1], [0], [0], [0, 0, 1, 0], [], []>} : vector<80x128xbf16>, vector<128x128xbf16>, vector<80x128xf32> -> vector<80x128xf32>
    %36 = arith.subf %35, %1 : vector<80x128xf32>
    %37 = vector.broadcast %11 : vector<80x1xf32> to vector<80x128xf32>
    %38 = arith.mulf %37, %36 : vector<80x128xf32>
    %39 = arith.mulf %38, %36 : vector<80x128xf32>
    %40 = vector.shape_cast %39 : vector<80x128xf32> to vector<1x80x128xf32>
    %cst_13 = arith.constant dense<0.000000e+00> : vector<1xf32>
    %41 = vector.multi_reduction <add>, %40, %cst_13 [1, 2] : vector<1x80x128xf32> to vector<1xf32>
    %42 = vector.shape_cast %41 : vector<1xf32> to vector<1x1x1xf32>
    %43 = vector.extract %42[0, 0, 0] : f32 from vector<1x1x1xf32>
    %cst_14 = arith.constant 0.000000e+00 : f32
    %44 = arith.addf %cst_14, %43 : f32
    %45 = arith.addf %2, %35 : vector<80x128xf32>
    %46 = arith.subf %1, %35 : vector<80x128xf32>
    %c1 = arith.constant 1 : index
    %c0_15 = arith.constant 0 : index
    %c0_16 = arith.constant 0 : index
    %47 = vector.load %arg2[%c1, %c0_15, %c0_16] : memref<4x128x128xbf16, #tpu.memory_space<vmem>>, vector<1x128x128xbf16>
    %48 = vector.shape_cast %47 : vector<1x128x128xbf16> to vector<128x128xbf16>
    %49 = arith.truncf %46 : vector<80x128xf32> to vector<80x128xbf16>
    %cst_17 = arith.constant dense<0.000000e+00> : vector<80x128xf32>
    %50 = tpu.matmul %49, %48, %cst_17 {dimension_numbers = #tpu.dot_dimension_numbers<[1], [0], [0], [1], [0, 0, 1, 1], [], []>} : vector<80x128xbf16>, vector<128x128xbf16>, vector<80x128xf32> -> vector<80x128xf32>
    %c1_18 = arith.constant 1 : index
    %c0_19 = arith.constant 0 : index
    %c0_20 = arith.constant 0 : index
    %51 = vector.load %arg3[%c1_18, %c0_19, %c0_20] : memref<4x1x128xf32, #tpu.memory_space<vmem>>, vector<1x1x128xf32>
    %52 = vector.shape_cast %51 : vector<1x1x128xf32> to vector<1x128xf32>
    %cst_21 = arith.constant 2.000000e+00 : f32
    %53 = vector.broadcast %cst_21 : f32 to vector<80x128xf32>
    %54 = arith.mulf %53, %50 : vector<80x128xf32>
    %55 = vector.broadcast %52 : vector<1x128xf32> to vector<80x128xf32>
    %56 = arith.subf %55, %54 : vector<80x128xf32>
    %cst_22 = arith.constant dense<0x7F800000> : vector<80xf32>
    %57 = vector.multi_reduction <minimumf>, %56, %cst_22 [1] : vector<80x128xf32> to vector<80xf32>
    %58 = vector.shape_cast %57 : vector<80xf32> to vector<80x1xf32>
    %59 = vector.broadcast %58 : vector<80x1xf32> to vector<80x128xf32>
    %60 = arith.cmpf ole, %56, %59 : vector<80x128xf32>
    %c128_i32_23 = arith.constant 128 : i32
    %61 = vector.broadcast %c128_i32_23 : i32 to vector<80x128xi32>
    %62 = arith.select %60, %3, %61 : vector<80x128xi1>, vector<80x128xi32>
    %cst_24 = arith.constant dense<2147483647> : vector<80xi32>
    %63 = vector.multi_reduction <minsi>, %62, %cst_24 [1] : vector<80x128xi32> to vector<80xi32>
    %64 = vector.shape_cast %63 : vector<80xi32> to vector<80x1xi32>
    %65 = vector.broadcast %64 : vector<80x1xi32> to vector<80x128xi32>
    %66 = arith.cmpi eq, %3, %65 : vector<80x128xi32>
    %67 = arith.extui %66 : vector<80x128xi1> to vector<80x128xi32>
    %68 = arith.sitofp %67 : vector<80x128xi32> to vector<80x128xf32>
    %69 = arith.truncf %68 : vector<80x128xf32> to vector<80x128xbf16>
    %cst_25 = arith.constant dense<0.000000e+00> : vector<80x128xf32>
    %70 = tpu.matmul %69, %48, %cst_25 {dimension_numbers = #tpu.dot_dimension_numbers<[1], [1], [0], [0], [0, 0, 1, 0], [], []>} : vector<80x128xbf16>, vector<128x128xbf16>, vector<80x128xf32> -> vector<80x128xf32>
    %71 = arith.subf %70, %46 : vector<80x128xf32>
    %72 = vector.broadcast %11 : vector<80x1xf32> to vector<80x128xf32>
    %73 = arith.mulf %72, %71 : vector<80x128xf32>
    %74 = arith.mulf %73, %71 : vector<80x128xf32>
    %75 = vector.shape_cast %74 : vector<80x128xf32> to vector<1x80x128xf32>
    %cst_26 = arith.constant dense<0.000000e+00> : vector<1xf32>
    %76 = vector.multi_reduction <add>, %75, %cst_26 [1, 2] : vector<1x80x128xf32> to vector<1xf32>
    %77 = vector.shape_cast %76 : vector<1xf32> to vector<1x1x1xf32>
    %78 = vector.extract %77[0, 0, 0] : f32 from vector<1x1x1xf32>
    %79 = arith.addf %44, %78 : f32
    %80 = arith.addf %45, %70 : vector<80x128xf32>
    %81 = arith.subf %46, %70 : vector<80x128xf32>
    %c2 = arith.constant 2 : index
    %c0_27 = arith.constant 0 : index
    %c0_28 = arith.constant 0 : index
    %82 = vector.load %arg2[%c2, %c0_27, %c0_28] : memref<4x128x128xbf16, #tpu.memory_space<vmem>>, vector<1x128x128xbf16>
    %83 = vector.shape_cast %82 : vector<1x128x128xbf16> to vector<128x128xbf16>
    %84 = arith.truncf %81 : vector<80x128xf32> to vector<80x128xbf16>
    %cst_29 = arith.constant dense<0.000000e+00> : vector<80x128xf32>
    %85 = tpu.matmul %84, %83, %cst_29 {dimension_numbers = #tpu.dot_dimension_numbers<[1], [0], [0], [1], [0, 0, 1, 1], [], []>} : vector<80x128xbf16>, vector<128x128xbf16>, vector<80x128xf32> -> vector<80x128xf32>
    %c2_30 = arith.constant 2 : index
    %c0_31 = arith.constant 0 : index
    %c0_32 = arith.constant 0 : index
    %86 = vector.load %arg3[%c2_30, %c0_31, %c0_32] : memref<4x1x128xf32, #tpu.memory_space<vmem>>, vector<1x1x128xf32>
    %87 = vector.shape_cast %86 : vector<1x1x128xf32> to vector<1x128xf32>
    %cst_33 = arith.constant 2.000000e+00 : f32
    %88 = vector.broadcast %cst_33 : f32 to vector<80x128xf32>
    %89 = arith.mulf %88, %85 : vector<80x128xf32>
    %90 = vector.broadcast %87 : vector<1x128xf32> to vector<80x128xf32>
    %91 = arith.subf %90, %89 : vector<80x128xf32>
    %cst_34 = arith.constant dense<0x7F800000> : vector<80xf32>
    %92 = vector.multi_reduction <minimumf>, %91, %cst_34 [1] : vector<80x128xf32> to vector<80xf32>
    %93 = vector.shape_cast %92 : vector<80xf32> to vector<80x1xf32>
    %94 = vector.broadcast %93 : vector<80x1xf32> to vector<80x128xf32>
    %95 = arith.cmpf ole, %91, %94 : vector<80x128xf32>
    %c128_i32_35 = arith.constant 128 : i32
    %96 = vector.broadcast %c128_i32_35 : i32 to vector<80x128xi32>
    %97 = arith.select %95, %3, %96 : vector<80x128xi1>, vector<80x128xi32>
    %cst_36 = arith.constant dense<2147483647> : vector<80xi32>
    %98 = vector.multi_reduction <minsi>, %97, %cst_36 [1] : vector<80x128xi32> to vector<80xi32>
    %99 = vector.shape_cast %98 : vector<80xi32> to vector<80x1xi32>
    %100 = vector.broadcast %99 : vector<80x1xi32> to vector<80x128xi32>
    %101 = arith.cmpi eq, %3, %100 : vector<80x128xi32>
    %102 = arith.extui %101 : vector<80x128xi1> to vector<80x128xi32>
    %103 = arith.sitofp %102 : vector<80x128xi32> to vector<80x128xf32>
    %104 = arith.truncf %103 : vector<80x128xf32> to vector<80x128xbf16>
    %cst_37 = arith.constant dense<0.000000e+00> : vector<80x128xf32>
    %105 = tpu.matmul %104, %83, %cst_37 {dimension_numbers = #tpu.dot_dimension_numbers<[1], [1], [0], [0], [0, 0, 1, 0], [], []>} : vector<80x128xbf16>, vector<128x128xbf16>, vector<80x128xf32> -> vector<80x128xf32>
    %106 = arith.subf %105, %81 : vector<80x128xf32>
    %107 = vector.broadcast %11 : vector<80x1xf32> to vector<80x128xf32>
    %108 = arith.mulf %107, %106 : vector<80x128xf32>
    %109 = arith.mulf %108, %106 : vector<80x128xf32>
    %110 = vector.shape_cast %109 : vector<80x128xf32> to vector<1x80x128xf32>
    %cst_38 = arith.constant dense<0.000000e+00> : vector<1xf32>
    %111 = vector.multi_reduction <add>, %110, %cst_38 [1, 2] : vector<1x80x128xf32> to vector<1xf32>
    %112 = vector.shape_cast %111 : vector<1xf32> to vector<1x1x1xf32>
    %113 = vector.extract %112[0, 0, 0] : f32 from vector<1x1x1xf32>
    %114 = arith.addf %79, %113 : f32
    %115 = arith.addf %80, %105 : vector<80x128xf32>
    %116 = arith.subf %81, %105 : vector<80x128xf32>
    %c3 = arith.constant 3 : index
    %c0_39 = arith.constant 0 : index
    %c0_40 = arith.constant 0 : index
    %117 = vector.load %arg2[%c3, %c0_39, %c0_40] : memref<4x128x128xbf16, #tpu.memory_space<vmem>>, vector<1x128x128xbf16>
    %118 = vector.shape_cast %117 : vector<1x128x128xbf16> to vector<128x128xbf16>
    %119 = arith.truncf %116 : vector<80x128xf32> to vector<80x128xbf16>
    %cst_41 = arith.constant dense<0.000000e+00> : vector<80x128xf32>
    %120 = tpu.matmul %119, %118, %cst_41 {dimension_numbers = #tpu.dot_dimension_numbers<[1], [0], [0], [1], [0, 0, 1, 1], [], []>} : vector<80x128xbf16>, vector<128x128xbf16>, vector<80x128xf32> -> vector<80x128xf32>
    %c3_42 = arith.constant 3 : index
    %c0_43 = arith.constant 0 : index
    %c0_44 = arith.constant 0 : index
    %121 = vector.load %arg3[%c3_42, %c0_43, %c0_44] : memref<4x1x128xf32, #tpu.memory_space<vmem>>, vector<1x1x128xf32>
    %122 = vector.shape_cast %121 : vector<1x1x128xf32> to vector<1x128xf32>
    %cst_45 = arith.constant 2.000000e+00 : f32
    %123 = vector.broadcast %cst_45 : f32 to vector<80x128xf32>
    %124 = arith.mulf %123, %120 : vector<80x128xf32>
    %125 = vector.broadcast %122 : vector<1x128xf32> to vector<80x128xf32>
    %126 = arith.subf %125, %124 : vector<80x128xf32>
    %cst_46 = arith.constant dense<0x7F800000> : vector<80xf32>
    %127 = vector.multi_reduction <minimumf>, %126, %cst_46 [1] : vector<80x128xf32> to vector<80xf32>
    %128 = vector.shape_cast %127 : vector<80xf32> to vector<80x1xf32>
    %129 = vector.broadcast %128 : vector<80x1xf32> to vector<80x128xf32>
    %130 = arith.cmpf ole, %126, %129 : vector<80x128xf32>
    %c128_i32_47 = arith.constant 128 : i32
    %131 = vector.broadcast %c128_i32_47 : i32 to vector<80x128xi32>
    %132 = arith.select %130, %3, %131 : vector<80x128xi1>, vector<80x128xi32>
    %cst_48 = arith.constant dense<2147483647> : vector<80xi32>
    %133 = vector.multi_reduction <minsi>, %132, %cst_48 [1] : vector<80x128xi32> to vector<80xi32>
    %134 = vector.shape_cast %133 : vector<80xi32> to vector<80x1xi32>
    %135 = vector.broadcast %134 : vector<80x1xi32> to vector<80x128xi32>
    %136 = arith.cmpi eq, %3, %135 : vector<80x128xi32>
    %137 = arith.extui %136 : vector<80x128xi1> to vector<80x128xi32>
    %138 = arith.sitofp %137 : vector<80x128xi32> to vector<80x128xf32>
    %139 = arith.truncf %138 : vector<80x128xf32> to vector<80x128xbf16>
    %cst_49 = arith.constant dense<0.000000e+00> : vector<80x128xf32>
    %140 = tpu.matmul %139, %118, %cst_49 {dimension_numbers = #tpu.dot_dimension_numbers<[1], [1], [0], [0], [0, 0, 1, 0], [], []>} : vector<80x128xbf16>, vector<128x128xbf16>, vector<80x128xf32> -> vector<80x128xf32>
    %141 = arith.subf %140, %116 : vector<80x128xf32>
    %142 = vector.broadcast %11 : vector<80x1xf32> to vector<80x128xf32>
    %143 = arith.mulf %142, %141 : vector<80x128xf32>
    %144 = arith.mulf %143, %141 : vector<80x128xf32>
    %145 = vector.shape_cast %144 : vector<80x128xf32> to vector<1x80x128xf32>
    %cst_50 = arith.constant dense<0.000000e+00> : vector<1xf32>
    %146 = vector.multi_reduction <add>, %145, %cst_50 [1, 2] : vector<1x80x128xf32> to vector<1xf32>
    %147 = vector.shape_cast %146 : vector<1xf32> to vector<1x1x1xf32>
    %148 = vector.extract %147[0, 0, 0] : f32 from vector<1x1x1xf32>
    %149 = arith.addf %114, %148 : f32
    %150 = arith.addf %115, %140 : vector<80x128xf32>
    %151 = arith.truncf %150 : vector<80x128xf32> to vector<80x128xbf16>
    %c0_51 = arith.constant 0 : index
    %c0_52 = arith.constant 0 : index
    %152 = vector.load %arg4[%c0_51, %c0_52] : memref<80x128xbf16, #tpu.memory_space<vmem>>, vector<80x128xbf16>
    tpu.vector_store %arg4[%c0_51, %c0_52], %151 {strides = array<i32>} : memref<80x128xbf16, #tpu.memory_space<vmem>>, vector<80x128xbf16>,
    %153 = tpu.iota {dimensions = array<i32: 1>} : vector<1x128xi32>
    %c0_i32 = arith.constant 0 : i32
    %154 = vector.broadcast %c0_i32 : i32 to vector<1x128xi32>
    %155 = arith.cmpi eq, %153, %154 : vector<1x128xi32>
    %cst_53 = arith.constant 0.000000e+00 : f32
    %156 = vector.broadcast %149 : f32 to vector<1x128xf32>
    %157 = vector.broadcast %cst_53 : f32 to vector<1x128xf32>
    %158 = arith.select %155, %156, %157 : vector<1x128xi1>, vector<1x128xf32>
    %c0_54 = arith.constant 0 : index
    %c0_55 = arith.constant 0 : index
    %c0_56 = arith.constant 0 : index
    %159 = vector.load %arg5[%c0_54, %c0_55, %c0_56] : memref<1x1x128xf32, #tpu.memory_space<vmem>>, vector<1x1x128xf32>
    %160 = vector.shape_cast %159 : vector<1x1x128xf32> to vector<1x128xf32>
    %161 = vector.shape_cast %158 : vector<1x128xf32> to vector<1x1x128xf32>
    tpu.vector_store %arg5[%c0_54, %c0_55, %c0_56], %161 {strides = array<i32>} : memref<1x1x128xf32, #tpu.memory_space<vmem>>, vector<1x1x128xf32>,
    return
  }
  func.func @transform_0(%arg0: i32) -> (i32, i32) {
    %c0_i32 = arith.constant 0 : i32
    %c0_i32_0 = arith.constant 0 : i32
    return %arg0, %c0_i32 : i32, i32
  }
  func.func @transform_1(%arg0: i32) -> (i32, i32, i32) {
    %c0_i32 = arith.constant 0 : i32
    %c0_i32_0 = arith.constant 0 : i32
    %c0_i32_1 = arith.constant 0 : i32
    %c0_i32_2 = arith.constant 0 : i32
    return %c0_i32, %c0_i32_0, %c0_i32_1 : i32, i32, i32
  }
  func.func @transform_2(%arg0: i32) -> (i32, i32, i32) {
    %c0_i32 = arith.constant 0 : i32
    %c0_i32_0 = arith.constant 0 : i32
    %c0_i32_1 = arith.constant 0 : i32
    %c0_i32_2 = arith.constant 0 : i32
    return %c0_i32, %c0_i32_0, %c0_i32_1 : i32, i32, i32
  }
  func.func @transform_3(%arg0: i32) -> (i32, i32) {
    %c0_i32 = arith.constant 0 : i32
    %c0_i32_0 = arith.constant 0 : i32
    return %arg0, %c0_i32 : i32, i32
  }
  func.func @transform_4(%arg0: i32) -> (i32, i32, i32) {
    %c0_i32 = arith.constant 0 : i32
    %c0_i32_0 = arith.constant 0 : i32
    %c0_i32_1 = arith.constant 0 : i32
    return %arg0, %c0_i32, %c0_i32_0 : i32, i32, i32
  }
}

module attributes {stable_mosaic.version = 11 : i64} {
  func.func @_encoder_kernel(%arg0: i32, %arg1: i32, %arg2: memref<1x40x4xbf16, #tpu.memory_space<vmem>>, %arg3: memref<8x64xbf16, #tpu.memory_space<vmem>>, %arg4: memref<1x64xf32, #tpu.memory_space<vmem>>, %arg5: memref<128x128xbf16, #tpu.memory_space<vmem>>, %arg6: memref<1x128xf32, #tpu.memory_space<vmem>>, %arg7: memref<1x40x128xbf16, #tpu.memory_space<vmem>>, %arg8: memref<1x4xf32, #tpu.memory_space<vmem>>, %arg9: memref<1x64xf32, #tpu.memory_space<vmem>>) attributes {dimension_semantics = [#tpu.dimension_semantics<parallel>, #tpu.dimension_semantics<arbitrary>], iteration_bounds = array<i64: 2, 1>, scalar_prefetch = 0 : i64, scratch_operands = 2 : i64, tpu.core_type = #tpu.core_type<tc>, window_params = [{transform_indices = @transform_0, window_bounds = array<i64: 1, 40, 4>}, {pipeline_mode = #tpu.pipeline_mode<synchronous>, transform_indices = @transform_1, window_bounds = array<i64: 8, 64>}, {pipeline_mode = #tpu.pipeline_mode<synchronous>, transform_indices = @transform_2, window_bounds = array<i64: 1, 64>}, {pipeline_mode = #tpu.pipeline_mode<synchronous>, transform_indices = @transform_3, window_bounds = array<i64: 128, 128>}, {pipeline_mode = #tpu.pipeline_mode<synchronous>, transform_indices = @transform_4, window_bounds = array<i64: 1, 128>}, {transform_indices = @transform_5, window_bounds = array<i64: 1, 40, 128>}]} {
    %c0_i32 = arith.constant 0 : i32
    %0 = arith.cmpi eq, %arg1, %c0_i32 : i32
    %1 = arith.extui %0 : i1 to i32
    %c0_i32_0 = arith.constant 0 : i32
    %2 = arith.cmpi ne, %1, %c0_i32_0 : i32
    scf.if %2 {
      %cst_26 = arith.constant 0.000000e+00 : f32
      %44 = vector.broadcast %cst_26 : f32 to vector<1x4xf32>
      %c0_27 = arith.constant 0 : index
      %c0_28 = arith.constant 0 : index
      %45 = vector.load %arg8[%c0_27, %c0_28] : memref<1x4xf32, #tpu.memory_space<vmem>>, vector<1x4xf32>
      tpu.vector_store %arg8[%c0_27, %c0_28], %44 {strides = array<i32>} : memref<1x4xf32, #tpu.memory_space<vmem>>, vector<1x4xf32>,
      %cst_29 = arith.constant 0.000000e+00 : f32
      %46 = vector.broadcast %cst_29 : f32 to vector<1x64xf32>
      %c0_30 = arith.constant 0 : index
      %c0_31 = arith.constant 0 : index
      %47 = vector.load %arg9[%c0_30, %c0_31] : memref<1x64xf32, #tpu.memory_space<vmem>>, vector<1x64xf32>
      tpu.vector_store %arg9[%c0_30, %c0_31], %46 {strides = array<i32>} : memref<1x64xf32, #tpu.memory_space<vmem>>, vector<1x64xf32>,
    } else {
    }
    %c0 = arith.constant 0 : index
    %c0_1 = arith.constant 0 : index
    %c0_2 = arith.constant 0 : index
    %3 = vector.load %arg2[%c0, %c0_1, %c0_2] : memref<1x40x4xbf16, #tpu.memory_space<vmem>>, vector<1x40x4xbf16>
    %4 = vector.shape_cast %3 : vector<1x40x4xbf16> to vector<40x4xbf16>
    %c0_3 = arith.constant 0 : index
    %c0_4 = arith.constant 0 : index
    %5 = vector.load %arg8[%c0_3, %c0_4] : memref<1x4xf32, #tpu.memory_space<vmem>>, vector<1x4xf32>
    %6 = arith.truncf %5 : vector<1x4xf32> to vector<1x4xbf16>
    %7 = vector.extract_strided_slice %4 {offsets = [0, 0], sizes = [39, 4], strides = [1, 1]} : vector<40x4xbf16> to vector<39x4xbf16>
    %8 = tpu.concatenate %6, %7 in 0 : vector<1x4xbf16>, vector<39x4xbf16> -> vector<40x4xbf16>
    %9 = tpu.concatenate %8, %4 in 1 : vector<40x4xbf16>, vector<40x4xbf16> -> vector<40x8xbf16>
    %c0_5 = arith.constant 0 : index
    %c0_6 = arith.constant 0 : index
    %10 = vector.load %arg3[%c0_5, %c0_6] : memref<8x64xbf16, #tpu.memory_space<vmem>>, vector<8x64xbf16>
    %cst = arith.constant dense<0.000000e+00> : vector<40x64xf32>
    %11 = tpu.matmul %9, %10, %cst {dimension_numbers = #tpu.dot_dimension_numbers<[1], [0], [0], [1], [0, 0, 1, 1], [], []>} : vector<40x8xbf16>, vector<8x64xbf16>, vector<40x64xf32> -> vector<40x64xf32>
    %c0_7 = arith.constant 0 : index
    %c0_8 = arith.constant 0 : index
    %12 = vector.load %arg4[%c0_7, %c0_8] : memref<1x64xf32, #tpu.memory_space<vmem>>, vector<1x64xf32>
    %13 = vector.broadcast %12 : vector<1x64xf32> to vector<40x64xf32>
    %14 = arith.addf %11, %13 : vector<40x64xf32>
    %cst_9 = arith.constant 0.000000e+00 : f32
    %15 = vector.broadcast %cst_9 : f32 to vector<40x64xf32>
    %16 = arith.cmpf ogt, %14, %15 : vector<40x64xf32>
    %cst_10 = arith.constant 0.000000e+00 : f32
    %17 = vector.broadcast %cst_10 : f32 to vector<40x64xf32>
    %18 = arith.minimumf %14, %17 : vector<40x64xf32>
    %19 = math.exp %18 : vector<40x64xf32>
    %cst_11 = arith.constant 1.000000e+00 : f32
    %20 = vector.broadcast %cst_11 : f32 to vector<40x64xf32>
    %21 = arith.subf %19, %20 : vector<40x64xf32>
    %22 = arith.select %16, %14, %21 : vector<40x64xi1>, vector<40x64xf32>
    %23 = arith.truncf %22 : vector<40x64xf32> to vector<40x64xbf16>
    %c0_12 = arith.constant 0 : index
    %c0_13 = arith.constant 0 : index
    %24 = vector.load %arg9[%c0_12, %c0_13] : memref<1x64xf32, #tpu.memory_space<vmem>>, vector<1x64xf32>
    %25 = arith.truncf %24 : vector<1x64xf32> to vector<1x64xbf16>
    %26 = vector.extract_strided_slice %23 {offsets = [0, 0], sizes = [39, 64], strides = [1, 1]} : vector<40x64xbf16> to vector<39x64xbf16>
    %27 = tpu.concatenate %25, %26 in 0 : vector<1x64xbf16>, vector<39x64xbf16> -> vector<40x64xbf16>
    %28 = tpu.concatenate %27, %23 in 1 : vector<40x64xbf16>, vector<40x64xbf16> -> vector<40x128xbf16>
    %c0_14 = arith.constant 0 : index
    %c0_15 = arith.constant 0 : index
    %29 = vector.load %arg5[%c0_14, %c0_15] : memref<128x128xbf16, #tpu.memory_space<vmem>>, vector<128x128xbf16>
    %cst_16 = arith.constant dense<0.000000e+00> : vector<40x128xf32>
    %30 = tpu.matmul %28, %29, %cst_16 {dimension_numbers = #tpu.dot_dimension_numbers<[1], [0], [0], [1], [0, 0, 1, 1], [], []>} : vector<40x128xbf16>, vector<128x128xbf16>, vector<40x128xf32> -> vector<40x128xf32>
    %c0_17 = arith.constant 0 : index
    %c0_18 = arith.constant 0 : index
    %31 = vector.load %arg6[%c0_17, %c0_18] : memref<1x128xf32, #tpu.memory_space<vmem>>, vector<1x128xf32>
    %32 = vector.broadcast %31 : vector<1x128xf32> to vector<40x128xf32>
    %33 = arith.addf %30, %32 : vector<40x128xf32>
    %34 = arith.truncf %33 : vector<40x128xf32> to vector<40x128xbf16>
    %c0_19 = arith.constant 0 : index
    %c0_20 = arith.constant 0 : index
    %c0_21 = arith.constant 0 : index
    %35 = vector.load %arg7[%c0_19, %c0_20, %c0_21] : memref<1x40x128xbf16, #tpu.memory_space<vmem>>, vector<1x40x128xbf16>
    %36 = vector.shape_cast %35 : vector<1x40x128xbf16> to vector<40x128xbf16>
    %37 = vector.shape_cast %34 : vector<40x128xbf16> to vector<1x40x128xbf16>
    tpu.vector_store %arg7[%c0_19, %c0_20, %c0_21], %37 {strides = array<i32>} : memref<1x40x128xbf16, #tpu.memory_space<vmem>>, vector<1x40x128xbf16>,
    %38 = vector.extract_strided_slice %4 {offsets = [39, 0], sizes = [1, 4], strides = [1, 1]} : vector<40x4xbf16> to vector<1x4xbf16>
    %39 = arith.extf %38 : vector<1x4xbf16> to vector<1x4xf32>
    %c0_22 = arith.constant 0 : index
    %c0_23 = arith.constant 0 : index
    %40 = vector.load %arg8[%c0_22, %c0_23] : memref<1x4xf32, #tpu.memory_space<vmem>>, vector<1x4xf32>
    tpu.vector_store %arg8[%c0_22, %c0_23], %39 {strides = array<i32>} : memref<1x4xf32, #tpu.memory_space<vmem>>, vector<1x4xf32>,
    %41 = vector.extract_strided_slice %23 {offsets = [39, 0], sizes = [1, 64], strides = [1, 1]} : vector<40x64xbf16> to vector<1x64xbf16>
    %42 = arith.extf %41 : vector<1x64xbf16> to vector<1x64xf32>
    %c0_24 = arith.constant 0 : index
    %c0_25 = arith.constant 0 : index
    %43 = vector.load %arg9[%c0_24, %c0_25] : memref<1x64xf32, #tpu.memory_space<vmem>>, vector<1x64xf32>
    tpu.vector_store %arg9[%c0_24, %c0_25], %42 {strides = array<i32>} : memref<1x64xf32, #tpu.memory_space<vmem>>, vector<1x64xf32>,
    return
  }
  func.func @transform_0(%arg0: i32, %arg1: i32) -> (i32, i32, i32) {
    %c0_i32 = arith.constant 0 : i32
    %c0_i32_0 = arith.constant 0 : i32
    return %arg0, %arg1, %c0_i32 : i32, i32, i32
  }
  func.func @transform_1(%arg0: i32, %arg1: i32) -> (i32, i32) {
    %c0_i32 = arith.constant 0 : i32
    %c0_i32_0 = arith.constant 0 : i32
    %c0_i32_1 = arith.constant 0 : i32
    return %c0_i32, %c0_i32_0 : i32, i32
  }
  func.func @transform_2(%arg0: i32, %arg1: i32) -> (i32, i32) {
    %c0_i32 = arith.constant 0 : i32
    %c0_i32_0 = arith.constant 0 : i32
    %c0_i32_1 = arith.constant 0 : i32
    return %c0_i32, %c0_i32_0 : i32, i32
  }
  func.func @transform_3(%arg0: i32, %arg1: i32) -> (i32, i32) {
    %c0_i32 = arith.constant 0 : i32
    %c0_i32_0 = arith.constant 0 : i32
    %c0_i32_1 = arith.constant 0 : i32
    return %c0_i32, %c0_i32_0 : i32, i32
  }
  func.func @transform_4(%arg0: i32, %arg1: i32) -> (i32, i32) {
    %c0_i32 = arith.constant 0 : i32
    %c0_i32_0 = arith.constant 0 : i32
    %c0_i32_1 = arith.constant 0 : i32
    return %c0_i32, %c0_i32_0 : i32, i32
  }
  func.func @transform_5(%arg0: i32, %arg1: i32) -> (i32, i32, i32) {
    %c0_i32 = arith.constant 0 : i32
    %c0_i32_0 = arith.constant 0 : i32
    return %arg0, %arg1, %c0_i32 : i32, i32, i32
  }
}

module attributes {stable_mosaic.version = 11 : i64} {
  func.func @_decoder_kernel(%arg0: i32, %arg1: i32, %arg2: memref<1x40x128xbf16, #tpu.memory_space<vmem>>, %arg3: memref<256x64xbf16, #tpu.memory_space<vmem>>, %arg4: memref<1x64xf32, #tpu.memory_space<vmem>>, %arg5: memref<96x4xf32, #tpu.memory_space<vmem>>, %arg6: memref<1x4xf32, #tpu.memory_space<vmem>>, %arg7: memref<1x40x4xf32, #tpu.memory_space<vmem>>, %arg8: memref<1x128xf32, #tpu.memory_space<vmem>>, %arg9: memref<1x32xf32, #tpu.memory_space<vmem>>) attributes {dimension_semantics = [#tpu.dimension_semantics<parallel>, #tpu.dimension_semantics<arbitrary>], iteration_bounds = array<i64: 2, 1>, scalar_prefetch = 0 : i64, scratch_operands = 2 : i64, tpu.core_type = #tpu.core_type<tc>, window_params = [{transform_indices = @transform_0, window_bounds = array<i64: 1, 40, 128>}, {pipeline_mode = #tpu.pipeline_mode<synchronous>, transform_indices = @transform_1, window_bounds = array<i64: 256, 64>}, {pipeline_mode = #tpu.pipeline_mode<synchronous>, transform_indices = @transform_2, window_bounds = array<i64: 1, 64>}, {pipeline_mode = #tpu.pipeline_mode<synchronous>, transform_indices = @transform_3, window_bounds = array<i64: 96, 4>}, {pipeline_mode = #tpu.pipeline_mode<synchronous>, transform_indices = @transform_4, window_bounds = array<i64: 1, 4>}, {transform_indices = @transform_5, window_bounds = array<i64: 1, 40, 4>}]} {
    %c0_i32 = arith.constant 0 : i32
    %0 = arith.cmpi eq, %arg1, %c0_i32 : i32
    %1 = arith.extui %0 : i1 to i32
    %c0_i32_0 = arith.constant 0 : i32
    %2 = arith.cmpi ne, %1, %c0_i32_0 : i32
    scf.if %2 {
      %cst_26 = arith.constant 0.000000e+00 : f32
      %42 = vector.broadcast %cst_26 : f32 to vector<1x128xf32>
      %c0_27 = arith.constant 0 : index
      %c0_28 = arith.constant 0 : index
      %43 = vector.load %arg8[%c0_27, %c0_28] : memref<1x128xf32, #tpu.memory_space<vmem>>, vector<1x128xf32>
      tpu.vector_store %arg8[%c0_27, %c0_28], %42 {strides = array<i32>} : memref<1x128xf32, #tpu.memory_space<vmem>>, vector<1x128xf32>,
      %cst_29 = arith.constant 0.000000e+00 : f32
      %44 = vector.broadcast %cst_29 : f32 to vector<1x32xf32>
      %c0_30 = arith.constant 0 : index
      %c0_31 = arith.constant 0 : index
      %45 = vector.load %arg9[%c0_30, %c0_31] : memref<1x32xf32, #tpu.memory_space<vmem>>, vector<1x32xf32>
      tpu.vector_store %arg9[%c0_30, %c0_31], %44 {strides = array<i32>} : memref<1x32xf32, #tpu.memory_space<vmem>>, vector<1x32xf32>,
    } else {
    }
    %c0 = arith.constant 0 : index
    %c0_1 = arith.constant 0 : index
    %c0_2 = arith.constant 0 : index
    %3 = vector.load %arg2[%c0, %c0_1, %c0_2] : memref<1x40x128xbf16, #tpu.memory_space<vmem>>, vector<1x40x128xbf16>
    %4 = vector.shape_cast %3 : vector<1x40x128xbf16> to vector<40x128xbf16>
    %c0_3 = arith.constant 0 : index
    %c0_4 = arith.constant 0 : index
    %5 = vector.load %arg8[%c0_3, %c0_4] : memref<1x128xf32, #tpu.memory_space<vmem>>, vector<1x128xf32>
    %6 = arith.truncf %5 : vector<1x128xf32> to vector<1x128xbf16>
    %7 = vector.extract_strided_slice %4 {offsets = [0, 0], sizes = [39, 128], strides = [1, 1]} : vector<40x128xbf16> to vector<39x128xbf16>
    %8 = tpu.concatenate %6, %7 in 0 : vector<1x128xbf16>, vector<39x128xbf16> -> vector<40x128xbf16>
    %9 = tpu.concatenate %8, %4 in 1 : vector<40x128xbf16>, vector<40x128xbf16> -> vector<40x256xbf16>
    %c0_5 = arith.constant 0 : index
    %c0_6 = arith.constant 0 : index
    %10 = vector.load %arg3[%c0_5, %c0_6] : memref<256x64xbf16, #tpu.memory_space<vmem>>, vector<256x64xbf16>
    %cst = arith.constant dense<0.000000e+00> : vector<40x64xf32>
    %11 = tpu.matmul %9, %10, %cst {dimension_numbers = #tpu.dot_dimension_numbers<[1], [0], [0], [1], [0, 0, 1, 1], [], []>} : vector<40x256xbf16>, vector<256x64xbf16>, vector<40x64xf32> -> vector<40x64xf32>
    %c0_7 = arith.constant 0 : index
    %c0_8 = arith.constant 0 : index
    %12 = vector.load %arg4[%c0_7, %c0_8] : memref<1x64xf32, #tpu.memory_space<vmem>>, vector<1x64xf32>
    %13 = vector.broadcast %12 : vector<1x64xf32> to vector<40x64xf32>
    %14 = arith.addf %11, %13 : vector<40x64xf32>
    %cst_9 = arith.constant 0.000000e+00 : f32
    %15 = vector.broadcast %cst_9 : f32 to vector<40x64xf32>
    %16 = arith.cmpf ogt, %14, %15 : vector<40x64xf32>
    %cst_10 = arith.constant 0.000000e+00 : f32
    %17 = vector.broadcast %cst_10 : f32 to vector<40x64xf32>
    %18 = arith.minimumf %14, %17 : vector<40x64xf32>
    %19 = math.exp %18 : vector<40x64xf32>
    %cst_11 = arith.constant 1.000000e+00 : f32
    %20 = vector.broadcast %cst_11 : f32 to vector<40x64xf32>
    %21 = arith.subf %19, %20 : vector<40x64xf32>
    %22 = arith.select %16, %14, %21 : vector<40x64xi1>, vector<40x64xf32>
    %23 = vector.extract_strided_slice %22 {offsets = [0, 0], sizes = [40, 32], strides = [1, 1]} : vector<40x64xf32> to vector<40x32xf32>
    %24 = vector.extract_strided_slice %22 {offsets = [0, 32], sizes = [40, 32], strides = [1, 1]} : vector<40x64xf32> to vector<40x32xf32>
    %c0_12 = arith.constant 0 : index
    %c0_13 = arith.constant 0 : index
    %25 = vector.load %arg9[%c0_12, %c0_13] : memref<1x32xf32, #tpu.memory_space<vmem>>, vector<1x32xf32>
    %26 = vector.extract_strided_slice %24 {offsets = [0, 0], sizes = [39, 32], strides = [1, 1]} : vector<40x32xf32> to vector<39x32xf32>
    %27 = tpu.concatenate %25, %26 in 0 : vector<1x32xf32>, vector<39x32xf32> -> vector<40x32xf32>
    %28 = tpu.concatenate %23, %24, %27 in 1 : vector<40x32xf32>, vector<40x32xf32>, vector<40x32xf32> -> vector<40x96xf32>
    %c0_14 = arith.constant 0 : index
    %c0_15 = arith.constant 0 : index
    %29 = vector.load %arg5[%c0_14, %c0_15] : memref<96x4xf32, #tpu.memory_space<vmem>>, vector<96x4xf32>
    %cst_16 = arith.constant dense<0.000000e+00> : vector<40x4xf32>
    %30 = tpu.matmul %28, %29, %cst_16 {dimension_numbers = #tpu.dot_dimension_numbers<[1], [0], [0], [1], [0, 0, 1, 1], [], []>} : vector<40x96xf32>, vector<96x4xf32>, vector<40x4xf32> -> vector<40x4xf32>
    %c0_17 = arith.constant 0 : index
    %c0_18 = arith.constant 0 : index
    %31 = vector.load %arg6[%c0_17, %c0_18] : memref<1x4xf32, #tpu.memory_space<vmem>>, vector<1x4xf32>
    %32 = vector.broadcast %31 : vector<1x4xf32> to vector<40x4xf32>
    %33 = arith.addf %30, %32 : vector<40x4xf32>
    %c0_19 = arith.constant 0 : index
    %c0_20 = arith.constant 0 : index
    %c0_21 = arith.constant 0 : index
    %34 = vector.load %arg7[%c0_19, %c0_20, %c0_21] : memref<1x40x4xf32, #tpu.memory_space<vmem>>, vector<1x40x4xf32>
    %35 = vector.shape_cast %34 : vector<1x40x4xf32> to vector<40x4xf32>
    %36 = vector.shape_cast %33 : vector<40x4xf32> to vector<1x40x4xf32>
    tpu.vector_store %arg7[%c0_19, %c0_20, %c0_21], %36 {strides = array<i32>} : memref<1x40x4xf32, #tpu.memory_space<vmem>>, vector<1x40x4xf32>,
    %37 = vector.extract_strided_slice %4 {offsets = [39, 0], sizes = [1, 128], strides = [1, 1]} : vector<40x128xbf16> to vector<1x128xbf16>
    %38 = arith.extf %37 : vector<1x128xbf16> to vector<1x128xf32>
    %c0_22 = arith.constant 0 : index
    %c0_23 = arith.constant 0 : index
    %39 = vector.load %arg8[%c0_22, %c0_23] : memref<1x128xf32, #tpu.memory_space<vmem>>, vector<1x128xf32>
    tpu.vector_store %arg8[%c0_22, %c0_23], %38 {strides = array<i32>} : memref<1x128xf32, #tpu.memory_space<vmem>>, vector<1x128xf32>,
    %40 = vector.extract_strided_slice %24 {offsets = [39, 0], sizes = [1, 32], strides = [1, 1]} : vector<40x32xf32> to vector<1x32xf32>
    %c0_24 = arith.constant 0 : index
    %c0_25 = arith.constant 0 : index
    %41 = vector.load %arg9[%c0_24, %c0_25] : memref<1x32xf32, #tpu.memory_space<vmem>>, vector<1x32xf32>
    tpu.vector_store %arg9[%c0_24, %c0_25], %40 {strides = array<i32>} : memref<1x32xf32, #tpu.memory_space<vmem>>, vector<1x32xf32>,
    return
  }
  func.func @transform_0(%arg0: i32, %arg1: i32) -> (i32, i32, i32) {
    %c0_i32 = arith.constant 0 : i32
    %c0_i32_0 = arith.constant 0 : i32
    return %arg0, %arg1, %c0_i32 : i32, i32, i32
  }
  func.func @transform_1(%arg0: i32, %arg1: i32) -> (i32, i32) {
    %c0_i32 = arith.constant 0 : i32
    %c0_i32_0 = arith.constant 0 : i32
    %c0_i32_1 = arith.constant 0 : i32
    return %c0_i32, %c0_i32_0 : i32, i32
  }
  func.func @transform_2(%arg0: i32, %arg1: i32) -> (i32, i32) {
    %c0_i32 = arith.constant 0 : i32
    %c0_i32_0 = arith.constant 0 : i32
    %c0_i32_1 = arith.constant 0 : i32
    return %c0_i32, %c0_i32_0 : i32, i32
  }
  func.func @transform_3(%arg0: i32, %arg1: i32) -> (i32, i32) {
    %c0_i32 = arith.constant 0 : i32
    %c0_i32_0 = arith.constant 0 : i32
    %c0_i32_1 = arith.constant 0 : i32
    return %c0_i32, %c0_i32_0 : i32, i32
  }
  func.func @transform_4(%arg0: i32, %arg1: i32) -> (i32, i32) {
    %c0_i32 = arith.constant 0 : i32
    %c0_i32_0 = arith.constant 0 : i32
    %c0_i32_1 = arith.constant 0 : i32
    return %c0_i32, %c0_i32_0 : i32, i32
  }
  func.func @transform_5(%arg0: i32, %arg1: i32) -> (i32, i32, i32) {
    %c0_i32 = arith.constant 0 : i32
    %c0_i32_0 = arith.constant 0 : i32
    return %arg0, %arg1, %c0_i32 : i32, i32, i32
  }
}

</mosaic_0001>

<llo_original>
// kernel: encodec_rvq_forward.3
$region0: #{encodec_rvq_forward.3}
  #allocation0 [shape = 'u32[]', space=smem, size = 0x4, offset = 0x4, fixed_abs, tag = 'smem constant byte address 0x4 - core index']
  #allocation1 [shape = 'u32[72,128]{1,0:T(1,128)}', space=vmem, size = 0x9000, scoped, tag = 'internal scratch']
  #allocation2 [shape = 'f32[1,4]{1,0:T(1,128)}', space=vmem, size = 0x200, scoped, tag = 'scratch operand']
  #allocation3 [shape = 'f32[1,64]{1,0:T(1,128)}', space=vmem, size = 0x200, scoped, tag = 'scratch operand']
  %s0 = inlined_call_operand.vmem [shape: bf16[2,40,4], index: 0, kind: input, shape index: {}]
  %s1 = inlined_call_operand.vmem [shape: bf16[8,64], index: 1, kind: input, shape index: {}]
  %s2 = inlined_call_operand.vmem [shape: f32[1,64], index: 2, kind: input, shape index: {}]
  %s3 = inlined_call_operand.hbm [shape: bf16[128,128], index: 3, kind: input, shape index: {}]
  %s4 = inlined_call_operand.vmem [shape: f32[1,128], index: 4, kind: input, shape index: {}]
  %s5 = inlined_call_operand.vmem [shape: bf16[2,40,128], index: 5, kind: output, shape index: {}]
  %s6 = sld [smem:[#allocation0]]
  $region61: #{encodec_rvq_forward.3} parent=0
    _
  %s8 = ssub.s32 1, %s6
  %s9 = scalar_select 0, %s8, %s6
  $region1: #{encodec_rvq_forward.3} parent=0
    #allocation4 [shape = 'u8[32768]{0}', space=vmem, size = 0x8000, scoped, tag = 'input window, operand 3, single buffered']
    #allocation5 [shape = 's32[2]{0}', space=sflag, size = 0x8, scoped, tag = 'scoped memory for encodec_rvq_forward.3']
    %10 = vsyncpa [#allocation5], 0
    loop: start=0, step=1, limit=4
    $region2: #{encodec_rvq_forward.3} parent=1 // loop_pre_header
      _
    $region3: #{encodec_rvq_forward.3} parent=1 // loop_header
      %s12 = sphi 0, %s16
      %p13 = scmp.ge.s32.totalorder %s12, 4
      %s19 = sphi 0, %s31
      %s20 = sphi 0, %s27
      %s21 = sphi 0, %s19
      %s22 = sphi 0, %s20
      %s23 = sphi 0, %s21
      %s24 = sphi 0, %s22
      %s36 = sphi 0, %s38
      %s39 = sphi 0, %s36
      %s40 = sphi 0, %s39
      %s56 = sphi 0, %s40
      %s60 = sphi 0, %s60
      %s62 = sphi 0, %s60
      %s63 = sphi 0, %s62
      %s77 = sphi 0, %s63
      %s81 = sphi 0, %s81
      %s83 = sphi 0, %s81
      %s84 = sphi 0, %s83
      %s98 = sphi 0, %s84
      %s102 = sphi 0, %s102
      %s104 = sphi 0, %s102
      %s105 = sphi 0, %s104
      %s119 = sphi 0, %s105
      %s123 = sphi 0, %s123
      %s125 = sphi 0, %s123
      %s126 = sphi 0, %s125
      %s140 = sphi 0, %s126
      %s148 = sphi 0, %s150
      %s151 = sphi 0, %s148
      %s152 = sphi 0, %s151
      %s168 = sphi 0, %s152
    $region4: #{encodec_rvq_forward.3} parent=1 // loop_header_branch
      %15 = sbr.rel (%p13) target = $region8
    $region5: #{encodec_rvq_forward.3} parent=1 // loop_body
      %s17 = ssub.s32 %s12, 1
      %s18 = ssub.s32 %s12, 2
      %s25 = sadd.s32 1, %s20
      %p26 = scmp.ge.s32.totalorder %s25, 1
      %s27 = scalar_select %p26, 0, %s25
      %s28 = sadd.s32 1, %s19
      %s29 = scalar_select %p26, %s28, %s19
      %p30 = scmp.ge.s32.totalorder %s29, 2
      %s31 = scalar_select %p30, 0, %s29
      %s32 = ssub.s32 %s19, %s31
      %s33 = ssub.s32 %s20, %s27
      %s34 = sor.u32 %s32, %s33
      %p35 = scmp.eq.s32.totalorder %s34, 0
      %s37 = sadd.s32 %s36, 1
      %s38 = scalar_select %p35, %s36, %s37
      %p41 = pneg %p35
      %p42 = scmp.eq.s32.totalorder %s12, 1
      %p43 = por %p41, %p42
      %p44 = scmp.ne.s32.totalorder %s36, %s39
      %p45 = scmp.eq.s32.totalorder %s12, 0
      %p46 = por %p44, %p45
      %p47 = scmp.ne.s32.totalorder %s36, %s39
      %p48 = scmp.eq.s32.totalorder %s17, 1
      %p49 = por %p47, %p48
      %p50 = scmp.ne.s32.totalorder %s39, %s40
      %p51 = scmp.eq.s32.totalorder %s17, 0
      %p52 = por %p50, %p51
      %p53 = scmp.ne.s32.totalorder %s39, %s40
      %p54 = scmp.eq.s32.totalorder %s18, 1
      %p55 = por %p53, %p54
      %p57 = scmp.ne.s32.totalorder %s40, %s56
      %p58 = scmp.eq.s32.totalorder %s18, 0
      %p59 = por %p57, %p58
      %s61 = sadd.s32 %s60, 1
      %p64 = scmp.eq.s32.totalorder %s12, 1
      %p65 = scmp.ne.s32.totalorder %s60, %s62
      %p66 = scmp.eq.s32.totalorder %s12, 0
      %p67 = por %p65, %p66
      %p68 = scmp.ne.s32.totalorder %s60, %s62
      %p69 = scmp.eq.s32.totalorder %s17, 1
      %p70 = por %p68, %p69
      %p71 = scmp.ne.s32.totalorder %s62, %s63
      %p72 = scmp.eq.s32.totalorder %s17, 0
      %p73 = por %p71, %p72
      %p74 = scmp.ne.s32.totalorder %s62, %s63
      %p75 = scmp.eq.s32.totalorder %s18, 1
      %p76 = por %p74, %p75
      %p78 = scmp.ne.s32.totalorder %s63, %s77
      %p79 = scmp.eq.s32.totalorder %s18, 0
      %p80 = por %p78, %p79
      %s82 = sadd.s32 %s81, 1
      %p85 = scmp.eq.s32.totalorder %s12, 1
      %p86 = scmp.ne.s32.totalorder %s81, %s83
      %p87 = scmp.eq.s32.totalorder %s12, 0
      %p88 = por %p86, %p87
      %p89 = scmp.ne.s32.totalorder %s81, %s83
      %p90 = scmp.eq.s32.totalorder %s17, 1
      %p91 = por %p89, %p90
      %p92 = scmp.ne.s32.totalorder %s83, %s84
      %p93 = scmp.eq.s32.totalorder %s17, 0
      %p94 = por %p92, %p93
      %p95 = scmp.ne.s32.totalorder %s83, %s84
      %p96 = scmp.eq.s32.totalorder %s18, 1
      %p97 = por %p95, %p96
      %p99 = scmp.ne.s32.totalorder %s84, %s98
      %p100 = scmp.eq.s32.totalorder %s18, 0
      %p101 = por %p99, %p100
      %s103 = sadd.s32 %s102, 1
      %p106 = scmp.eq.s32.totalorder %s12, 1
      %p107 = scmp.ne.s32.totalorder %s102, %s104
      %p108 = scmp.eq.s32.totalorder %s12, 0
      %p109 = por %p107, %p108
      %p110 = scmp.ne.s32.totalorder %s102, %s104
      %p111 = scmp.eq.s32.totalorder %s17, 1
      %p112 = por %p110, %p111
      %p113 = scmp.ne.s32.totalorder %s104, %s105
      %p114 = scmp.eq.s32.totalorder %s17, 0
      %p115 = por %p113, %p114
      %p116 = scmp.ne.s32.totalorder %s104, %s105
      %p117 = scmp.eq.s32.totalorder %s18, 1
      %p118 = por %p116, %p117
      %p120 = scmp.ne.s32.totalorder %s105, %s119
      %p121 = scmp.eq.s32.totalorder %s18, 0
      %p122 = por %p120, %p121
      %s124 = sadd.s32 %s123, 1
      %p127 = scmp.eq.s32.totalorder %s12, 1
      %p128 = scmp.ne.s32.totalorder %s123, %s125
      %p129 = scmp.eq.s32.totalorder %s12, 0
      %p130 = por %p128, %p129
      %p131 = scmp.ne.s32.totalorder %s123, %s125
      %p132 = scmp.eq.s32.totalorder %s17, 1
      %p133 = por %p131, %p132
      %p134 = scmp.ne.s32.totalorder %s125, %s126
      %p135 = scmp.eq.s32.totalorder %s17, 0
      %p136 = por %p134, %p135
      %p137 = scmp.ne.s32.totalorder %s125, %s126
      %p138 = scmp.eq.s32.totalorder %s18, 1
      %p139 = por %p137, %p138
      %p141 = scmp.ne.s32.totalorder %s126, %s140
      %p142 = scmp.eq.s32.totalorder %s18, 0
      %p143 = por %p141, %p142
      %s144 = ssub.s32 %s19, %s31
      %s145 = ssub.s32 %s20, %s27
      %s146 = sor.u32 %s144, %s145
      %p147 = scmp.eq.s32.totalorder %s146, 0
      %s149 = sadd.s32 %s148, 1
      %s150 = scalar_select %p147, %s148, %s149
      %p153 = pneg %p147
      %p154 = scmp.eq.s32.totalorder %s12, 1
      %p155 = por %p153, %p154
      %p156 = scmp.ne.s32.totalorder %s148, %s151
      %p157 = scmp.eq.s32.totalorder %s12, 0
      %p158 = por %p156, %p157
      %p159 = scmp.ne.s32.totalorder %s148, %s151
      %p160 = scmp.eq.s32.totalorder %s17, 1
      %p161 = por %p159, %p160
      %p162 = scmp.ne.s32.totalorder %s151, %s152
      %p163 = scmp.eq.s32.totalorder %s17, 0
      %p164 = por %p162, %p163
      %p165 = scmp.ne.s32.totalorder %s151, %s152
      %p166 = scmp.eq.s32.totalorder %s18, 1
      %p167 = por %p165, %p166
      %p169 = scmp.ne.s32.totalorder %s152, %s168
      %p170 = scmp.eq.s32.totalorder %s18, 0
      %p171 = por %p169, %p170
      %p172 = scmp.le.s32.totalorder 1, %s12
      %p173 = scmp.lt.s32.totalorder %s12, 3
      %p174 = pnand %p172, %p173
      %p175 = pneg %p174
      // Predicated region
      $region9: #{encodec_rvq_forward.3} parent=5 // pred_check
        _
      $region10: #{encodec_rvq_forward.3} parent=5 // pred_check_branch
        %177 = sbr.rel (%p174) target = $region12
      $region11: #{encodec_rvq_forward.3} parent=5 // pred_region
        %s178 = ssub.s32 %s12, 1
        // Predicated region
        $region13: #{encodec_rvq_forward.3} parent=11 // pred_check
          %p179 = pneg %p73
        $region14: #{encodec_rvq_forward.3} parent=11 // pred_check_branch
          %181 = sbr.rel (%p179) target = $region16
        $region15: #{encodec_rvq_forward.3} parent=11 // pred_region
          _
        $region16: #{encodec_rvq_forward.3} parent=11 // pred_fallthru
          _
        // Predicated region
        $region17: #{encodec_rvq_forward.3} parent=11 // pred_check
          %p182 = pneg %p94
        $region18: #{encodec_rvq_forward.3} parent=11 // pred_check_branch
          %184 = sbr.rel (%p182) target = $region20
        $region19: #{encodec_rvq_forward.3} parent=11 // pred_region
          _
        $region20: #{encodec_rvq_forward.3} parent=11 // pred_fallthru
          _
        // Predicated region
        $region21: #{encodec_rvq_forward.3} parent=11 // pred_check
          %p185 = pneg %p115
        $region22: #{encodec_rvq_forward.3} parent=11 // pred_check_branch
          %187 = sbr.rel (%p185) target = $region24
        $region23: #{encodec_rvq_forward.3} parent=11 // pred_region
          %189 = vsyncadd [#allocation5], 0
          %s190 = sshll.u32 %s3, 4
          %s191 = int_to_ptr.hbm [resolvable:$true] %s190
          %s192 = sshll.u32 [#allocation4], 4
          %s193 = int_to_ptr.vmem [resolvable:$true] %s192
          %198 = dma.hbm_to_vmem [thread:$0]  %s191, 1024, %s193, [#allocation5], 64, 64, 4
        $region24: #{encodec_rvq_forward.3} parent=11 // pred_fallthru
          _
        // Predicated region
        $region25: #{encodec_rvq_forward.3} parent=11 // pred_check
          %p199 = pneg %p136
        $region26: #{encodec_rvq_forward.3} parent=11 // pred_check_branch
          %201 = sbr.rel (%p199) target = $region28
        $region27: #{encodec_rvq_forward.3} parent=11 // pred_region
          _
        $region28: #{encodec_rvq_forward.3} parent=11 // pred_fallthru
          _
      $region12: #{encodec_rvq_forward.3} parent=5 // pred_fallthru
        _
      %p202 = scmp.lt.s32.totalorder %s12, 2
      // Predicated region
      $region29: #{encodec_rvq_forward.3} parent=5 // pred_check
        %p203 = pneg %p202
      $region30: #{encodec_rvq_forward.3} parent=5 // pred_check_branch
        %205 = sbr.rel (%p203) target = $region32
      $region31: #{encodec_rvq_forward.3} parent=5 // pred_region
        // Predicated region
        $region33: #{encodec_rvq_forward.3} parent=31 // pred_check
          %p206 = pneg %p46
        $region34: #{encodec_rvq_forward.3} parent=31 // pred_check_branch
          %208 = sbr.rel (%p206) target = $region36
        $region35: #{encodec_rvq_forward.3} parent=31 // pred_region
          %s209 = smul.u32 5, %s20
          %p210 = scmp.lt.s32.totalorder %s19, 1
          %s211 = scalar_select %p210, %s19, 1
          %p212 = scmp.lt.s32.totalorder %s209, 4
          %s213 = scalar_select %p212, %s209, 4
          %s214 = smul.addr %s211, 5
          %s215 = sadd.s32 %s213, %s214
          %s216 = smul.addr %s215, 4
          %s217 = scalar_lea.vmem %s0, %s216
          %s218 = smul.u32 5, %s20
        $region36: #{encodec_rvq_forward.3} parent=31 // pred_fallthru
          _
      $region32: #{encodec_rvq_forward.3} parent=5 // pred_fallthru
        _
      %p219 = scmp.le.s32.totalorder 1, %s12
      %p220 = scmp.lt.s32.totalorder %s12, 3
      %p221 = pnand %p219, %p220
      %p222 = pneg %p221
      // Predicated region
      $region37: #{encodec_rvq_forward.3} parent=5 // pred_check
        _
      $region38: #{encodec_rvq_forward.3} parent=5 // pred_check_branch
        %224 = sbr.rel (%p221) target = $region40
      $region39: #{encodec_rvq_forward.3} parent=5 // pred_region
        %s225 = ssub.s32 %s12, 1
        // Predicated region
        $region41: #{encodec_rvq_forward.3} parent=39 // pred_check
          %p226 = pneg %p115
        $region42: #{encodec_rvq_forward.3} parent=39 // pred_check_branch
          %228 = sbr.rel (%p226) target = $region44
        $region43: #{encodec_rvq_forward.3} parent=39 // pred_region
          %230 = dma.done [#allocation5], 1024
        $region44: #{encodec_rvq_forward.3} parent=39 // pred_fallthru
          _
        %s231 = smul.u32 5, %s22
        %p232 = scmp.lt.s32.totalorder %s21, 1
        %s233 = scalar_select %p232, %s21, 1
        %p234 = scmp.lt.s32.totalorder %s231, 4
        %s235 = scalar_select %p234, %s231, 4
        %s236 = smul.addr %s233, 5
        %s237 = sadd.s32 %s235, %s236
        %s238 = smul.addr %s237, 4
        %s239 = scalar_lea.vmem %s0, %s238
        %p240 = pneg %p52
        %p241 = pneg %p49
        %p242 = pneg %p73
        %p243 = pneg %p70
        %p244 = pneg %p94
        %p245 = pneg %p91
        %p246 = pneg %p115
        %p247 = pneg %p112
        %p248 = pneg %p136
        %p249 = pneg %p133
        %p250 = pneg %p164
        %p251 = pneg %p161
        %s252 = smul.u32 5, %s22
        %p253 = scmp.lt.s32.totalorder %s21, 1
        %s254 = scalar_select %p253, %s21, 1
        %p255 = scmp.lt.s32.totalorder %s252, 4
        %s256 = scalar_select %p255, %s252, 4
        %s257 = smul.addr %s254, 5
        %s258 = sadd.s32 %s256, %s257
        %s259 = smul.addr %s258, 4
        %s260 = scalar_lea.vmem %s5, %s259
        %s261 = smul.u32 5, %s22
        %p262 = scmp.lt.s32.totalorder %s21, 1
        %s263 = scalar_select %p262, %s21, 1
        %p264 = scmp.lt.s32.totalorder %s261, 4
        %s265 = scalar_select %p264, %s261, 4
        %s266 = smul.addr %s263, 5
        %s267 = sadd.s32 %s265, %s266
        %s268 = smul.addr %s267, 4
        %s269 = scalar_lea.vmem %s0, %s268
        %s270 = smul.u32 5, %s22
        %s271 = smul.u32 5, %s22
        %p272 = scmp.lt.s32.totalorder %s21, 1
        %s273 = scalar_select %p272, %s21, 1
        %p274 = scmp.lt.s32.totalorder %s271, 4
        %s275 = scalar_select %p274, %s271, 4
        %s276 = smul.addr %s273, 5
        %s277 = sadd.s32 %s275, %s276
        %s278 = smul.addr %s277, 4
        %s279 = scalar_lea.vmem %s5, %s278
        %s280 = smul.u32 5, %s22
        %p282 = scmp.eq.s32.totalorder %s22, 0
        // Predicated region
        $region45: #{encodec_rvq_forward.3} parent=39 // pred_check
          %p283 = pneg %p282
        $region46: #{encodec_rvq_forward.3} parent=39 // pred_check_branch
          %285 = sbr.rel (%p283) target = $region48
        $region47: #{encodec_rvq_forward.3} parent=39 // pred_region
          %vm286 = vcmask 24576
          %287 = vst.msk [vmem:[#allocation2] sm:$0x1] %vm286, 0.0
          %vm288 = vcmask 516096
          %289 = vst.msk [vmem:[#allocation3] sm:$0x1] %vm288, 0.0
        $region48: #{encodec_rvq_forward.3} parent=39 // pred_fallthru
          _
        %v290 = vld [vmem:[%s269] sm:$0xf]
        %v291 = vld [vmem:[%s269 + $0x4] sm:$0xf]
        %v292 = vld [vmem:[%s269 + $0x8] sm:$0xf]
        %v293 = vld [vmem:[%s269 + $0xc] sm:$0xf]
        %v294 = vld [vmem:[%s269 + $0x10] sm:$0xf]
        %v295 = vld [vmem:[#allocation2] sm:$0x1]
        %v296 = vpack.c.bf16 %v295, %v295
        %v302 = vunpack.c.l.b16 %v290
        %v303 = vunpack.c.l.b16 %v291
        %v304 = vunpack.c.l.b16 %v292
        %v305 = vunpack.c.l.b16 %v293
        %v306 = vunpack.c.l.b16 %v294
        %v307 = vpack.c.b16 %v303, %v302
        %v308 = vpack.c.b16 %v305, %v304
        %v309 = vpack.c.b16 %v306, %v306
        %vm310 = vsmask.f32 256
        %v312 = vshrl.u32 %v307, 16
        %v314 = vrot.slane %v312, 7
        %v315 = vshll.u32 %v307, 16
        %v317 = vor.u32 %v314, %v315
        %v319 = vshrl.u32 %v308, 16
        %v321 = vrot.slane %v319, 7
        %v322 = vshll.u32 %v308, 16
        %v324 = vor.u32 %v321, %v322
        %v325 = vsel %vm310, %v314, %v324
        %v327 = vshrl.u32 %v309, 16
        %v329 = vrot.slane %v327, 7
        %v330 = vshll.u32 %v309, 16
        %v332 = vor.u32 %v329, %v330
        %v333 = vsel %vm310, %v321, %v332
        %vm335 = vcmask 1040384
        %vm336 = vmand %vm335, %vm310
        %v337 = vsel %vm336, %v296, %v317
        %338 = vrot.lane.b32.xlu0 %v307, 4
        %v339 = vpop.permute.xlu0 %338
        %340 = vrot.lane.b32.xlu0 %v308, 4
        %v341 = vpop.permute.xlu0 %340
        %342 = vrot.lane.b32.xlu0 %v309, 4
        %v343 = vpop.permute.xlu0 %342
        %vm344 = vcmask 31744
        %v347 = vsel %vm344, %v337, %v339
        %v350 = vsel %vm344, %v325, %v341
        %v353 = vsel %vm344, %v333, %v343
        %v354 = vld [vmem:[%s1] sm:$0xf]
        %v355 = vld [vmem:[%s2] sm:$0x1]
        %v357 = vperm.slane %v355, 0
        %vm359 = vcmask 64512
        %v360 = vsel %vm359, %v347, 0
        %v362 = vsel %vm359, %v350, 0
        %v364 = vsel %vm359, %v353, 0
        %vm366 = vcmask 1043456
        %v368 = vsel %vm366, %v354, 0
        %370 = vmatpush.bf16.msra.mxu0 0
        %371 = vmatpush.bf16.msra.mxu0 0
        %372 = vmatpush.bf16.msra.mxu0 0
        %373 = vmatpush.bf16.msra.mxu0 0
        %374 = vmatpush.bf16.msra.mxu0 0
        %375 = vmatpush.bf16.msra.mxu0 0
        %376 = vmatpush.bf16.msra.mxu0 0
        %377 = vmatpush.bf16.msra.mxu0 %v368
        %378 = vmatmul.bf16.gmra.mxu0 %v360
        %v379 = vpop.f32.mrf.mxu0
        %v380 = vadd.f32 %v357, %v379
        %v381 = vpop.f32.mrf.mxu0
        %v382 = vadd.f32 %v357, %v381
        %383 = vmatmul.bf16.gmra.mxu0 %v362
        %v384 = vpop.f32.mrf.mxu0
        %v385 = vadd.f32 %v357, %v384
        %v386 = vpop.f32.mrf.mxu0
        %v387 = vadd.f32 %v357, %v386
        %388 = vmatmul.bf16.gmra.mxu0 %v364
        %v389 = vpop.f32.mrf.mxu0
        %v390 = vadd.f32 %v357, %v389
        %v391 = vpop.f32.mrf.mxu0
        %392 = vdwg.mxu0
        %vm393 = vcmp.gt.f32.partialorder %v380, 0.0
        %vm394 = vcmp.gt.f32.partialorder %v382, 0.0
        %vm395 = vcmp.gt.f32.partialorder %v385, 0.0
        %vm396 = vcmp.gt.f32.partialorder %v387, 0.0
        %vm397 = vcmp.gt.f32.partialorder %v390, 0.0
        %v398 = vmin.f32 %v380, 0.0
        %v399 = vmin.f32 %v382, 0.0
        %v400 = vmin.f32 %v385, 0.0
        %v401 = vmin.f32 %v387, 0.0
        %v402 = vmin.f32 %v390, 0.0
        %v403 = vmul.f32 %v398, 1.442695
        %v404 = vpow.pop %v403
        %v405 = vmul.f32 %v399, 1.442695
        %v406 = vpow.pop %v405
        %v407 = vmul.f32 %v400, 1.442695
        %v408 = vpow.pop %v407
        %v409 = vmul.f32 %v401, 1.442695
        %v410 = vpow.pop %v409
        %v411 = vmul.f32 %v402, 1.442695
        %v412 = vpow.pop %v411
        %v413 = vsub.f32 %v404, 1.0
        %v414 = vsub.f32 %v406, 1.0
        %v415 = vsub.f32 %v408, 1.0
        %v416 = vsub.f32 %v410, 1.0
        %v417 = vsub.f32 %v412, 1.0
        %v418 = vsel %vm393, %v380, %v413
        %v419 = vsel %vm394, %v382, %v414
        %v420 = vsel %vm395, %v385, %v415
        %v421 = vsel %vm396, %v387, %v416
        %v422 = vsel %vm397, %v390, %v417
        %v423 = vpack.c.bf16 %v418, %v418
        %v424 = vpack.c.bf16 %v419, %v419
        %v425 = vpack.c.bf16 %v420, %v420
        %v426 = vpack.c.bf16 %v421, %v421
        %v427 = vpack.c.bf16 %v422, %v422
        %v428 = vld [vmem:[#allocation3] sm:$0x1]
        %v429 = vpack.c.bf16 %v428, %v428
        %v435 = vunpack.c.l.b16 %v423
        %v436 = vunpack.c.l.b16 %v424
        %v437 = vunpack.c.l.b16 %v425
        %v438 = vunpack.c.l.b16 %v426
        %v439 = vunpack.c.l.b16 %v427
        %v440 = vpack.c.b16 %v436, %v435
        %v441 = vpack.c.b16 %v438, %v437
        %v442 = vpack.c.b16 %v439, %v439
        %v444 = vshrl.u32 %v440, 16
        %v446 = vrot.slane %v444, 7
        %v447 = vshll.u32 %v440, 16
        %v449 = vor.u32 %v446, %v447
        %v451 = vshrl.u32 %v441, 16
        %v453 = vrot.slane %v451, 7
        %v454 = vshll.u32 %v441, 16
        %v456 = vor.u32 %v453, %v454
        %v457 = vsel %vm310, %v446, %v456
        %v459 = vshrl.u32 %v442, 16
        %v461 = vrot.slane %v459, 7
        %v462 = vshll.u32 %v442, 16
        %v464 = vor.u32 %v461, %v462
        %v465 = vsel %vm310, %v453, %v464
        %v467 = vsel %vm336, %v429, %v449
        %468 = vrot.lane.b32.xlu0 %v440, 64
        %v469 = vpop.permute.xlu0 %468
        %470 = vrot.lane.b32.xlu0 %v441, 64
        %v471 = vpop.permute.xlu0 %470
        %472 = vrot.lane.b32.xlu0 %v442, 64
        %v473 = vpop.permute.xlu0 %472
        %vm474 = vcmask 523264
        %v477 = vsel %vm474, %v467, %v469
        %v481 = vsel %vm474, %v457, %v471
        %v485 = vsel %vm474, %v465, %v473
        %v487 = vld [vmem:[#allocation4] sm:$0xf]
        %v488 = vld [vmem:[#allocation4 + $0x4] sm:$0xf]
        %v489 = vld [vmem:[#allocation4 + $0x8] sm:$0xf]
        %v490 = vld [vmem:[#allocation4 + $0xc] sm:$0xf]
        %v491 = vld [vmem:[#allocation4 + $0x10] sm:$0xf]
        %v492 = vld [vmem:[#allocation4 + $0x14] sm:$0xf]
        %v493 = vld [vmem:[#allocation4 + $0x18] sm:$0xf]
        %v494 = vld [vmem:[#allocation4 + $0x1c] sm:$0xf]
        %v495 = vld [vmem:[#allocation4 + $0x20] sm:$0xf]
        %v496 = vld [vmem:[#allocation4 + $0x24] sm:$0xf]
        %v497 = vld [vmem:[#allocation4 + $0x28] sm:$0xf]
        %v498 = vld [vmem:[#allocation4 + $0x2c] sm:$0xf]
        %v499 = vld [vmem:[#allocation4 + $0x30] sm:$0xf]
        %v500 = vld [vmem:[#allocation4 + $0x34] sm:$0xf]
        %v501 = vld [vmem:[#allocation4 + $0x38] sm:$0xf]
        %v502 = vld [vmem:[#allocation4 + $0x3c] sm:$0xf]
        %v503 = vld [vmem:[%s4] sm:$0x1]
        %v505 = vperm.slane %v503, 0
        %v523 = vunpack.c.l.b16 %v487
        %v524 = vunpack.c.l.b16 %v488
        %v525 = vunpack.c.l.b16 %v489
        %v526 = vunpack.c.l.b16 %v490
        %v527 = vunpack.c.l.b16 %v491
        %v528 = vunpack.c.l.b16 %v492
        %v529 = vunpack.c.l.b16 %v493
        %v530 = vunpack.c.l.b16 %v494
        %v531 = vunpack.c.l.b16 %v495
        %v532 = vunpack.c.l.b16 %v496
        %v533 = vunpack.c.l.b16 %v497
        %v534 = vunpack.c.l.b16 %v498
        %v535 = vunpack.c.l.b16 %v499
        %v536 = vunpack.c.l.b16 %v500
        %v537 = vunpack.c.l.b16 %v501
        %v538 = vunpack.c.l.b16 %v502
        %v539 = vpack.c.b16 %v524, %v523
        %v540 = vpack.c.b16 %v526, %v525
        %v541 = vpack.c.b16 %v528, %v527
        %v542 = vpack.c.b16 %v530, %v529
        %v543 = vpack.c.b16 %v532, %v531
        %v544 = vpack.c.b16 %v534, %v533
        %v545 = vpack.c.b16 %v536, %v535
        %v546 = vpack.c.b16 %v538, %v537
        %555 = vmatpush.bf16.msra.mxu0 %v546
        %556 = vmatpush.bf16.msra.mxu0 %v545
        %557 = vmatpush.bf16.msra.mxu0 %v544
        %558 = vmatpush.bf16.msra.mxu0 %v543
        %559 = vmatpush.bf16.msra.mxu0 %v542
        %560 = vmatpush.bf16.msra.mxu0 %v541
        %561 = vmatpush.bf16.msra.mxu0 %v540
        %562 = vmatpush.bf16.msra.mxu0 %v539
        %563 = vmatmul.bf16.gmra.mxu0 %v477
        %v564 = vpop.f32.mrf.mxu0
        %v565 = vadd.f32 %v505, %v564
        %v566 = vpop.f32.mrf.mxu0
        %v567 = vadd.f32 %v505, %v566
        %568 = vmatmul.bf16.gmra.mxu0 %v481
        %v569 = vpop.f32.mrf.mxu0
        %v570 = vadd.f32 %v505, %v569
        %v571 = vpop.f32.mrf.mxu0
        %v572 = vadd.f32 %v505, %v571
        %573 = vmatmul.bf16.gmra.mxu0 %v485
        %v574 = vpop.f32.mrf.mxu0
        %v575 = vadd.f32 %v505, %v574
        %v576 = vpop.f32.mrf.mxu0
        %577 = vdwg.mxu0
        %v578 = vpack.c.bf16 %v565, %v565
        %v579 = vpack.c.bf16 %v567, %v567
        %v580 = vpack.c.bf16 %v570, %v570
        %v581 = vpack.c.bf16 %v572, %v572
        %v582 = vpack.c.bf16 %v575, %v575
        %583 = vst [vmem:[%s279] sm:$0xf] %v578
        %584 = vst [vmem:[%s279 + $0x4] sm:$0xf] %v579
        %585 = vst [vmem:[%s279 + $0x8] sm:$0xf] %v580
        %586 = vst [vmem:[%s279 + $0xc] sm:$0xf] %v581
        %587 = vst [vmem:[%s279 + $0x10] sm:$0xf] %v582
        %v588 = vunpack.c.l.bf16 %v294
        %vm589 = vcmask 31751
        %590 = vst.msk [vmem:[#allocation2 - $0x7] sm:$0x80] %vm589, %v588
        %v591 = vunpack.c.l.bf16 %v427
        %vm592 = vcmask 523271
        %593 = vst.msk [vmem:[#allocation3 - $0x7] sm:$0x80] %vm592, %v591
        %s594 = smul.u32 5, %s22
        %p595 = scmp.lt.s32.totalorder %s21, 1
        %s596 = scalar_select %p595, %s21, 1
        %p597 = scmp.lt.s32.totalorder %s594, 4
        %s598 = scalar_select %p597, %s594, 4
        %s599 = smul.addr %s596, 5
        %s600 = sadd.s32 %s598, %s599
        %s601 = smul.addr %s600, 4
        %s602 = scalar_lea.vmem %s5, %s601
        // Predicated region
        $region49: #{encodec_rvq_forward.3} parent=39 // pred_check
          %p603 = pneg %p161
        $region50: #{encodec_rvq_forward.3} parent=39 // pred_check_branch
          %605 = sbr.rel (%p603) target = $region52
        $region51: #{encodec_rvq_forward.3} parent=39 // pred_region
          %s606 = smul.u32 5, %s22
        $region52: #{encodec_rvq_forward.3} parent=39 // pred_fallthru
          _
      $region40: #{encodec_rvq_forward.3} parent=5 // pred_fallthru
        _
      %p607 = scmp.le.s32.totalorder 2, %s12
      // Predicated region
      $region53: #{encodec_rvq_forward.3} parent=5 // pred_check
        %p608 = pneg %p607
      $region54: #{encodec_rvq_forward.3} parent=5 // pred_check_branch
        %610 = sbr.rel (%p608) target = $region56
      $region55: #{encodec_rvq_forward.3} parent=5 // pred_region
        %s611 = ssub.s32 %s12, 2
        // Predicated region
        $region57: #{encodec_rvq_forward.3} parent=55 // pred_check
          %p612 = pneg %p167
        $region58: #{encodec_rvq_forward.3} parent=55 // pred_check_branch
          %614 = sbr.rel (%p612) target = $region60
        $region59: #{encodec_rvq_forward.3} parent=55 // pred_region
          %s615 = smul.u32 5, %s24
          %p616 = scmp.lt.s32.totalorder %s23, 1
          %s617 = scalar_select %p616, %s23, 1
          %p618 = scmp.lt.s32.totalorder %s615, 4
          %s619 = scalar_select %p618, %s615, 4
          %s620 = smul.addr %s617, 5
          %s621 = sadd.s32 %s619, %s620
          %s622 = smul.addr %s621, 4
          %s623 = scalar_lea.vmem %s5, %s622
        $region60: #{encodec_rvq_forward.3} parent=55 // pred_fallthru
          _
      $region56: #{encodec_rvq_forward.3} parent=5 // pred_fallthru
        _
    $region6: #{encodec_rvq_forward.3} parent=1 // loop_footer
      %s16 = sadd.s32 1, %s12
    $region7: #{encodec_rvq_forward.3} parent=1 // loop_footer_branch
      %11 = sbr.rel target = $region3
    $region8: #{encodec_rvq_forward.3} parent=1 // loop_exit
      _
    %624 = vsyncpa [#allocation5], 1
    %s625 = scalar_lea.sflag [#allocation5], 1
    %626 = vsyncpa %s625, 1

// kernel: encodec_rvq_forward.5
$region0: #{encodec_rvq_forward.5}
  #allocation0 [shape = 'u32[]', space=smem, size = 0x4, offset = 0x4, fixed_abs, tag = 'smem constant byte address 0x4 - core index']
  #allocation1 [shape = 'u32[72,128]{1,0:T(1,128)}', space=vmem, size = 0x9000, scoped, tag = 'internal scratch']
  #allocation2 [shape = 'f32[1,128]{1,0:T(1,128)}', space=vmem, size = 0x200, scoped, tag = 'scratch operand']
  #allocation3 [shape = 'f32[1,32]{1,0:T(1,128)}', space=vmem, size = 0x200, scoped, tag = 'scratch operand']
  %s0 = inlined_call_operand.vmem [shape: bf16[2,40,128], index: 0, kind: input, shape index: {}]
  %s1 = inlined_call_operand.vmem [shape: bf16[256,64], index: 1, kind: input, shape index: {}]
  %s2 = inlined_call_operand.vmem [shape: f32[1,64], index: 2, kind: input, shape index: {}]
  %s3 = inlined_call_operand.vmem [shape: f32[96,4], index: 3, kind: input, shape index: {}]
  %s4 = inlined_call_operand.vmem [shape: f32[1,4], index: 4, kind: input, shape index: {}]
  %s5 = inlined_call_operand.vmem [shape: f32[2,40,4], index: 5, kind: output, shape index: {}]
  %s6 = sld [smem:[#allocation0]]
  $region57: #{encodec_rvq_forward.5} parent=0
    _
  %s8 = ssub.s32 1, %s6
  %s9 = scalar_select 0, %s8, %s6
  loop: start=0, step=1, limit=4
  $region2: #{encodec_rvq_forward.5} parent=0 // loop_pre_header
    _
  $region3: #{encodec_rvq_forward.5} parent=0 // loop_header
    %s11 = sphi 0, %s15
    %p12 = scmp.ge.s32.totalorder %s11, 4
    %s18 = sphi 0, %s30
    %s19 = sphi 0, %s26
    %s20 = sphi 0, %s18
    %s21 = sphi 0, %s19
    %s22 = sphi 0, %s20
    %s23 = sphi 0, %s21
    %s35 = sphi 0, %s37
    %s38 = sphi 0, %s35
    %s39 = sphi 0, %s38
    %s55 = sphi 0, %s39
    %s59 = sphi 0, %s59
    %s61 = sphi 0, %s59
    %s62 = sphi 0, %s61
    %s76 = sphi 0, %s62
    %s80 = sphi 0, %s80
    %s82 = sphi 0, %s80
    %s83 = sphi 0, %s82
    %s97 = sphi 0, %s83
    %s101 = sphi 0, %s101
    %s103 = sphi 0, %s101
    %s104 = sphi 0, %s103
    %s118 = sphi 0, %s104
    %s122 = sphi 0, %s122
    %s124 = sphi 0, %s122
    %s125 = sphi 0, %s124
    %s139 = sphi 0, %s125
    %s147 = sphi 0, %s149
    %s150 = sphi 0, %s147
    %s151 = sphi 0, %s150
    %s167 = sphi 0, %s151
  $region4: #{encodec_rvq_forward.5} parent=0 // loop_header_branch
    %14 = sbr.rel (%p12) target = $region8
  $region5: #{encodec_rvq_forward.5} parent=0 // loop_body
    %s16 = ssub.s32 %s11, 1
    %s17 = ssub.s32 %s11, 2
    %s24 = sadd.s32 1, %s19
    %p25 = scmp.ge.s32.totalorder %s24, 1
    %s26 = scalar_select %p25, 0, %s24
    %s27 = sadd.s32 1, %s18
    %s28 = scalar_select %p25, %s27, %s18
    %p29 = scmp.ge.s32.totalorder %s28, 2
    %s30 = scalar_select %p29, 0, %s28
    %s31 = ssub.s32 %s18, %s30
    %s32 = ssub.s32 %s19, %s26
    %s33 = sor.u32 %s31, %s32
    %p34 = scmp.eq.s32.totalorder %s33, 0
    %s36 = sadd.s32 %s35, 1
    %s37 = scalar_select %p34, %s35, %s36
    %p40 = pneg %p34
    %p41 = scmp.eq.s32.totalorder %s11, 1
    %p42 = por %p40, %p41
    %p43 = scmp.ne.s32.totalorder %s35, %s38
    %p44 = scmp.eq.s32.totalorder %s11, 0
    %p45 = por %p43, %p44
    %p46 = scmp.ne.s32.totalorder %s35, %s38
    %p47 = scmp.eq.s32.totalorder %s16, 1
    %p48 = por %p46, %p47
    %p49 = scmp.ne.s32.totalorder %s38, %s39
    %p50 = scmp.eq.s32.totalorder %s16, 0
    %p51 = por %p49, %p50
    %p52 = scmp.ne.s32.totalorder %s38, %s39
    %p53 = scmp.eq.s32.totalorder %s17, 1
    %p54 = por %p52, %p53
    %p56 = scmp.ne.s32.totalorder %s39, %s55
    %p57 = scmp.eq.s32.totalorder %s17, 0
    %p58 = por %p56, %p57
    %s60 = sadd.s32 %s59, 1
    %p63 = scmp.eq.s32.totalorder %s11, 1
    %p64 = scmp.ne.s32.totalorder %s59, %s61
    %p65 = scmp.eq.s32.totalorder %s11, 0
    %p66 = por %p64, %p65
    %p67 = scmp.ne.s32.totalorder %s59, %s61
    %p68 = scmp.eq.s32.totalorder %s16, 1
    %p69 = por %p67, %p68
    %p70 = scmp.ne.s32.totalorder %s61, %s62
    %p71 = scmp.eq.s32.totalorder %s16, 0
    %p72 = por %p70, %p71
    %p73 = scmp.ne.s32.totalorder %s61, %s62
    %p74 = scmp.eq.s32.totalorder %s17, 1
    %p75 = por %p73, %p74
    %p77 = scmp.ne.s32.totalorder %s62, %s76
    %p78 = scmp.eq.s32.totalorder %s17, 0
    %p79 = por %p77, %p78
    %s81 = sadd.s32 %s80, 1
    %p84 = scmp.eq.s32.totalorder %s11, 1
    %p85 = scmp.ne.s32.totalorder %s80, %s82
    %p86 = scmp.eq.s32.totalorder %s11, 0
    %p87 = por %p85, %p86
    %p88 = scmp.ne.s32.totalorder %s80, %s82
    %p89 = scmp.eq.s32.totalorder %s16, 1
    %p90 = por %p88, %p89
    %p91 = scmp.ne.s32.totalorder %s82, %s83
    %p92 = scmp.eq.s32.totalorder %s16, 0
    %p93 = por %p91, %p92
    %p94 = scmp.ne.s32.totalorder %s82, %s83
    %p95 = scmp.eq.s32.totalorder %s17, 1
    %p96 = por %p94, %p95
    %p98 = scmp.ne.s32.totalorder %s83, %s97
    %p99 = scmp.eq.s32.totalorder %s17, 0
    %p100 = por %p98, %p99
    %s102 = sadd.s32 %s101, 1
    %p105 = scmp.eq.s32.totalorder %s11, 1
    %p106 = scmp.ne.s32.totalorder %s101, %s103
    %p107 = scmp.eq.s32.totalorder %s11, 0
    %p108 = por %p106, %p107
    %p109 = scmp.ne.s32.totalorder %s101, %s103
    %p110 = scmp.eq.s32.totalorder %s16, 1
    %p111 = por %p109, %p110
    %p112 = scmp.ne.s32.totalorder %s103, %s104
    %p113 = scmp.eq.s32.totalorder %s16, 0
    %p114 = por %p112, %p113
    %p115 = scmp.ne.s32.totalorder %s103, %s104
    %p116 = scmp.eq.s32.totalorder %s17, 1
    %p117 = por %p115, %p116
    %p119 = scmp.ne.s32.totalorder %s104, %s118
    %p120 = scmp.eq.s32.totalorder %s17, 0
    %p121 = por %p119, %p120
    %s123 = sadd.s32 %s122, 1
    %p126 = scmp.eq.s32.totalorder %s11, 1
    %p127 = scmp.ne.s32.totalorder %s122, %s124
    %p128 = scmp.eq.s32.totalorder %s11, 0
    %p129 = por %p127, %p128
    %p130 = scmp.ne.s32.totalorder %s122, %s124
    %p131 = scmp.eq.s32.totalorder %s16, 1
    %p132 = por %p130, %p131
    %p133 = scmp.ne.s32.totalorder %s124, %s125
    %p134 = scmp.eq.s32.totalorder %s16, 0
    %p135 = por %p133, %p134
    %p136 = scmp.ne.s32.totalorder %s124, %s125
    %p137 = scmp.eq.s32.totalorder %s17, 1
    %p138 = por %p136, %p137
    %p140 = scmp.ne.s32.totalorder %s125, %s139
    %p141 = scmp.eq.s32.totalorder %s17, 0
    %p142 = por %p140, %p141
    %s143 = ssub.s32 %s18, %s30
    %s144 = ssub.s32 %s19, %s26
    %s145 = sor.u32 %s143, %s144
    %p146 = scmp.eq.s32.totalorder %s145, 0
    %s148 = sadd.s32 %s147, 1
    %s149 = scalar_select %p146, %s147, %s148
    %p152 = pneg %p146
    %p153 = scmp.eq.s32.totalorder %s11, 1
    %p154 = por %p152, %p153
    %p155 = scmp.ne.s32.totalorder %s147, %s150
    %p156 = scmp.eq.s32.totalorder %s11, 0
    %p157 = por %p155, %p156
    %p158 = scmp.ne.s32.totalorder %s147, %s150
    %p159 = scmp.eq.s32.totalorder %s16, 1
    %p160 = por %p158, %p159
    %p161 = scmp.ne.s32.totalorder %s150, %s151
    %p162 = scmp.eq.s32.totalorder %s16, 0
    %p163 = por %p161, %p162
    %p164 = scmp.ne.s32.totalorder %s150, %s151
    %p165 = scmp.eq.s32.totalorder %s17, 1
    %p166 = por %p164, %p165
    %p168 = scmp.ne.s32.totalorder %s151, %s167
    %p169 = scmp.eq.s32.totalorder %s17, 0
    %p170 = por %p168, %p169
    %p171 = scmp.le.s32.totalorder 1, %s11
    %p172 = scmp.lt.s32.totalorder %s11, 3
    %p173 = pnand %p171, %p172
    %p174 = pneg %p173
    // Predicated region
    $region9: #{encodec_rvq_forward.5} parent=5 // pred_check
      _
    $region10: #{encodec_rvq_forward.5} parent=5 // pred_check_branch
      %176 = sbr.rel (%p173) target = $region12
    $region11: #{encodec_rvq_forward.5} parent=5 // pred_region
      %s177 = ssub.s32 %s11, 1
      // Predicated region
      $region13: #{encodec_rvq_forward.5} parent=11 // pred_check
        %p178 = pneg %p72
      $region14: #{encodec_rvq_forward.5} parent=11 // pred_check_branch
        %180 = sbr.rel (%p178) target = $region16
      $region15: #{encodec_rvq_forward.5} parent=11 // pred_region
        _
      $region16: #{encodec_rvq_forward.5} parent=11 // pred_fallthru
        _
      // Predicated region
      $region17: #{encodec_rvq_forward.5} parent=11 // pred_check
        %p181 = pneg %p93
      $region18: #{encodec_rvq_forward.5} parent=11 // pred_check_branch
        %183 = sbr.rel (%p181) target = $region20
      $region19: #{encodec_rvq_forward.5} parent=11 // pred_region
        _
      $region20: #{encodec_rvq_forward.5} parent=11 // pred_fallthru
        _
      // Predicated region
      $region21: #{encodec_rvq_forward.5} parent=11 // pred_check
        %p184 = pneg %p114
      $region22: #{encodec_rvq_forward.5} parent=11 // pred_check_branch
        %186 = sbr.rel (%p184) target = $region24
      $region23: #{encodec_rvq_forward.5} parent=11 // pred_region
        _
      $region24: #{encodec_rvq_forward.5} parent=11 // pred_fallthru
        _
      // Predicated region
      $region25: #{encodec_rvq_forward.5} parent=11 // pred_check
        %p187 = pneg %p135
      $region26: #{encodec_rvq_forward.5} parent=11 // pred_check_branch
        %189 = sbr.rel (%p187) target = $region28
      $region27: #{encodec_rvq_forward.5} parent=11 // pred_region
        _
      $region28: #{encodec_rvq_forward.5} parent=11 // pred_fallthru
        _
    $region12: #{encodec_rvq_forward.5} parent=5 // pred_fallthru
      _
    %p190 = scmp.lt.s32.totalorder %s11, 2
    // Predicated region
    $region29: #{encodec_rvq_forward.5} parent=5 // pred_check
      %p191 = pneg %p190
    $region30: #{encodec_rvq_forward.5} parent=5 // pred_check_branch
      %193 = sbr.rel (%p191) target = $region32
    $region31: #{encodec_rvq_forward.5} parent=5 // pred_region
      // Predicated region
      $region33: #{encodec_rvq_forward.5} parent=31 // pred_check
        %p194 = pneg %p45
      $region34: #{encodec_rvq_forward.5} parent=31 // pred_check_branch
        %196 = sbr.rel (%p194) target = $region36
      $region35: #{encodec_rvq_forward.5} parent=31 // pred_region
        %s197 = smul.u32 5, %s19
        %p198 = scmp.lt.s32.totalorder %s18, 1
        %s199 = scalar_select %p198, %s18, 1
        %p200 = scmp.lt.s32.totalorder %s197, 4
        %s201 = scalar_select %p200, %s197, 4
        %s202 = smul.addr %s199, 5
        %s203 = sadd.s32 %s201, %s202
        %s204 = smul.addr %s203, 4
        %s205 = scalar_lea.vmem %s0, %s204
        %s206 = smul.u32 5, %s19
      $region36: #{encodec_rvq_forward.5} parent=31 // pred_fallthru
        _
    $region32: #{encodec_rvq_forward.5} parent=5 // pred_fallthru
      _
    %p207 = scmp.le.s32.totalorder 1, %s11
    %p208 = scmp.lt.s32.totalorder %s11, 3
    %p209 = pnand %p207, %p208
    %p210 = pneg %p209
    // Predicated region
    $region37: #{encodec_rvq_forward.5} parent=5 // pred_check
      _
    $region38: #{encodec_rvq_forward.5} parent=5 // pred_check_branch
      %212 = sbr.rel (%p209) target = $region40
    $region39: #{encodec_rvq_forward.5} parent=5 // pred_region
      %s213 = ssub.s32 %s11, 1
      %s214 = smul.u32 5, %s21
      %p215 = scmp.lt.s32.totalorder %s20, 1
      %s216 = scalar_select %p215, %s20, 1
      %p217 = scmp.lt.s32.totalorder %s214, 4
      %s218 = scalar_select %p217, %s214, 4
      %s219 = smul.addr %s216, 5
      %s220 = sadd.s32 %s218, %s219
      %s221 = smul.addr %s220, 4
      %s222 = scalar_lea.vmem %s0, %s221
      %p223 = pneg %p51
      %p224 = pneg %p48
      %p225 = pneg %p72
      %p226 = pneg %p69
      %p227 = pneg %p93
      %p228 = pneg %p90
      %p229 = pneg %p114
      %p230 = pneg %p111
      %p231 = pneg %p135
      %p232 = pneg %p132
      %p233 = pneg %p163
      %p234 = pneg %p160
      %s235 = smul.u32 5, %s21
      %p236 = scmp.lt.s32.totalorder %s20, 1
      %s237 = scalar_select %p236, %s20, 1
      %p238 = scmp.lt.s32.totalorder %s235, 4
      %s239 = scalar_select %p238, %s235, 4
      %s240 = smul.addr %s237, 5
      %s241 = sadd.s32 %s239, %s240
      %s242 = smul.addr %s241, 8
      %s243 = scalar_lea.vmem %s5, %s242
      %s244 = smul.u32 5, %s21
      %p245 = scmp.lt.s32.totalorder %s20, 1
      %s246 = scalar_select %p245, %s20, 1
      %p247 = scmp.lt.s32.totalorder %s244, 4
      %s248 = scalar_select %p247, %s244, 4
      %s249 = smul.addr %s246, 5
      %s250 = sadd.s32 %s248, %s249
      %s251 = smul.addr %s250, 4
      %s252 = scalar_lea.vmem %s0, %s251
      %s253 = smul.u32 5, %s21
      %s254 = smul.u32 5, %s21
      %p255 = scmp.lt.s32.totalorder %s20, 1
      %s256 = scalar_select %p255, %s20, 1
      %p257 = scmp.lt.s32.totalorder %s254, 4
      %s258 = scalar_select %p257, %s254, 4
      %s259 = smul.addr %s256, 5
      %s260 = sadd.s32 %s258, %s259
      %s261 = smul.addr %s260, 8
      %s262 = scalar_lea.vmem %s5, %s261
      %s263 = smul.u32 5, %s21
      %p264 = scmp.eq.s32.totalorder %s21, 0
      // Predicated region
      $region41: #{encodec_rvq_forward.5} parent=39 // pred_check
        %p265 = pneg %p264
      $region42: #{encodec_rvq_forward.5} parent=39 // pred_check_branch
        %267 = sbr.rel (%p265) target = $region44
      $region43: #{encodec_rvq_forward.5} parent=39 // pred_region
        %268 = vst [vmem:[#allocation2] sm:$0x1] 0.0
        %vm269 = vcmask 253952
        %270 = vst.msk [vmem:[#allocation3] sm:$0x1] %vm269, 0.0
      $region44: #{encodec_rvq_forward.5} parent=39 // pred_fallthru
        _
      %v271 = vld [vmem:[%s252] sm:$0xf]
      %v272 = vld [vmem:[%s252 + $0x4] sm:$0xf]
      %v273 = vld [vmem:[%s252 + $0x8] sm:$0xf]
      %v274 = vld [vmem:[%s252 + $0xc] sm:$0xf]
      %v275 = vld [vmem:[%s252 + $0x10] sm:$0xf]
      %v276 = vld [vmem:[#allocation2] sm:$0x1]
      %v277 = vpack.c.bf16 %v276, %v276
      %v283 = vunpack.c.l.b16 %v271
      %v284 = vunpack.c.l.b16 %v272
      %v285 = vunpack.c.l.b16 %v273
      %v286 = vunpack.c.l.b16 %v274
      %v287 = vunpack.c.l.b16 %v275
      %v288 = vpack.c.b16 %v284, %v283
      %v289 = vpack.c.b16 %v286, %v285
      %v290 = vpack.c.b16 %v287, %v287
      %vm291 = vsmask.f32 256
      %v293 = vshrl.u32 %v288, 16
      %v295 = vrot.slane %v293, 7
      %v296 = vshll.u32 %v288, 16
      %v298 = vor.u32 %v295, %v296
      %v300 = vshrl.u32 %v289, 16
      %v302 = vrot.slane %v300, 7
      %v303 = vshll.u32 %v289, 16
      %v305 = vor.u32 %v302, %v303
      %v306 = vsel %vm291, %v295, %v305
      %v308 = vshrl.u32 %v290, 16
      %v310 = vrot.slane %v308, 7
      %v311 = vshll.u32 %v290, 16
      %v313 = vor.u32 %v310, %v311
      %v314 = vsel %vm291, %v302, %v313
      %vm318 = vcmask 1040384
      %vm319 = vmand %vm318, %vm291
      %v320 = vsel %vm319, %v277, %v298
      %v324 = vld [vmem:[%s1] sm:$0xf]
      %v325 = vld [vmem:[%s1 + $0x4] sm:$0xf]
      %v326 = vld [vmem:[%s1 + $0x8] sm:$0xf]
      %v327 = vld [vmem:[%s1 + $0xc] sm:$0xf]
      %v328 = vld [vmem:[%s1 + $0x10] sm:$0xf]
      %v329 = vld [vmem:[%s1 + $0x14] sm:$0xf]
      %v330 = vld [vmem:[%s1 + $0x18] sm:$0xf]
      %v331 = vld [vmem:[%s1 + $0x1c] sm:$0xf]
      %v332 = vld [vmem:[%s1 + $0x20] sm:$0xf]
      %v333 = vld [vmem:[%s1 + $0x24] sm:$0xf]
      %v334 = vld [vmem:[%s1 + $0x28] sm:$0xf]
      %v335 = vld [vmem:[%s1 + $0x2c] sm:$0xf]
      %v336 = vld [vmem:[%s1 + $0x30] sm:$0xf]
      %v337 = vld [vmem:[%s1 + $0x34] sm:$0xf]
      %v338 = vld [vmem:[%s1 + $0x38] sm:$0xf]
      %v339 = vld [vmem:[%s1 + $0x3c] sm:$0xf]
      %v340 = vld [vmem:[%s1 + $0x40] sm:$0xf]
      %v341 = vld [vmem:[%s1 + $0x44] sm:$0xf]
      %v342 = vld [vmem:[%s1 + $0x48] sm:$0xf]
      %v343 = vld [vmem:[%s1 + $0x4c] sm:$0xf]
      %v344 = vld [vmem:[%s1 + $0x50] sm:$0xf]
      %v345 = vld [vmem:[%s1 + $0x54] sm:$0xf]
      %v346 = vld [vmem:[%s1 + $0x58] sm:$0xf]
      %v347 = vld [vmem:[%s1 + $0x5c] sm:$0xf]
      %v348 = vld [vmem:[%s1 + $0x60] sm:$0xf]
      %v349 = vld [vmem:[%s1 + $0x64] sm:$0xf]
      %v350 = vld [vmem:[%s1 + $0x68] sm:$0xf]
      %v351 = vld [vmem:[%s1 + $0x6c] sm:$0xf]
      %v352 = vld [vmem:[%s1 + $0x70] sm:$0xf]
      %v353 = vld [vmem:[%s1 + $0x74] sm:$0xf]
      %v354 = vld [vmem:[%s1 + $0x78] sm:$0xf]
      %v355 = vld [vmem:[%s1 + $0x7c] sm:$0xf]
      %v356 = vld [vmem:[%s2] sm:$0x1]
      %v358 = vperm.slane %v356, 0
      %v392 = vunpack.c.l.b16 %v324
      %v393 = vunpack.c.l.b16 %v325
      %v394 = vunpack.c.l.b16 %v326
      %v395 = vunpack.c.l.b16 %v327
      %v396 = vunpack.c.l.b16 %v328
      %v397 = vunpack.c.l.b16 %v329
      %v398 = vunpack.c.l.b16 %v330
      %v399 = vunpack.c.l.b16 %v331
      %v400 = vunpack.c.l.b16 %v332
      %v401 = vunpack.c.l.b16 %v333
      %v402 = vunpack.c.l.b16 %v334
      %v403 = vunpack.c.l.b16 %v335
      %v404 = vunpack.c.l.b16 %v336
      %v405 = vunpack.c.l.b16 %v337
      %v406 = vunpack.c.l.b16 %v338
      %v407 = vunpack.c.l.b16 %v339
      %v408 = vunpack.c.l.b16 %v340
      %v409 = vunpack.c.l.b16 %v341
      %v410 = vunpack.c.l.b16 %v342
      %v411 = vunpack.c.l.b16 %v343
      %v412 = vunpack.c.l.b16 %v344
      %v413 = vunpack.c.l.b16 %v345
      %v414 = vunpack.c.l.b16 %v346
      %v415 = vunpack.c.l.b16 %v347
      %v416 = vunpack.c.l.b16 %v348
      %v417 = vunpack.c.l.b16 %v349
      %v418 = vunpack.c.l.b16 %v350
      %v419 = vunpack.c.l.b16 %v351
      %v420 = vunpack.c.l.b16 %v352
      %v421 = vunpack.c.l.b16 %v353
      %v422 = vunpack.c.l.b16 %v354
      %v423 = vunpack.c.l.b16 %v355
      %v424 = vpack.c.b16 %v393, %v392
      %v425 = vpack.c.b16 %v395, %v394
      %v426 = vpack.c.b16 %v397, %v396
      %v427 = vpack.c.b16 %v399, %v398
      %v428 = vpack.c.b16 %v401, %v400
      %v429 = vpack.c.b16 %v403, %v402
      %v430 = vpack.c.b16 %v405, %v404
      %v431 = vpack.c.b16 %v407, %v406
      %v432 = vpack.c.b16 %v409, %v408
      %v433 = vpack.c.b16 %v411, %v410
      %v434 = vpack.c.b16 %v413, %v412
      %v435 = vpack.c.b16 %v415, %v414
      %v436 = vpack.c.b16 %v417, %v416
      %v437 = vpack.c.b16 %v419, %v418
      %v438 = vpack.c.b16 %v421, %v420
      %v439 = vpack.c.b16 %v423, %v422
      %456 = vmatpush.bf16.msra.mxu0 %v431
      %457 = vmatpush.bf16.msra.mxu0 %v430
      %458 = vmatpush.bf16.msra.mxu0 %v429
      %459 = vmatpush.bf16.msra.mxu0 %v428
      %460 = vmatpush.bf16.msra.mxu0 %v427
      %461 = vmatpush.bf16.msra.mxu0 %v426
      %462 = vmatpush.bf16.msra.mxu0 %v425
      %463 = vmatpush.bf16.msra.mxu0 %v424
      %464 = vmatmul.bf16.gmra.mxu0 %v320
      %v465 = vpop.f32.mrf.mxu0
      %v466 = vadd.f32 %v358, %v465
      %v467 = vpop.f32.mrf.mxu0
      %v468 = vadd.f32 %v358, %v467
      %469 = vmatmul.bf16.gmra.mxu0 %v306
      %v470 = vpop.f32.mrf.mxu0
      %v471 = vadd.f32 %v358, %v470
      %v472 = vpop.f32.mrf.mxu0
      %v473 = vadd.f32 %v358, %v472
      %474 = vmatmul.bf16.gmra.mxu0 %v314
      %v475 = vpop.f32.mrf.mxu0
      %v476 = vadd.f32 %v358, %v475
      %v477 = vpop.f32.mrf.mxu0
      %478 = vdwg.mxu0
      %479 = vmatpush.bf16.msra.mxu0 %v439
      %480 = vmatpush.bf16.msra.mxu0 %v438
      %481 = vmatpush.bf16.msra.mxu0 %v437
      %482 = vmatpush.bf16.msra.mxu0 %v436
      %483 = vmatpush.bf16.msra.mxu0 %v435
      %484 = vmatpush.bf16.msra.mxu0 %v434
      %485 = vmatpush.bf16.msra.mxu0 %v433
      %486 = vmatpush.bf16.msra.mxu0 %v432
      %487 = vmatmul.bf16.gmra.mxu0 %v288
      %v488 = vpop.f32.mrf.mxu0
      %v489 = vadd.f32 %v466, %v488
      %v490 = vpop.f32.mrf.mxu0
      %v491 = vadd.f32 %v468, %v490
      %492 = vmatmul.bf16.gmra.mxu0 %v289
      %v493 = vpop.f32.mrf.mxu0
      %v494 = vadd.f32 %v471, %v493
      %v495 = vpop.f32.mrf.mxu0
      %v496 = vadd.f32 %v473, %v495
      %497 = vmatmul.bf16.gmra.mxu0 %v290
      %v498 = vpop.f32.mrf.mxu0
      %v499 = vadd.f32 %v476, %v498
      %v500 = vpop.f32.mrf.mxu0
      %501 = vdwg.mxu0
      %vm502 = vcmp.gt.f32.partialorder %v489, 0.0
      %vm503 = vcmp.gt.f32.partialorder %v491, 0.0
      %vm504 = vcmp.gt.f32.partialorder %v494, 0.0
      %vm505 = vcmp.gt.f32.partialorder %v496, 0.0
      %vm506 = vcmp.gt.f32.partialorder %v499, 0.0
      %v507 = vmin.f32 %v489, 0.0
      %v508 = vmin.f32 %v491, 0.0
      %v509 = vmin.f32 %v494, 0.0
      %v510 = vmin.f32 %v496, 0.0
      %v511 = vmin.f32 %v499, 0.0
      %v512 = vmul.f32 %v507, 1.442695
      %v513 = vpow.pop %v512
      %v514 = vmul.f32 %v508, 1.442695
      %v515 = vpow.pop %v514
      %v516 = vmul.f32 %v509, 1.442695
      %v517 = vpow.pop %v516
      %v518 = vmul.f32 %v510, 1.442695
      %v519 = vpow.pop %v518
      %v520 = vmul.f32 %v511, 1.442695
      %v521 = vpow.pop %v520
      %v522 = vsub.f32 %v513, 1.0
      %v523 = vsub.f32 %v515, 1.0
      %v524 = vsub.f32 %v517, 1.0
      %v525 = vsub.f32 %v519, 1.0
      %v526 = vsub.f32 %v521, 1.0
      %v527 = vsel %vm502, %v489, %v522
      %v528 = vsel %vm503, %v491, %v523
      %v529 = vsel %vm504, %v494, %v524
      %v530 = vsel %vm505, %v496, %v525
      %v531 = vsel %vm506, %v499, %v526
      %v532 = vld [vmem:[#allocation3] sm:$0x1]
      %vm538 = vcmask 1040384
      %v539 = vrot.slane %v527, 7
      %v540 = vrot.slane %v528, 7
      %v541 = vsel %vm538, %v539, %v540
      %v542 = vrot.slane %v529, 7
      %v543 = vsel %vm538, %v540, %v542
      %v544 = vrot.slane %v530, 7
      %v545 = vsel %vm538, %v542, %v544
      %v546 = vrot.slane %v531, 7
      %v547 = vsel %vm538, %v544, %v546
      %548 = vrot.lane.b32.xlu0 %v539, 96
      %v549 = vpop.permute.xlu0 %548
      %550 = vrot.lane.b32.xlu0 %v541, 96
      %v551 = vpop.permute.xlu0 %550
      %552 = vrot.lane.b32.xlu0 %v543, 96
      %v553 = vpop.permute.xlu0 %552
      %554 = vrot.lane.b32.xlu0 %v545, 96
      %v555 = vpop.permute.xlu0 %554
      %556 = vrot.lane.b32.xlu0 %v547, 96
      %v557 = vpop.permute.xlu0 %556
      %v559 = vsel %vm538, %v532, %v549
      %561 = vrot.lane.b32.xlu0 %v559, 64
      %v562 = vpop.permute.xlu0 %561
      %563 = vrot.lane.b32.xlu0 %v551, 64
      %v564 = vpop.permute.xlu0 %563
      %565 = vrot.lane.b32.xlu0 %v553, 64
      %v566 = vpop.permute.xlu0 %565
      %567 = vrot.lane.b32.xlu0 %v555, 64
      %v568 = vpop.permute.xlu0 %567
      %569 = vrot.lane.b32.xlu0 %v557, 64
      %v570 = vpop.permute.xlu0 %569
      %vm576 = vcmask 523264
      %v577 = vsel %vm576, %v527, %v562
      %v578 = vsel %vm576, %v528, %v564
      %v579 = vsel %vm576, %v529, %v566
      %v580 = vsel %vm576, %v530, %v568
      %v581 = vsel %vm576, %v531, %v570
      %v582 = vld [vmem:[%s3] sm:$0xff]
      %v583 = vld [vmem:[%s3 + $0x8] sm:$0xff]
      %v584 = vld [vmem:[%s3 + $0x10] sm:$0xff]
      %v585 = vld [vmem:[%s3 + $0x18] sm:$0xff]
      %v586 = vld [vmem:[%s3 + $0x20] sm:$0xff]
      %v587 = vld [vmem:[%s3 + $0x28] sm:$0xff]
      %v588 = vld [vmem:[%s3 + $0x30] sm:$0xff]
      %v589 = vld [vmem:[%s3 + $0x38] sm:$0xff]
      %v590 = vld [vmem:[%s3 + $0x40] sm:$0xff]
      %v591 = vld [vmem:[%s3 + $0x48] sm:$0xff]
      %v592 = vld [vmem:[%s3 + $0x50] sm:$0xff]
      %v593 = vld [vmem:[%s3 + $0x58] sm:$0xff]
      %v594 = vld [vmem:[%s4] sm:$0x1]
      %v596 = vperm.slane %v594, 0
      %vm598 = vcmask 785408
      %v600 = vsel %vm598, %v577, 0
      %v603 = vsel %vm598, %v578, 0
      %v606 = vsel %vm598, %v579, 0
      %v609 = vsel %vm598, %v580, 0
      %v612 = vsel %vm598, %v581, 0
      %614 = vmatpush.msra.mxu0 0.0
      %615 = vmatpush.msra.mxu0 0.0
      %616 = vmatpush.msra.mxu0 0.0
      %617 = vmatpush.msra.mxu0 0.0
      %618 = vmatpush.msra.mxu0 %v593
      %619 = vmatpush.msra.mxu0 %v592
      %620 = vmatpush.msra.mxu0 %v591
      %621 = vmatpush.msra.mxu0 %v590
      %622 = vmatpush.msra.mxu0 %v589
      %623 = vmatpush.msra.mxu0 %v588
      %624 = vmatpush.msra.mxu0 %v587
      %625 = vmatpush.msra.mxu0 %v586
      %626 = vmatpush.msra.mxu0 %v585
      %627 = vmatpush.msra.mxu0 %v584
      %628 = vmatpush.msra.mxu0 %v583
      %629 = vmatpush.msra.mxu0 %v582
      %630 = vmatmul.f32.gmra.mxu0 %v600
      %v631 = vpop.f32.mrf.mxu0
      %v632 = vadd.f32 %v596, %v631
      %633 = vmatmul.f32.gmra.mxu0 %v603
      %v634 = vpop.f32.mrf.mxu0
      %v635 = vadd.f32 %v596, %v634
      %636 = vmatmul.f32.gmra.mxu0 %v606
      %v637 = vpop.f32.mrf.mxu0
      %v638 = vadd.f32 %v596, %v637
      %639 = vmatmul.f32.gmra.mxu0 %v609
      %v640 = vpop.f32.mrf.mxu0
      %v641 = vadd.f32 %v596, %v640
      %642 = vmatmul.f32.gmra.mxu0 %v612
      %v643 = vpop.f32.mrf.mxu0
      %v644 = vadd.f32 %v596, %v643
      %645 = vdwg.mxu0
      %vm646 = vcmask 31744
      %647 = vst.msk [vmem:[%s262] sm:$0xff] %vm646, %v632
      %648 = vst.msk [vmem:[%s262 + $0x8] sm:$0xff] %vm646, %v635
      %649 = vst.msk [vmem:[%s262 + $0x10] sm:$0xff] %vm646, %v638
      %650 = vst.msk [vmem:[%s262 + $0x18] sm:$0xff] %vm646, %v641
      %651 = vst.msk [vmem:[%s262 + $0x20] sm:$0xff] %vm646, %v644
      %v652 = vunpack.c.l.bf16 %v275
      %653 = vst [vmem:[#allocation2 - $0x7] sm:$0x80] %v652
      %654 = vrot.lane.b32.xlu0 %v531, 96
      %v655 = vpop.permute.xlu0 %654
      %vm657 = vcmask 261127
      %658 = vst.msk [vmem:[#allocation3 - $0x7] sm:$0x80] %vm657, %v655
      %s659 = smul.u32 5, %s21
      %p660 = scmp.lt.s32.totalorder %s20, 1
      %s661 = scalar_select %p660, %s20, 1
      %p662 = scmp.lt.s32.totalorder %s659, 4
      %s663 = scalar_select %p662, %s659, 4
      %s664 = smul.addr %s661, 5
      %s665 = sadd.s32 %s663, %s664
      %s666 = smul.addr %s665, 8
      %s667 = scalar_lea.vmem %s5, %s666
      // Predicated region
      $region45: #{encodec_rvq_forward.5} parent=39 // pred_check
        %p668 = pneg %p160
      $region46: #{encodec_rvq_forward.5} parent=39 // pred_check_branch
        %670 = sbr.rel (%p668) target = $region48
      $region47: #{encodec_rvq_forward.5} parent=39 // pred_region
        %s671 = smul.u32 5, %s21
      $region48: #{encodec_rvq_forward.5} parent=39 // pred_fallthru
        _
    $region40: #{encodec_rvq_forward.5} parent=5 // pred_fallthru
      _
    %p672 = scmp.le.s32.totalorder 2, %s11
    // Predicated region
    $region49: #{encodec_rvq_forward.5} parent=5 // pred_check
      %p673 = pneg %p672
    $region50: #{encodec_rvq_forward.5} parent=5 // pred_check_branch
      %675 = sbr.rel (%p673) target = $region52
    $region51: #{encodec_rvq_forward.5} parent=5 // pred_region
      %s676 = ssub.s32 %s11, 2
      // Predicated region
      $region53: #{encodec_rvq_forward.5} parent=51 // pred_check
        %p677 = pneg %p166
      $region54: #{encodec_rvq_forward.5} parent=51 // pred_check_branch
        %679 = sbr.rel (%p677) target = $region56
      $region55: #{encodec_rvq_forward.5} parent=51 // pred_region
        %s680 = smul.u32 5, %s23
        %p681 = scmp.lt.s32.totalorder %s22, 1
        %s682 = scalar_select %p681, %s22, 1
        %p683 = scmp.lt.s32.totalorder %s680, 4
        %s684 = scalar_select %p683, %s680, 4
        %s685 = smul.addr %s682, 5
        %s686 = sadd.s32 %s684, %s685
        %s687 = smul.addr %s686, 8
        %s688 = scalar_lea.vmem %s5, %s687
      $region56: #{encodec_rvq_forward.5} parent=51 // pred_fallthru
        _
    $region52: #{encodec_rvq_forward.5} parent=5 // pred_fallthru
      _
  $region6: #{encodec_rvq_forward.5} parent=0 // loop_footer
    %s15 = sadd.s32 1, %s11
  $region7: #{encodec_rvq_forward.5} parent=0 // loop_footer_branch
    %10 = sbr.rel target = $region3
  $region8: #{encodec_rvq_forward.5} parent=0 // loop_exit
    _

// kernel: encodec_rvq_forward.4
$region0: #{encodec_rvq_forward.4}
  #allocation0 [shape = 'u32[]', space=smem, size = 0x4, offset = 0x4, fixed_abs, tag = 'smem constant byte address 0x4 - core index']
  #allocation1 [shape = 'u32[72,128]{1,0:T(1,128)}', space=vmem, size = 0x9000, scoped, tag = 'internal scratch']
  %s0 = inlined_call_operand.vmem [shape: bf16[80,128], index: 0, kind: input, shape index: {}]
  %s1 = inlined_call_operand.hbm [shape: bf16[4,128,128], index: 1, kind: input, shape index: {}]
  %s2 = inlined_call_operand.vmem [shape: f32[4,1,128], index: 2, kind: input, shape index: {}]
  %s3 = inlined_call_operand.vmem [shape: bf16[80,128], index: 3, kind: output, shape index: {0}]
  %s4 = inlined_call_operand.vmem [shape: f32[1,1,128], index: 4, kind: output, shape index: {1}]
  %5 = xla_tuple %s3, %s4
  %s6 = sld [smem:[#allocation0]]
  $region34: #{encodec_rvq_forward.4} parent=0
    _
  %s8 = ssub.s32 1, %s6
  %s9 = scalar_select 0, %s8, %s6
  $region1: #{encodec_rvq_forward.4} parent=0
    #allocation2 [shape = 'u8[131072]{0}', space=vmem, size = 0x20000, scoped, tag = 'input window, operand 1, single buffered']
    #allocation3 [shape = 's32[1]{0}', space=sflag, size = 0x4, scoped, tag = 'scoped memory for encodec_rvq_forward.4']
    %10 = vsyncpa [#allocation3], 0
    // Predicated region
    $region2: #{encodec_rvq_forward.4} parent=1 // pred_check
      _
    $region3: #{encodec_rvq_forward.4} parent=1 // pred_check_branch
      %12 = sbr.rel (0) target = $region5
    $region4: #{encodec_rvq_forward.4} parent=1 // pred_region
      _
    $region5: #{encodec_rvq_forward.4} parent=1 // pred_fallthru
      _
    // Predicated region
    $region6: #{encodec_rvq_forward.4} parent=1 // pred_check
      _
    $region7: #{encodec_rvq_forward.4} parent=1 // pred_check_branch
      %14 = sbr.rel (0) target = $region9
    $region8: #{encodec_rvq_forward.4} parent=1 // pred_region
      %16 = vsyncadd [#allocation3], 0
      %s17 = sshll.u32 %s1, 4
      %s18 = int_to_ptr.hbm [resolvable:$true] %s17
      %s19 = sshll.u32 [#allocation2], 4
      %s20 = int_to_ptr.vmem [resolvable:$true] %s19
      %25 = dma.hbm_to_vmem [thread:$0]  %s18, 4096, %s20, [#allocation3], 64, 64, 4
    $region9: #{encodec_rvq_forward.4} parent=1 // pred_fallthru
      _
    // Predicated region
    $region10: #{encodec_rvq_forward.4} parent=1 // pred_check
      _
    $region11: #{encodec_rvq_forward.4} parent=1 // pred_check_branch
      %27 = sbr.rel (0) target = $region13
    $region12: #{encodec_rvq_forward.4} parent=1 // pred_region
      _
    $region13: #{encodec_rvq_forward.4} parent=1 // pred_fallthru
      _
    // Predicated region
    $region14: #{encodec_rvq_forward.4} parent=1 // pred_check
      _
    $region15: #{encodec_rvq_forward.4} parent=1 // pred_check_branch
      %29 = sbr.rel (0) target = $region17
    $region16: #{encodec_rvq_forward.4} parent=1 // pred_region
      %31 = dma.done [#allocation3], 4096
    $region17: #{encodec_rvq_forward.4} parent=1 // pred_fallthru
      _
    %v32 = vld [vmem:[%s0] sm:$0xf]
    %v33 = vld [vmem:[%s0 + $0x4] sm:$0xf]
    %v34 = vld [vmem:[%s0 + $0x8] sm:$0xf]
    %v35 = vld [vmem:[%s0 + $0xc] sm:$0xf]
    %v36 = vld [vmem:[%s0 + $0x10] sm:$0xf]
    %v37 = vld [vmem:[%s0 + $0x14] sm:$0xf]
    %v38 = vld [vmem:[%s0 + $0x18] sm:$0xf]
    %v39 = vld [vmem:[%s0 + $0x1c] sm:$0xf]
    %v40 = vld [vmem:[%s0 + $0x20] sm:$0xf]
    %v41 = vld [vmem:[%s0 + $0x24] sm:$0xf]
    %v42 = vunpack.c.l.bf16 %v32
    %v43 = vunpack.c.l.bf16 %v33
    %v44 = vunpack.c.l.bf16 %v34
    %v45 = vunpack.c.l.bf16 %v35
    %v46 = vunpack.c.l.bf16 %v36
    %v47 = vunpack.c.l.bf16 %v37
    %v48 = vunpack.c.l.bf16 %v38
    %v49 = vunpack.c.l.bf16 %v39
    %v50 = vunpack.c.l.bf16 %v40
    %v51 = vunpack.c.l.bf16 %v41
    %v52 = vlaneseq
    %v53 = vand.u32 %v52, 127
    %s54 = smul.u32 0, 80
    %v55 = vlaneseq
    %v56 = vshrl.u32 %v55, 7
    %v57 = vadd.s32 %v56, 8
    %v58 = vadd.s32 %v56, 16
    %v59 = vadd.s32 %v56, 24
    %v60 = vadd.s32 %v56, 32
    %v61 = vadd.s32 %v56, 40
    %v62 = vadd.s32 %v56, 48
    %v63 = vadd.s32 %v56, 56
    %v64 = vadd.s32 %v56, 64
    %v65 = vadd.s32 %v56, 72
    %v66 = vstv %s54
    %v67 = vadd.s32 %v66, %v56
    %v68 = vadd.s32 %v66, %v57
    %v69 = vadd.s32 %v66, %v58
    %v70 = vadd.s32 %v66, %v59
    %v71 = vadd.s32 %v66, %v60
    %v72 = vadd.s32 %v66, %v61
    %v73 = vadd.s32 %v66, %v62
    %v74 = vadd.s32 %v66, %v63
    %v75 = vadd.s32 %v66, %v64
    %v76 = vadd.s32 %v66, %v65
    %vm77 = vcmp.lt.s32.totalorder %v67, 80
    %vm78 = vcmp.lt.s32.totalorder %v68, 80
    %vm79 = vcmp.lt.s32.totalorder %v69, 80
    %vm80 = vcmp.lt.s32.totalorder %v70, 80
    %vm81 = vcmp.lt.s32.totalorder %v71, 80
    %vm82 = vcmp.lt.s32.totalorder %v72, 80
    %vm83 = vcmp.lt.s32.totalorder %v73, 80
    %vm84 = vcmp.lt.s32.totalorder %v74, 80
    %vm85 = vcmp.lt.s32.totalorder %v75, 80
    %vm86 = vcmp.lt.s32.totalorder %v76, 80
    %v87 = vsel %vm77, 1, 0
    %v88 = vsel %vm78, 1, 0
    %v89 = vsel %vm79, 1, 0
    %v90 = vsel %vm80, 1, 0
    %v91 = vsel %vm81, 1, 0
    %v92 = vsel %vm82, 1, 0
    %v93 = vsel %vm83, 1, 0
    %v94 = vsel %vm84, 1, 0
    %v95 = vsel %vm85, 1, 0
    %v96 = vsel %vm86, 1, 0
    %v97 = vcvt.s32.f32 %v87
    %v98 = vcvt.s32.f32 %v88
    %v99 = vcvt.s32.f32 %v89
    %v100 = vcvt.s32.f32 %v90
    %v101 = vcvt.s32.f32 %v91
    %v102 = vcvt.s32.f32 %v92
    %v103 = vcvt.s32.f32 %v93
    %v104 = vcvt.s32.f32 %v94
    %v105 = vcvt.s32.f32 %v95
    %v106 = vcvt.s32.f32 %v96
    %v107 = vld [vmem:[#allocation2] sm:$0xf]
    %v108 = vld [vmem:[#allocation2 + $0x4] sm:$0xf]
    %v109 = vld [vmem:[#allocation2 + $0x8] sm:$0xf]
    %v110 = vld [vmem:[#allocation2 + $0xc] sm:$0xf]
    %v111 = vld [vmem:[#allocation2 + $0x10] sm:$0xf]
    %v112 = vld [vmem:[#allocation2 + $0x14] sm:$0xf]
    %v113 = vld [vmem:[#allocation2 + $0x18] sm:$0xf]
    %v114 = vld [vmem:[#allocation2 + $0x1c] sm:$0xf]
    %v115 = vld [vmem:[#allocation2 + $0x20] sm:$0xf]
    %v116 = vld [vmem:[#allocation2 + $0x24] sm:$0xf]
    %v117 = vld [vmem:[#allocation2 + $0x28] sm:$0xf]
    %v118 = vld [vmem:[#allocation2 + $0x2c] sm:$0xf]
    %v119 = vld [vmem:[#allocation2 + $0x30] sm:$0xf]
    %v120 = vld [vmem:[#allocation2 + $0x34] sm:$0xf]
    %v121 = vld [vmem:[#allocation2 + $0x38] sm:$0xf]
    %v122 = vld [vmem:[#allocation2 + $0x3c] sm:$0xf]
    %v133 = vunpack.c.l.b16 %v32
    %v134 = vunpack.c.l.b16 %v33
    %v135 = vunpack.c.l.b16 %v34
    %v136 = vunpack.c.l.b16 %v35
    %v137 = vunpack.c.l.b16 %v36
    %v138 = vunpack.c.l.b16 %v37
    %v139 = vunpack.c.l.b16 %v38
    %v140 = vunpack.c.l.b16 %v39
    %v141 = vunpack.c.l.b16 %v40
    %v142 = vunpack.c.l.b16 %v41
    %v143 = vpack.c.b16 %v134, %v133
    %v144 = vpack.c.b16 %v136, %v135
    %v145 = vpack.c.b16 %v138, %v137
    %v146 = vpack.c.b16 %v140, %v139
    %v147 = vpack.c.b16 %v142, %v141
    %v169 = vunpack.c.l.b16 %v107
    %v170 = vunpack.c.l.b16 %v108
    %v171 = vunpack.c.l.b16 %v109
    %v172 = vunpack.c.l.b16 %v110
    %v173 = vunpack.c.l.b16 %v111
    %v174 = vunpack.c.l.b16 %v112
    %v175 = vunpack.c.l.b16 %v113
    %v176 = vunpack.c.l.b16 %v114
    %v177 = vunpack.c.l.b16 %v115
    %v178 = vunpack.c.l.b16 %v116
    %v179 = vunpack.c.l.b16 %v117
    %v180 = vunpack.c.l.b16 %v118
    %v181 = vunpack.c.l.b16 %v119
    %v182 = vunpack.c.l.b16 %v120
    %v183 = vunpack.c.l.b16 %v121
    %v184 = vunpack.c.l.b16 %v122
    %v185 = vpack.c.b16 %v170, %v169
    %v186 = vpack.c.b16 %v172, %v171
    %v187 = vpack.c.b16 %v174, %v173
    %v188 = vpack.c.b16 %v176, %v175
    %v189 = vpack.c.b16 %v178, %v177
    %v190 = vpack.c.b16 %v180, %v179
    %v191 = vpack.c.b16 %v182, %v181
    %v192 = vpack.c.b16 %v184, %v183
    %201 = vmatpush.bf16.msra.mxu0 %v192
    %202 = vmatpush.bf16.msra.mxu0 %v191
    %203 = vmatpush.bf16.msra.mxu0 %v190
    %204 = vmatpush.bf16.msra.mxu0 %v189
    %205 = vmatpush.bf16.msra.mxu0 %v188
    %206 = vmatpush.bf16.msra.mxu0 %v187
    %207 = vmatpush.bf16.msra.mxu0 %v186
    %208 = vmatpush.bf16.msra.mxu0 %v185
    %209 = vmatmul.bf16.gmra.mxu0 %v143
    %v210 = vpop.f32.mrf.mxu0
    %v211 = vadd.f32 0.0, %v210
    %v212 = vpop.f32.mrf.mxu0
    %v213 = vadd.f32 0.0, %v212
    %214 = vmatmul.bf16.gmra.mxu0 %v144
    %v215 = vpop.f32.mrf.mxu0
    %v216 = vadd.f32 0.0, %v215
    %v217 = vpop.f32.mrf.mxu0
    %v218 = vadd.f32 0.0, %v217
    %219 = vmatmul.bf16.gmra.mxu0 %v145
    %v220 = vpop.f32.mrf.mxu0
    %v221 = vadd.f32 0.0, %v220
    %v222 = vpop.f32.mrf.mxu0
    %v223 = vadd.f32 0.0, %v222
    %224 = vmatmul.bf16.gmra.mxu0 %v146
    %v225 = vpop.f32.mrf.mxu0
    %v226 = vadd.f32 0.0, %v225
    %v227 = vpop.f32.mrf.mxu0
    %v228 = vadd.f32 0.0, %v227
    %229 = vmatmul.bf16.gmra.mxu0 %v147
    %v230 = vpop.f32.mrf.mxu0
    %v231 = vadd.f32 0.0, %v230
    %v232 = vpop.f32.mrf.mxu0
    %v233 = vadd.f32 0.0, %v232
    %234 = vdwg.mxu0
    %v235 = vld [vmem:[%s2] sm:$0x1]
    %v236 = vmul.f32 %v211, 2.0
    %v237 = vmul.f32 %v213, 2.0
    %v238 = vmul.f32 %v216, 2.0
    %v239 = vmul.f32 %v218, 2.0
    %v240 = vmul.f32 %v221, 2.0
    %v241 = vmul.f32 %v223, 2.0
    %v242 = vmul.f32 %v226, 2.0
    %v243 = vmul.f32 %v228, 2.0
    %v244 = vmul.f32 %v231, 2.0
    %v245 = vmul.f32 %v233, 2.0
    %v247 = vperm.slane %v235, 0
    %v249 = vsub.f32 %v247, %v236
    %v250 = vsub.f32 %v247, %v237
    %v251 = vsub.f32 %v247, %v238
    %v252 = vsub.f32 %v247, %v239
    %v253 = vsub.f32 %v247, %v240
    %v254 = vsub.f32 %v247, %v241
    %v255 = vsub.f32 %v247, %v242
    %v256 = vsub.f32 %v247, %v243
    %v257 = vsub.f32 %v247, %v244
    %v258 = vsub.f32 %v247, %v245
    %259 = vmin.xlane.f32.xlu0 %v249
    %v260 = vpop.xlane.xlu0 %259
    %261 = vmin.xlane.f32.xlu0 %v250
    %v262 = vpop.xlane.xlu0 %261
    %263 = vmin.xlane.f32.xlu0 %v251
    %v264 = vpop.xlane.xlu0 %263
    %265 = vmin.xlane.f32.xlu0 %v252
    %v266 = vpop.xlane.xlu0 %265
    %267 = vmin.xlane.f32.xlu0 %v253
    %v268 = vpop.xlane.xlu0 %267
    %269 = vmin.xlane.f32.xlu0 %v254
    %v270 = vpop.xlane.xlu0 %269
    %271 = vmin.xlane.f32.xlu0 %v255
    %v272 = vpop.xlane.xlu0 %271
    %273 = vmin.xlane.f32.xlu0 %v256
    %v274 = vpop.xlane.xlu0 %273
    %275 = vmin.xlane.f32.xlu0 %v257
    %v276 = vpop.xlane.xlu0 %275
    %277 = vmin.xlane.f32.xlu0 %v258
    %v278 = vpop.xlane.xlu0 %277
    %vm279 = vcmp.le.f32.partialorder %v249, %v260
    %vm280 = vcmp.le.f32.partialorder %v250, %v262
    %vm281 = vcmp.le.f32.partialorder %v251, %v264
    %vm282 = vcmp.le.f32.partialorder %v252, %v266
    %vm283 = vcmp.le.f32.partialorder %v253, %v268
    %vm284 = vcmp.le.f32.partialorder %v254, %v270
    %vm285 = vcmp.le.f32.partialorder %v255, %v272
    %vm286 = vcmp.le.f32.partialorder %v256, %v274
    %vm287 = vcmp.le.f32.partialorder %v257, %v276
    %vm288 = vcmp.le.f32.partialorder %v258, %v278
    %v289 = vsel %vm279, %v53, 128
    %v290 = vsel %vm280, %v53, 128
    %v291 = vsel %vm281, %v53, 128
    %v292 = vsel %vm282, %v53, 128
    %v293 = vsel %vm283, %v53, 128
    %v294 = vsel %vm284, %v53, 128
    %v295 = vsel %vm285, %v53, 128
    %v296 = vsel %vm286, %v53, 128
    %v297 = vsel %vm287, %v53, 128
    %v298 = vsel %vm288, %v53, 128
    %v299 = vand.u32 %v289, 65535
    %v300 = vshra.s32 %v289, 16
    %v301 = vcvt.s32.f32 %v299
    %v302 = vcvt.s32.f32 %v300
    %303 = vmin.xlane.f32.xlu0 %v302
    %v304 = vpop.xlane.xlu0 %303
    %vm305 = vcmp.eq.f32.partialorder %v302, %v304
    %v306 = vsel %vm305, %v301, inf
    %307 = vmin.xlane.f32.xlu0 %v306
    %v308 = vpop.xlane.xlu0 %307
    %v309 = vcvt.f32.s32 %v308
    %v310 = vcvt.f32.s32 %v304
    %v311 = vshll.u32 %v310, 16
    %v312 = vadd.s32 %v311, %v309
    %v313 = vand.u32 %v290, 65535
    %v314 = vshra.s32 %v290, 16
    %v315 = vcvt.s32.f32 %v313
    %v316 = vcvt.s32.f32 %v314
    %317 = vmin.xlane.f32.xlu0 %v316
    %v318 = vpop.xlane.xlu0 %317
    %vm319 = vcmp.eq.f32.partialorder %v316, %v318
    %v320 = vsel %vm319, %v315, inf
    %321 = vmin.xlane.f32.xlu0 %v320
    %v322 = vpop.xlane.xlu0 %321
    %v323 = vcvt.f32.s32 %v322
    %v324 = vcvt.f32.s32 %v318
    %v325 = vshll.u32 %v324, 16
    %v326 = vadd.s32 %v325, %v323
    %v327 = vand.u32 %v291, 65535
    %v328 = vshra.s32 %v291, 16
    %v329 = vcvt.s32.f32 %v327
    %v330 = vcvt.s32.f32 %v328
    %331 = vmin.xlane.f32.xlu0 %v330
    %v332 = vpop.xlane.xlu0 %331
    %vm333 = vcmp.eq.f32.partialorder %v330, %v332
    %v334 = vsel %vm333, %v329, inf
    %335 = vmin.xlane.f32.xlu0 %v334
    %v336 = vpop.xlane.xlu0 %335
    %v337 = vcvt.f32.s32 %v336
    %v338 = vcvt.f32.s32 %v332
    %v339 = vshll.u32 %v338, 16
    %v340 = vadd.s32 %v339, %v337
    %v341 = vand.u32 %v292, 65535
    %v342 = vshra.s32 %v292, 16
    %v343 = vcvt.s32.f32 %v341
    %v344 = vcvt.s32.f32 %v342
    %345 = vmin.xlane.f32.xlu0 %v344
    %v346 = vpop.xlane.xlu0 %345
    %vm347 = vcmp.eq.f32.partialorder %v344, %v346
    %v348 = vsel %vm347, %v343, inf
    %349 = vmin.xlane.f32.xlu0 %v348
    %v350 = vpop.xlane.xlu0 %349
    %v351 = vcvt.f32.s32 %v350
    %v352 = vcvt.f32.s32 %v346
    %v353 = vshll.u32 %v352, 16
    %v354 = vadd.s32 %v353, %v351
    %v355 = vand.u32 %v293, 65535
    %v356 = vshra.s32 %v293, 16
    %v357 = vcvt.s32.f32 %v355
    %v358 = vcvt.s32.f32 %v356
    %359 = vmin.xlane.f32.xlu0 %v358
    %v360 = vpop.xlane.xlu0 %359
    %vm361 = vcmp.eq.f32.partialorder %v358, %v360
    %v362 = vsel %vm361, %v357, inf
    %363 = vmin.xlane.f32.xlu0 %v362
    %v364 = vpop.xlane.xlu0 %363
    %v365 = vcvt.f32.s32 %v364
    %v366 = vcvt.f32.s32 %v360
    %v367 = vshll.u32 %v366, 16
    %v368 = vadd.s32 %v367, %v365
    %v369 = vand.u32 %v294, 65535
    %v370 = vshra.s32 %v294, 16
    %v371 = vcvt.s32.f32 %v369
    %v372 = vcvt.s32.f32 %v370
    %373 = vmin.xlane.f32.xlu0 %v372
    %v374 = vpop.xlane.xlu0 %373
    %vm375 = vcmp.eq.f32.partialorder %v372, %v374
    %v376 = vsel %vm375, %v371, inf
    %377 = vmin.xlane.f32.xlu0 %v376
    %v378 = vpop.xlane.xlu0 %377
    %v379 = vcvt.f32.s32 %v378
    %v380 = vcvt.f32.s32 %v374
    %v381 = vshll.u32 %v380, 16
    %v382 = vadd.s32 %v381, %v379
    %v383 = vand.u32 %v295, 65535
    %v384 = vshra.s32 %v295, 16
    %v385 = vcvt.s32.f32 %v383
    %v386 = vcvt.s32.f32 %v384
    %387 = vmin.xlane.f32.xlu0 %v386
    %v388 = vpop.xlane.xlu0 %387
    %vm389 = vcmp.eq.f32.partialorder %v386, %v388
    %v390 = vsel %vm389, %v385, inf
    %391 = vmin.xlane.f32.xlu0 %v390
    %v392 = vpop.xlane.xlu0 %391
    %v393 = vcvt.f32.s32 %v392
    %v394 = vcvt.f32.s32 %v388
    %v395 = vshll.u32 %v394, 16
    %v396 = vadd.s32 %v395, %v393
    %v397 = vand.u32 %v296, 65535
    %v398 = vshra.s32 %v296, 16
    %v399 = vcvt.s32.f32 %v397
    %v400 = vcvt.s32.f32 %v398
    %401 = vmin.xlane.f32.xlu0 %v400
    %v402 = vpop.xlane.xlu0 %401
    %vm403 = vcmp.eq.f32.partialorder %v400, %v402
    %v404 = vsel %vm403, %v399, inf
    %405 = vmin.xlane.f32.xlu0 %v404
    %v406 = vpop.xlane.xlu0 %405
    %v407 = vcvt.f32.s32 %v406
    %v408 = vcvt.f32.s32 %v402
    %v409 = vshll.u32 %v408, 16
    %v410 = vadd.s32 %v409, %v407
    %v411 = vand.u32 %v297, 65535
    %v412 = vshra.s32 %v297, 16
    %v413 = vcvt.s32.f32 %v411
    %v414 = vcvt.s32.f32 %v412
    %415 = vmin.xlane.f32.xlu0 %v414
    %v416 = vpop.xlane.xlu0 %415
    %vm417 = vcmp.eq.f32.partialorder %v414, %v416
    %v418 = vsel %vm417, %v413, inf
    %419 = vmin.xlane.f32.xlu0 %v418
    %v420 = vpop.xlane.xlu0 %419
    %v421 = vcvt.f32.s32 %v420
    %v422 = vcvt.f32.s32 %v416
    %v423 = vshll.u32 %v422, 16
    %v424 = vadd.s32 %v423, %v421
    %v425 = vand.u32 %v298, 65535
    %v426 = vshra.s32 %v298, 16
    %v427 = vcvt.s32.f32 %v425
    %v428 = vcvt.s32.f32 %v426
    %429 = vmin.xlane.f32.xlu0 %v428
    %v430 = vpop.xlane.xlu0 %429
    %vm431 = vcmp.eq.f32.partialorder %v428, %v430
    %v432 = vsel %vm431, %v427, inf
    %433 = vmin.xlane.f32.xlu0 %v432
    %v434 = vpop.xlane.xlu0 %433
    %v435 = vcvt.f32.s32 %v434
    %v436 = vcvt.f32.s32 %v430
    %v437 = vshll.u32 %v436, 16
    %v438 = vadd.s32 %v437, %v435
    %vm439 = vcmp.eq.s32.totalorder %v53, %v312
    %vm440 = vcmp.eq.s32.totalorder %v53, %v326
    %vm441 = vcmp.eq.s32.totalorder %v53, %v340
    %vm442 = vcmp.eq.s32.totalorder %v53, %v354
    %vm443 = vcmp.eq.s32.totalorder %v53, %v368
    %vm444 = vcmp.eq.s32.totalorder %v53, %v382
    %vm445 = vcmp.eq.s32.totalorder %v53, %v396
    %vm446 = vcmp.eq.s32.totalorder %v53, %v410
    %vm447 = vcmp.eq.s32.totalorder %v53, %v424
    %vm448 = vcmp.eq.s32.totalorder %v53, %v438
    %v449 = vsel %vm439, 1, 0
    %v450 = vsel %vm440, 1, 0
    %v451 = vsel %vm441, 1, 0
    %v452 = vsel %vm442, 1, 0
    %v453 = vsel %vm443, 1, 0
    %v454 = vsel %vm444, 1, 0
    %v455 = vsel %vm445, 1, 0
    %v456 = vsel %vm446, 1, 0
    %v457 = vsel %vm447, 1, 0
    %v458 = vsel %vm448, 1, 0
    %v459 = vcvt.s32.f32 %v449
    %v460 = vcvt.s32.f32 %v450
    %v461 = vcvt.s32.f32 %v451
    %v462 = vcvt.s32.f32 %v452
    %v463 = vcvt.s32.f32 %v453
    %v464 = vcvt.s32.f32 %v454
    %v465 = vcvt.s32.f32 %v455
    %v466 = vcvt.s32.f32 %v456
    %v467 = vcvt.s32.f32 %v457
    %v468 = vcvt.s32.f32 %v458
    %v469 = vpack.c.bf16 %v460, %v459
    %v470 = vpack.c.bf16 %v462, %v461
    %v471 = vpack.c.bf16 %v464, %v463
    %v472 = vpack.c.bf16 %v466, %v465
    %v473 = vpack.c.bf16 %v468, %v467
    %474 = vmatpush.bf16.xpose.msra.mxu0 %v192
    %475 = vmatpush.bf16.xpose.msra.mxu0 %v191
    %476 = vmatpush.bf16.xpose.msra.mxu0 %v190
    %477 = vmatpush.bf16.xpose.msra.mxu0 %v189
    %478 = vmatpush.bf16.xpose.msra.mxu0 %v188
    %479 = vmatpush.bf16.xpose.msra.mxu0 %v187
    %480 = vmatpush.bf16.xpose.msra.mxu0 %v186
    %481 = vmatpush.bf16.xpose.msra.mxu0 %v185
    %482 = vmatmul.bf16.gmra.mxu0 %v469
    %v483 = vpop.f32.mrf.mxu0
    %v484 = vadd.f32 0.0, %v483
    %v485 = vpop.f32.mrf.mxu0
    %v486 = vadd.f32 0.0, %v485
    %487 = vmatmul.bf16.gmra.mxu0 %v470
    %v488 = vpop.f32.mrf.mxu0
    %v489 = vadd.f32 0.0, %v488
    %v490 = vpop.f32.mrf.mxu0
    %v491 = vadd.f32 0.0, %v490
    %492 = vmatmul.bf16.gmra.mxu0 %v471
    %v493 = vpop.f32.mrf.mxu0
    %v494 = vadd.f32 0.0, %v493
    %v495 = vpop.f32.mrf.mxu0
    %v496 = vadd.f32 0.0, %v495
    %497 = vmatmul.bf16.gmra.mxu0 %v472
    %v498 = vpop.f32.mrf.mxu0
    %v499 = vadd.f32 0.0, %v498
    %v500 = vpop.f32.mrf.mxu0
    %v501 = vadd.f32 0.0, %v500
    %502 = vmatmul.bf16.gmra.mxu0 %v473
    %v503 = vpop.f32.mrf.mxu0
    %v504 = vadd.f32 0.0, %v503
    %v505 = vpop.f32.mrf.mxu0
    %v506 = vadd.f32 0.0, %v505
    %507 = vdwg.mxu0
    %v508 = vsub.f32 %v484, %v42
    %v509 = vsub.f32 %v486, %v43
    %v510 = vsub.f32 %v489, %v44
    %v511 = vsub.f32 %v491, %v45
    %v512 = vsub.f32 %v494, %v46
    %v513 = vsub.f32 %v496, %v47
    %v514 = vsub.f32 %v499, %v48
    %v515 = vsub.f32 %v501, %v49
    %v516 = vsub.f32 %v504, %v50
    %v517 = vsub.f32 %v506, %v51
    %v518 = vmul.f32 %v97, %v508
    %v519 = vmul.f32 %v98, %v509
    %v520 = vmul.f32 %v99, %v510
    %v521 = vmul.f32 %v100, %v511
    %v522 = vmul.f32 %v101, %v512
    %v523 = vmul.f32 %v102, %v513
    %v524 = vmul.f32 %v103, %v514
    %v525 = vmul.f32 %v104, %v515
    %v526 = vmul.f32 %v105, %v516
    %v527 = vmul.f32 %v106, %v517
    %v528 = vmul.f32 %v518, %v508
    %v529 = vmul.f32 %v519, %v509
    %v530 = vmul.f32 %v520, %v510
    %v531 = vmul.f32 %v521, %v511
    %v532 = vmul.f32 %v522, %v512
    %v533 = vmul.f32 %v523, %v513
    %v534 = vmul.f32 %v524, %v514
    %v535 = vmul.f32 %v525, %v515
    %v536 = vmul.f32 %v526, %v516
    %v537 = vmul.f32 %v527, %v517
    %v538 = vadd.f32 %v528, %v529
    %v539 = vadd.f32 %v538, %v530
    %v540 = vadd.f32 %v539, %v531
    %v541 = vadd.f32 %v540, %v532
    %v542 = vadd.f32 %v541, %v533
    %v543 = vadd.f32 %v542, %v534
    %v544 = vadd.f32 %v543, %v535
    %v545 = vadd.f32 %v544, %v536
    %v546 = vadd.f32 %v545, %v537
    %547 = vadd.xlane.f32.xlu0 %v546
    %v548 = vpop.xlane.xlu0 %547
    %v549 = vrot.slane %v548, 4
    %v550 = vadd.f32 %v548, %v549
    %v551 = vrot.slane %v550, 2
    %v552 = vadd.f32 %v550, %v551
    %v553 = vrot.slane %v552, 1
    %v554 = vadd.f32 %v552, %v553
    %s555 = vtos %v554
    %s556 = sadd.f32 %s555, 0.0
    %v557 = vadd.f32 %v484, 0.0
    %v558 = vadd.f32 %v486, 0.0
    %v559 = vadd.f32 %v489, 0.0
    %v560 = vadd.f32 %v491, 0.0
    %v561 = vadd.f32 %v494, 0.0
    %v562 = vadd.f32 %v496, 0.0
    %v563 = vadd.f32 %v499, 0.0
    %v564 = vadd.f32 %v501, 0.0
    %v565 = vadd.f32 %v504, 0.0
    %v566 = vadd.f32 %v506, 0.0
    %v567 = vsub.f32 %v42, %v484
    %v568 = vsub.f32 %v43, %v486
    %v569 = vsub.f32 %v44, %v489
    %v570 = vsub.f32 %v45, %v491
    %v571 = vsub.f32 %v46, %v494
    %v572 = vsub.f32 %v47, %v496
    %v573 = vsub.f32 %v48, %v499
    %v574 = vsub.f32 %v49, %v501
    %v575 = vsub.f32 %v50, %v504
    %v576 = vsub.f32 %v51, %v506
    %s577 = scalar_lea.vmem [#allocation2], 64
    %v578 = vld [vmem:[%s577] sm:$0xf]
    %v579 = vld [vmem:[%s577 + $0x4] sm:$0xf]
    %v580 = vld [vmem:[%s577 + $0x8] sm:$0xf]
    %v581 = vld [vmem:[%s577 + $0xc] sm:$0xf]
    %v582 = vld [vmem:[%s577 + $0x10] sm:$0xf]
    %v583 = vld [vmem:[%s577 + $0x14] sm:$0xf]
    %v584 = vld [vmem:[%s577 + $0x18] sm:$0xf]
    %v585 = vld [vmem:[%s577 + $0x1c] sm:$0xf]
    %v586 = vld [vmem:[%s577 + $0x20] sm:$0xf]
    %v587 = vld [vmem:[%s577 + $0x24] sm:$0xf]
    %v588 = vld [vmem:[%s577 + $0x28] sm:$0xf]
    %v589 = vld [vmem:[%s577 + $0x2c] sm:$0xf]
    %v590 = vld [vmem:[%s577 + $0x30] sm:$0xf]
    %v591 = vld [vmem:[%s577 + $0x34] sm:$0xf]
    %v592 = vld [vmem:[%s577 + $0x38] sm:$0xf]
    %v593 = vld [vmem:[%s577 + $0x3c] sm:$0xf]
    %v594 = vpack.c.bf16 %v568, %v567
    %v595 = vpack.c.bf16 %v570, %v569
    %v596 = vpack.c.bf16 %v572, %v571
    %v597 = vpack.c.bf16 %v574, %v573
    %v598 = vpack.c.bf16 %v576, %v575
    %v615 = vunpack.c.l.b16 %v578
    %v616 = vunpack.c.l.b16 %v579
    %v617 = vunpack.c.l.b16 %v580
    %v618 = vunpack.c.l.b16 %v581
    %v619 = vunpack.c.l.b16 %v582
    %v620 = vunpack.c.l.b16 %v583
    %v621 = vunpack.c.l.b16 %v584
    %v622 = vunpack.c.l.b16 %v585
    %v623 = vunpack.c.l.b16 %v586
    %v624 = vunpack.c.l.b16 %v587
    %v625 = vunpack.c.l.b16 %v588
    %v626 = vunpack.c.l.b16 %v589
    %v627 = vunpack.c.l.b16 %v590
    %v628 = vunpack.c.l.b16 %v591
    %v629 = vunpack.c.l.b16 %v592
    %v630 = vunpack.c.l.b16 %v593
    %v631 = vpack.c.b16 %v616, %v615
    %v632 = vpack.c.b16 %v618, %v617
    %v633 = vpack.c.b16 %v620, %v619
    %v634 = vpack.c.b16 %v622, %v621
    %v635 = vpack.c.b16 %v624, %v623
    %v636 = vpack.c.b16 %v626, %v625
    %v637 = vpack.c.b16 %v628, %v627
    %v638 = vpack.c.b16 %v630, %v629
    %647 = vmatpush.bf16.msra.mxu0 %v638
    %648 = vmatpush.bf16.msra.mxu0 %v637
    %649 = vmatpush.bf16.msra.mxu0 %v636
    %650 = vmatpush.bf16.msra.mxu0 %v635
    %651 = vmatpush.bf16.msra.mxu0 %v634
    %652 = vmatpush.bf16.msra.mxu0 %v633
    %653 = vmatpush.bf16.msra.mxu0 %v632
    %654 = vmatpush.bf16.msra.mxu0 %v631
    %655 = vmatmul.bf16.gmra.mxu0 %v594
    %v656 = vpop.f32.mrf.mxu0
    %v657 = vadd.f32 0.0, %v656
    %v658 = vpop.f32.mrf.mxu0
    %v659 = vadd.f32 0.0, %v658
    %660 = vmatmul.bf16.gmra.mxu0 %v595
    %v661 = vpop.f32.mrf.mxu0
    %v662 = vadd.f32 0.0, %v661
    %v663 = vpop.f32.mrf.mxu0
    %v664 = vadd.f32 0.0, %v663
    %665 = vmatmul.bf16.gmra.mxu0 %v596
    %v666 = vpop.f32.mrf.mxu0
    %v667 = vadd.f32 0.0, %v666
    %v668 = vpop.f32.mrf.mxu0
    %v669 = vadd.f32 0.0, %v668
    %670 = vmatmul.bf16.gmra.mxu0 %v597
    %v671 = vpop.f32.mrf.mxu0
    %v672 = vadd.f32 0.0, %v671
    %v673 = vpop.f32.mrf.mxu0
    %v674 = vadd.f32 0.0, %v673
    %675 = vmatmul.bf16.gmra.mxu0 %v598
    %v676 = vpop.f32.mrf.mxu0
    %v677 = vadd.f32 0.0, %v676
    %v678 = vpop.f32.mrf.mxu0
    %v679 = vadd.f32 0.0, %v678
    %680 = vdwg.mxu0
    %s681 = scalar_lea.vmem %s2, 1
    %v682 = vld [vmem:[%s681] sm:$0x1]
    %v683 = vmul.f32 %v657, 2.0
    %v684 = vmul.f32 %v659, 2.0
    %v685 = vmul.f32 %v662, 2.0
    %v686 = vmul.f32 %v664, 2.0
    %v687 = vmul.f32 %v667, 2.0
    %v688 = vmul.f32 %v669, 2.0
    %v689 = vmul.f32 %v672, 2.0
    %v690 = vmul.f32 %v674, 2.0
    %v691 = vmul.f32 %v677, 2.0
    %v692 = vmul.f32 %v679, 2.0
    %v694 = vperm.slane %v682, 0
    %v696 = vsub.f32 %v694, %v683
    %v697 = vsub.f32 %v694, %v684
    %v698 = vsub.f32 %v694, %v685
    %v699 = vsub.f32 %v694, %v686
    %v700 = vsub.f32 %v694, %v687
    %v701 = vsub.f32 %v694, %v688
    %v702 = vsub.f32 %v694, %v689
    %v703 = vsub.f32 %v694, %v690
    %v704 = vsub.f32 %v694, %v691
    %v705 = vsub.f32 %v694, %v692
    %706 = vmin.xlane.f32.xlu0 %v696
    %v707 = vpop.xlane.xlu0 %706
    %708 = vmin.xlane.f32.xlu0 %v697
    %v709 = vpop.xlane.xlu0 %708
    %710 = vmin.xlane.f32.xlu0 %v698
    %v711 = vpop.xlane.xlu0 %710
    %712 = vmin.xlane.f32.xlu0 %v699
    %v713 = vpop.xlane.xlu0 %712
    %714 = vmin.xlane.f32.xlu0 %v700
    %v715 = vpop.xlane.xlu0 %714
    %716 = vmin.xlane.f32.xlu0 %v701
    %v717 = vpop.xlane.xlu0 %716
    %718 = vmin.xlane.f32.xlu0 %v702
    %v719 = vpop.xlane.xlu0 %718
    %720 = vmin.xlane.f32.xlu0 %v703
    %v721 = vpop.xlane.xlu0 %720
    %722 = vmin.xlane.f32.xlu0 %v704
    %v723 = vpop.xlane.xlu0 %722
    %724 = vmin.xlane.f32.xlu0 %v705
    %v725 = vpop.xlane.xlu0 %724
    %vm726 = vcmp.le.f32.partialorder %v696, %v707
    %vm727 = vcmp.le.f32.partialorder %v697, %v709
    %vm728 = vcmp.le.f32.partialorder %v698, %v711
    %vm729 = vcmp.le.f32.partialorder %v699, %v713
    %vm730 = vcmp.le.f32.partialorder %v700, %v715
    %vm731 = vcmp.le.f32.partialorder %v701, %v717
    %vm732 = vcmp.le.f32.partialorder %v702, %v719
    %vm733 = vcmp.le.f32.partialorder %v703, %v721
    %vm734 = vcmp.le.f32.partialorder %v704, %v723
    %vm735 = vcmp.le.f32.partialorder %v705, %v725
    %v736 = vsel %vm726, %v53, 128
    %v737 = vsel %vm727, %v53, 128
    %v738 = vsel %vm728, %v53, 128
    %v739 = vsel %vm729, %v53, 128
    %v740 = vsel %vm730, %v53, 128
    %v741 = vsel %vm731, %v53, 128
    %v742 = vsel %vm732, %v53, 128
    %v743 = vsel %vm733, %v53, 128
    %v744 = vsel %vm734, %v53, 128
    %v745 = vsel %vm735, %v53, 128
    %v746 = vand.u32 %v736, 65535
    %v747 = vshra.s32 %v736, 16
    %v748 = vcvt.s32.f32 %v746
    %v749 = vcvt.s32.f32 %v747
    %750 = vmin.xlane.f32.xlu0 %v749
    %v751 = vpop.xlane.xlu0 %750
    %vm752 = vcmp.eq.f32.partialorder %v749, %v751
    %v753 = vsel %vm752, %v748, inf
    %754 = vmin.xlane.f32.xlu0 %v753
    %v755 = vpop.xlane.xlu0 %754
    %v756 = vcvt.f32.s32 %v755
    %v757 = vcvt.f32.s32 %v751
    %v758 = vshll.u32 %v757, 16
    %v759 = vadd.s32 %v758, %v756
    %v760 = vand.u32 %v737, 65535
    %v761 = vshra.s32 %v737, 16
    %v762 = vcvt.s32.f32 %v760
    %v763 = vcvt.s32.f32 %v761
    %764 = vmin.xlane.f32.xlu0 %v763
    %v765 = vpop.xlane.xlu0 %764
    %vm766 = vcmp.eq.f32.partialorder %v763, %v765
    %v767 = vsel %vm766, %v762, inf
    %768 = vmin.xlane.f32.xlu0 %v767
    %v769 = vpop.xlane.xlu0 %768
    %v770 = vcvt.f32.s32 %v769
    %v771 = vcvt.f32.s32 %v765
    %v772 = vshll.u32 %v771, 16
    %v773 = vadd.s32 %v772, %v770
    %v774 = vand.u32 %v738, 65535
    %v775 = vshra.s32 %v738, 16
    %v776 = vcvt.s32.f32 %v774
    %v777 = vcvt.s32.f32 %v775
    %778 = vmin.xlane.f32.xlu0 %v777
    %v779 = vpop.xlane.xlu0 %778
    %vm780 = vcmp.eq.f32.partialorder %v777, %v779
    %v781 = vsel %vm780, %v776, inf
    %782 = vmin.xlane.f32.xlu0 %v781
    %v783 = vpop.xlane.xlu0 %782
    %v784 = vcvt.f32.s32 %v783
    %v785 = vcvt.f32.s32 %v779
    %v786 = vshll.u32 %v785, 16
    %v787 = vadd.s32 %v786, %v784
    %v788 = vand.u32 %v739, 65535
    %v789 = vshra.s32 %v739, 16
    %v790 = vcvt.s32.f32 %v788
    %v791 = vcvt.s32.f32 %v789
    %792 = vmin.xlane.f32.xlu0 %v791
    %v793 = vpop.xlane.xlu0 %792
    %vm794 = vcmp.eq.f32.partialorder %v791, %v793
    %v795 = vsel %vm794, %v790, inf
    %796 = vmin.xlane.f32.xlu0 %v795
    %v797 = vpop.xlane.xlu0 %796
    %v798 = vcvt.f32.s32 %v797
    %v799 = vcvt.f32.s32 %v793
    %v800 = vshll.u32 %v799, 16
    %v801 = vadd.s32 %v800, %v798
    %v802 = vand.u32 %v740, 65535
    %v803 = vshra.s32 %v740, 16
    %v804 = vcvt.s32.f32 %v802
    %v805 = vcvt.s32.f32 %v803
    %806 = vmin.xlane.f32.xlu0 %v805
    %v807 = vpop.xlane.xlu0 %806
    %vm808 = vcmp.eq.f32.partialorder %v805, %v807
    %v809 = vsel %vm808, %v804, inf
    %810 = vmin.xlane.f32.xlu0 %v809
    %v811 = vpop.xlane.xlu0 %810
    %v812 = vcvt.f32.s32 %v811
    %v813 = vcvt.f32.s32 %v807
    %v814 = vshll.u32 %v813, 16
    %v815 = vadd.s32 %v814, %v812
    %v816 = vand.u32 %v741, 65535
    %v817 = vshra.s32 %v741, 16
    %v818 = vcvt.s32.f32 %v816
    %v819 = vcvt.s32.f32 %v817
    %820 = vmin.xlane.f32.xlu0 %v819
    %v821 = vpop.xlane.xlu0 %820
    %vm822 = vcmp.eq.f32.partialorder %v819, %v821
    %v823 = vsel %vm822, %v818, inf
    %824 = vmin.xlane.f32.xlu0 %v823
    %v825 = vpop.xlane.xlu0 %824
    %v826 = vcvt.f32.s32 %v825
    %v827 = vcvt.f32.s32 %v821
    %v828 = vshll.u32 %v827, 16
    %v829 = vadd.s32 %v828, %v826
    %v830 = vand.u32 %v742, 65535
    %v831 = vshra.s32 %v742, 16
    %v832 = vcvt.s32.f32 %v830
    %v833 = vcvt.s32.f32 %v831
    %834 = vmin.xlane.f32.xlu0 %v833
    %v835 = vpop.xlane.xlu0 %834
    %vm836 = vcmp.eq.f32.partialorder %v833, %v835
    %v837 = vsel %vm836, %v832, inf
    %838 = vmin.xlane.f32.xlu0 %v837
    %v839 = vpop.xlane.xlu0 %838
    %v840 = vcvt.f32.s32 %v839
    %v841 = vcvt.f32.s32 %v835
    %v842 = vshll.u32 %v841, 16
    %v843 = vadd.s32 %v842, %v840
    %v844 = vand.u32 %v743, 65535
    %v845 = vshra.s32 %v743, 16
    %v846 = vcvt.s32.f32 %v844
    %v847 = vcvt.s32.f32 %v845
    %848 = vmin.xlane.f32.xlu0 %v847
    %v849 = vpop.xlane.xlu0 %848
    %vm850 = vcmp.eq.f32.partialorder %v847, %v849
    %v851 = vsel %vm850, %v846, inf
    %852 = vmin.xlane.f32.xlu0 %v851
    %v853 = vpop.xlane.xlu0 %852
    %v854 = vcvt.f32.s32 %v853
    %v855 = vcvt.f32.s32 %v849
    %v856 = vshll.u32 %v855, 16
    %v857 = vadd.s32 %v856, %v854
    %v858 = vand.u32 %v744, 65535
    %v859 = vshra.s32 %v744, 16
    %v860 = vcvt.s32.f32 %v858
    %v861 = vcvt.s32.f32 %v859
    %862 = vmin.xlane.f32.xlu0 %v861
    %v863 = vpop.xlane.xlu0 %862
    %vm864 = vcmp.eq.f32.partialorder %v861, %v863
    %v865 = vsel %vm864, %v860, inf
    %866 = vmin.xlane.f32.xlu0 %v865
    %v867 = vpop.xlane.xlu0 %866
    %v868 = vcvt.f32.s32 %v867
    %v869 = vcvt.f32.s32 %v863
    %v870 = vshll.u32 %v869, 16
    %v871 = vadd.s32 %v870, %v868
    %v872 = vand.u32 %v745, 65535
    %v873 = vshra.s32 %v745, 16
    %v874 = vcvt.s32.f32 %v872
    %v875 = vcvt.s32.f32 %v873
    %876 = vmin.xlane.f32.xlu0 %v875
    %v877 = vpop.xlane.xlu0 %876
    %vm878 = vcmp.eq.f32.partialorder %v875, %v877
    %v879 = vsel %vm878, %v874, inf
    %880 = vmin.xlane.f32.xlu0 %v879
    %v881 = vpop.xlane.xlu0 %880
    %v882 = vcvt.f32.s32 %v881
    %v883 = vcvt.f32.s32 %v877
    %v884 = vshll.u32 %v883, 16
    %v885 = vadd.s32 %v884, %v882
    %vm886 = vcmp.eq.s32.totalorder %v53, %v759
    %vm887 = vcmp.eq.s32.totalorder %v53, %v773
    %vm888 = vcmp.eq.s32.totalorder %v53, %v787
    %vm889 = vcmp.eq.s32.totalorder %v53, %v801
    %vm890 = vcmp.eq.s32.totalorder %v53, %v815
    %vm891 = vcmp.eq.s32.totalorder %v53, %v829
    %vm892 = vcmp.eq.s32.totalorder %v53, %v843
    %vm893 = vcmp.eq.s32.totalorder %v53, %v857
    %vm894 = vcmp.eq.s32.totalorder %v53, %v871
    %vm895 = vcmp.eq.s32.totalorder %v53, %v885
    %v896 = vsel %vm886, 1, 0
    %v897 = vsel %vm887, 1, 0
    %v898 = vsel %vm888, 1, 0
    %v899 = vsel %vm889, 1, 0
    %v900 = vsel %vm890, 1, 0
    %v901 = vsel %vm891, 1, 0
    %v902 = vsel %vm892, 1, 0
    %v903 = vsel %vm893, 1, 0
    %v904 = vsel %vm894, 1, 0
    %v905 = vsel %vm895, 1, 0
    %v906 = vcvt.s32.f32 %v896
    %v907 = vcvt.s32.f32 %v897
    %v908 = vcvt.s32.f32 %v898
    %v909 = vcvt.s32.f32 %v899
    %v910 = vcvt.s32.f32 %v900
    %v911 = vcvt.s32.f32 %v901
    %v912 = vcvt.s32.f32 %v902
    %v913 = vcvt.s32.f32 %v903
    %v914 = vcvt.s32.f32 %v904
    %v915 = vcvt.s32.f32 %v905
    %v916 = vpack.c.bf16 %v907, %v906
    %v917 = vpack.c.bf16 %v909, %v908
    %v918 = vpack.c.bf16 %v911, %v910
    %v919 = vpack.c.bf16 %v913, %v912
    %v920 = vpack.c.bf16 %v915, %v914
    %921 = vmatpush.bf16.xpose.msra.mxu0 %v638
    %922 = vmatpush.bf16.xpose.msra.mxu0 %v637
    %923 = vmatpush.bf16.xpose.msra.mxu0 %v636
    %924 = vmatpush.bf16.xpose.msra.mxu0 %v635
    %925 = vmatpush.bf16.xpose.msra.mxu0 %v634
    %926 = vmatpush.bf16.xpose.msra.mxu0 %v633
    %927 = vmatpush.bf16.xpose.msra.mxu0 %v632
    %928 = vmatpush.bf16.xpose.msra.mxu0 %v631
    %929 = vmatmul.bf16.gmra.mxu0 %v916
    %v930 = vpop.f32.mrf.mxu0
    %v931 = vadd.f32 0.0, %v930
    %v932 = vpop.f32.mrf.mxu0
    %v933 = vadd.f32 0.0, %v932
    %934 = vmatmul.bf16.gmra.mxu0 %v917
    %v935 = vpop.f32.mrf.mxu0
    %v936 = vadd.f32 0.0, %v935
    %v937 = vpop.f32.mrf.mxu0
    %v938 = vadd.f32 0.0, %v937
    %939 = vmatmul.bf16.gmra.mxu0 %v918
    %v940 = vpop.f32.mrf.mxu0
    %v941 = vadd.f32 0.0, %v940
    %v942 = vpop.f32.mrf.mxu0
    %v943 = vadd.f32 0.0, %v942
    %944 = vmatmul.bf16.gmra.mxu0 %v919
    %v945 = vpop.f32.mrf.mxu0
    %v946 = vadd.f32 0.0, %v945
    %v947 = vpop.f32.mrf.mxu0
    %v948 = vadd.f32 0.0, %v947
    %949 = vmatmul.bf16.gmra.mxu0 %v920
    %v950 = vpop.f32.mrf.mxu0
    %v951 = vadd.f32 0.0, %v950
    %v952 = vpop.f32.mrf.mxu0
    %v953 = vadd.f32 0.0, %v952
    %954 = vdwg.mxu0
    %v955 = vsub.f32 %v931, %v567
    %v956 = vsub.f32 %v933, %v568
    %v957 = vsub.f32 %v936, %v569
    %v958 = vsub.f32 %v938, %v570
    %v959 = vsub.f32 %v941, %v571
    %v960 = vsub.f32 %v943, %v572
    %v961 = vsub.f32 %v946, %v573
    %v962 = vsub.f32 %v948, %v574
    %v963 = vsub.f32 %v951, %v575
    %v964 = vsub.f32 %v953, %v576
    %v965 = vmul.f32 %v97, %v955
    %v966 = vmul.f32 %v98, %v956
    %v967 = vmul.f32 %v99, %v957
    %v968 = vmul.f32 %v100, %v958
    %v969 = vmul.f32 %v101, %v959
    %v970 = vmul.f32 %v102, %v960
    %v971 = vmul.f32 %v103, %v961
    %v972 = vmul.f32 %v104, %v962
    %v973 = vmul.f32 %v105, %v963
    %v974 = vmul.f32 %v106, %v964
    %v975 = vmul.f32 %v965, %v955
    %v976 = vmul.f32 %v966, %v956
    %v977 = vmul.f32 %v967, %v957
    %v978 = vmul.f32 %v968, %v958
    %v979 = vmul.f32 %v969, %v959
    %v980 = vmul.f32 %v970, %v960
    %v981 = vmul.f32 %v971, %v961
    %v982 = vmul.f32 %v972, %v962
    %v983 = vmul.f32 %v973, %v963
    %v984 = vmul.f32 %v974, %v964
    %v985 = vadd.f32 %v975, %v976
    %v986 = vadd.f32 %v985, %v977
    %v987 = vadd.f32 %v986, %v978
    %v988 = vadd.f32 %v987, %v979
    %v989 = vadd.f32 %v988, %v980
    %v990 = vadd.f32 %v989, %v981
    %v991 = vadd.f32 %v990, %v982
    %v992 = vadd.f32 %v991, %v983
    %v993 = vadd.f32 %v992, %v984
    %994 = vadd.xlane.f32.xlu0 %v993
    %v995 = vpop.xlane.xlu0 %994
    %v996 = vrot.slane %v995, 4
    %v997 = vadd.f32 %v995, %v996
    %v998 = vrot.slane %v997, 2
    %v999 = vadd.f32 %v997, %v998
    %v1000 = vrot.slane %v999, 1
    %v1001 = vadd.f32 %v999, %v1000
    %s1002 = vtos %v1001
    %s1003 = sadd.f32 %s556, %s1002
    %v1004 = vadd.f32 %v557, %v931
    %v1005 = vadd.f32 %v558, %v933
    %v1006 = vadd.f32 %v559, %v936
    %v1007 = vadd.f32 %v560, %v938
    %v1008 = vadd.f32 %v561, %v941
    %v1009 = vadd.f32 %v562, %v943
    %v1010 = vadd.f32 %v563, %v946
    %v1011 = vadd.f32 %v564, %v948
    %v1012 = vadd.f32 %v565, %v951
    %v1013 = vadd.f32 %v566, %v953
    %v1014 = vsub.f32 %v567, %v931
    %v1015 = vsub.f32 %v568, %v933
    %v1016 = vsub.f32 %v569, %v936
    %v1017 = vsub.f32 %v570, %v938
    %v1018 = vsub.f32 %v571, %v941
    %v1019 = vsub.f32 %v572, %v943
    %v1020 = vsub.f32 %v573, %v946
    %v1021 = vsub.f32 %v574, %v948
    %v1022 = vsub.f32 %v575, %v951
    %v1023 = vsub.f32 %v576, %v953
    %s1024 = scalar_lea.vmem [#allocation2], 128
    %v1025 = vld [vmem:[%s1024] sm:$0xf]
    %v1026 = vld [vmem:[%s1024 + $0x4] sm:$0xf]
    %v1027 = vld [vmem:[%s1024 + $0x8] sm:$0xf]
    %v1028 = vld [vmem:[%s1024 + $0xc] sm:$0xf]
    %v1029 = vld [vmem:[%s1024 + $0x10] sm:$0xf]
    %v1030 = vld [vmem:[%s1024 + $0x14] sm:$0xf]
    %v1031 = vld [vmem:[%s1024 + $0x18] sm:$0xf]
    %v1032 = vld [vmem:[%s1024 + $0x1c] sm:$0xf]
    %v1033 = vld [vmem:[%s1024 + $0x20] sm:$0xf]
    %v1034 = vld [vmem:[%s1024 + $0x24] sm:$0xf]
    %v1035 = vld [vmem:[%s1024 + $0x28] sm:$0xf]
    %v1036 = vld [vmem:[%s1024 + $0x2c] sm:$0xf]
    %v1037 = vld [vmem:[%s1024 + $0x30] sm:$0xf]
    %v1038 = vld [vmem:[%s1024 + $0x34] sm:$0xf]
    %v1039 = vld [vmem:[%s1024 + $0x38] sm:$0xf]
    %v1040 = vld [vmem:[%s1024 + $0x3c] sm:$0xf]
    %v1041 = vpack.c.bf16 %v1015, %v1014
    %v1042 = vpack.c.bf16 %v1017, %v1016
    %v1043 = vpack.c.bf16 %v1019, %v1018
    %v1044 = vpack.c.bf16 %v1021, %v1020
    %v1045 = vpack.c.bf16 %v1023, %v1022
    %v1062 = vunpack.c.l.b16 %v1025
    %v1063 = vunpack.c.l.b16 %v1026
    %v1064 = vunpack.c.l.b16 %v1027
    %v1065 = vunpack.c.l.b16 %v1028
    %v1066 = vunpack.c.l.b16 %v1029
    %v1067 = vunpack.c.l.b16 %v1030
    %v1068 = vunpack.c.l.b16 %v1031
    %v1069 = vunpack.c.l.b16 %v1032
    %v1070 = vunpack.c.l.b16 %v1033
    %v1071 = vunpack.c.l.b16 %v1034
    %v1072 = vunpack.c.l.b16 %v1035
    %v1073 = vunpack.c.l.b16 %v1036
    %v1074 = vunpack.c.l.b16 %v1037
    %v1075 = vunpack.c.l.b16 %v1038
    %v1076 = vunpack.c.l.b16 %v1039
    %v1077 = vunpack.c.l.b16 %v1040
    %v1078 = vpack.c.b16 %v1063, %v1062
    %v1079 = vpack.c.b16 %v1065, %v1064
    %v1080 = vpack.c.b16 %v1067, %v1066
    %v1081 = vpack.c.b16 %v1069, %v1068
    %v1082 = vpack.c.b16 %v1071, %v1070
    %v1083 = vpack.c.b16 %v1073, %v1072
    %v1084 = vpack.c.b16 %v1075, %v1074
    %v1085 = vpack.c.b16 %v1077, %v1076
    %1094 = vmatpush.bf16.msra.mxu0 %v1085
    %1095 = vmatpush.bf16.msra.mxu0 %v1084
    %1096 = vmatpush.bf16.msra.mxu0 %v1083
    %1097 = vmatpush.bf16.msra.mxu0 %v1082
    %1098 = vmatpush.bf16.msra.mxu0 %v1081
    %1099 = vmatpush.bf16.msra.mxu0 %v1080
    %1100 = vmatpush.bf16.msra.mxu0 %v1079
    %1101 = vmatpush.bf16.msra.mxu0 %v1078
    %1102 = vmatmul.bf16.gmra.mxu0 %v1041
    %v1103 = vpop.f32.mrf.mxu0
    %v1104 = vadd.f32 0.0, %v1103
    %v1105 = vpop.f32.mrf.mxu0
    %v1106 = vadd.f32 0.0, %v1105
    %1107 = vmatmul.bf16.gmra.mxu0 %v1042
    %v1108 = vpop.f32.mrf.mxu0
    %v1109 = vadd.f32 0.0, %v1108
    %v1110 = vpop.f32.mrf.mxu0
    %v1111 = vadd.f32 0.0, %v1110
    %1112 = vmatmul.bf16.gmra.mxu0 %v1043
    %v1113 = vpop.f32.mrf.mxu0
    %v1114 = vadd.f32 0.0, %v1113
    %v1115 = vpop.f32.mrf.mxu0
    %v1116 = vadd.f32 0.0, %v1115
    %1117 = vmatmul.bf16.gmra.mxu0 %v1044
    %v1118 = vpop.f32.mrf.mxu0
    %v1119 = vadd.f32 0.0, %v1118
    %v1120 = vpop.f32.mrf.mxu0
    %v1121 = vadd.f32 0.0, %v1120
    %1122 = vmatmul.bf16.gmra.mxu0 %v1045
    %v1123 = vpop.f32.mrf.mxu0
    %v1124 = vadd.f32 0.0, %v1123
    %v1125 = vpop.f32.mrf.mxu0
    %v1126 = vadd.f32 0.0, %v1125
    %1127 = vdwg.mxu0
    %s1128 = scalar_lea.vmem %s2, 2
    %v1129 = vld [vmem:[%s1128] sm:$0x1]
    %v1130 = vmul.f32 %v1104, 2.0
    %v1131 = vmul.f32 %v1106, 2.0
    %v1132 = vmul.f32 %v1109, 2.0
    %v1133 = vmul.f32 %v1111, 2.0
    %v1134 = vmul.f32 %v1114, 2.0
    %v1135 = vmul.f32 %v1116, 2.0
    %v1136 = vmul.f32 %v1119, 2.0
    %v1137 = vmul.f32 %v1121, 2.0
    %v1138 = vmul.f32 %v1124, 2.0
    %v1139 = vmul.f32 %v1126, 2.0
    %v1141 = vperm.slane %v1129, 0
    %v1143 = vsub.f32 %v1141, %v1130
    %v1144 = vsub.f32 %v1141, %v1131
    %v1145 = vsub.f32 %v1141, %v1132
    %v1146 = vsub.f32 %v1141, %v1133
    %v1147 = vsub.f32 %v1141, %v1134
    %v1148 = vsub.f32 %v1141, %v1135
    %v1149 = vsub.f32 %v1141, %v1136
    %v1150 = vsub.f32 %v1141, %v1137
    %v1151 = vsub.f32 %v1141, %v1138
    %v1152 = vsub.f32 %v1141, %v1139
    %1153 = vmin.xlane.f32.xlu0 %v1143
    %v1154 = vpop.xlane.xlu0 %1153
    %1155 = vmin.xlane.f32.xlu0 %v1144
    %v1156 = vpop.xlane.xlu0 %1155
    %1157 = vmin.xlane.f32.xlu0 %v1145
    %v1158 = vpop.xlane.xlu0 %1157
    %1159 = vmin.xlane.f32.xlu0 %v1146
    %v1160 = vpop.xlane.xlu0 %1159
    %1161 = vmin.xlane.f32.xlu0 %v1147
    %v1162 = vpop.xlane.xlu0 %1161
    %1163 = vmin.xlane.f32.xlu0 %v1148
    %v1164 = vpop.xlane.xlu0 %1163
    %1165 = vmin.xlane.f32.xlu0 %v1149
    %v1166 = vpop.xlane.xlu0 %1165
    %1167 = vmin.xlane.f32.xlu0 %v1150
    %v1168 = vpop.xlane.xlu0 %1167
    %1169 = vmin.xlane.f32.xlu0 %v1151
    %v1170 = vpop.xlane.xlu0 %1169
    %1171 = vmin.xlane.f32.xlu0 %v1152
    %v1172 = vpop.xlane.xlu0 %1171
    %vm1173 = vcmp.le.f32.partialorder %v1143, %v1154
    %vm1174 = vcmp.le.f32.partialorder %v1144, %v1156
    %vm1175 = vcmp.le.f32.partialorder %v1145, %v1158
    %vm1176 = vcmp.le.f32.partialorder %v1146, %v1160
    %vm1177 = vcmp.le.f32.partialorder %v1147, %v1162
    %vm1178 = vcmp.le.f32.partialorder %v1148, %v1164
    %vm1179 = vcmp.le.f32.partialorder %v1149, %v1166
    %vm1180 = vcmp.le.f32.partialorder %v1150, %v1168
    %vm1181 = vcmp.le.f32.partialorder %v1151, %v1170
    %vm1182 = vcmp.le.f32.partialorder %v1152, %v1172
    %v1183 = vsel %vm1173, %v53, 128
    %v1184 = vsel %vm1174, %v53, 128
    %v1185 = vsel %vm1175, %v53, 128
    %v1186 = vsel %vm1176, %v53, 128
    %v1187 = vsel %vm1177, %v53, 128
    %v1188 = vsel %vm1178, %v53, 128
    %v1189 = vsel %vm1179, %v53, 128
    %v1190 = vsel %vm1180, %v53, 128
    %v1191 = vsel %vm1181, %v53, 128
    %v1192 = vsel %vm1182, %v53, 128
    %v1193 = vand.u32 %v1183, 65535
    %v1194 = vshra.s32 %v1183, 16
    %v1195 = vcvt.s32.f32 %v1193
    %v1196 = vcvt.s32.f32 %v1194
    %1197 = vmin.xlane.f32.xlu0 %v1196
    %v1198 = vpop.xlane.xlu0 %1197
    %vm1199 = vcmp.eq.f32.partialorder %v1196, %v1198
    %v1200 = vsel %vm1199, %v1195, inf
    %1201 = vmin.xlane.f32.xlu0 %v1200
    %v1202 = vpop.xlane.xlu0 %1201
    %v1203 = vcvt.f32.s32 %v1202
    %v1204 = vcvt.f32.s32 %v1198
    %v1205 = vshll.u32 %v1204, 16
    %v1206 = vadd.s32 %v1205, %v1203
    %v1207 = vand.u32 %v1184, 65535
    %v1208 = vshra.s32 %v1184, 16
    %v1209 = vcvt.s32.f32 %v1207
    %v1210 = vcvt.s32.f32 %v1208
    %1211 = vmin.xlane.f32.xlu0 %v1210
    %v1212 = vpop.xlane.xlu0 %1211
    %vm1213 = vcmp.eq.f32.partialorder %v1210, %v1212
    %v1214 = vsel %vm1213, %v1209, inf
    %1215 = vmin.xlane.f32.xlu0 %v1214
    %v1216 = vpop.xlane.xlu0 %1215
    %v1217 = vcvt.f32.s32 %v1216
    %v1218 = vcvt.f32.s32 %v1212
    %v1219 = vshll.u32 %v1218, 16
    %v1220 = vadd.s32 %v1219, %v1217
    %v1221 = vand.u32 %v1185, 65535
    %v1222 = vshra.s32 %v1185, 16
    %v1223 = vcvt.s32.f32 %v1221
    %v1224 = vcvt.s32.f32 %v1222
    %1225 = vmin.xlane.f32.xlu0 %v1224
    %v1226 = vpop.xlane.xlu0 %1225
    %vm1227 = vcmp.eq.f32.partialorder %v1224, %v1226
    %v1228 = vsel %vm1227, %v1223, inf
    %1229 = vmin.xlane.f32.xlu0 %v1228
    %v1230 = vpop.xlane.xlu0 %1229
    %v1231 = vcvt.f32.s32 %v1230
    %v1232 = vcvt.f32.s32 %v1226
    %v1233 = vshll.u32 %v1232, 16
    %v1234 = vadd.s32 %v1233, %v1231
    %v1235 = vand.u32 %v1186, 65535
    %v1236 = vshra.s32 %v1186, 16
    %v1237 = vcvt.s32.f32 %v1235
    %v1238 = vcvt.s32.f32 %v1236
    %1239 = vmin.xlane.f32.xlu0 %v1238
    %v1240 = vpop.xlane.xlu0 %1239
    %vm1241 = vcmp.eq.f32.partialorder %v1238, %v1240
    %v1242 = vsel %vm1241, %v1237, inf
    %1243 = vmin.xlane.f32.xlu0 %v1242
    %v1244 = vpop.xlane.xlu0 %1243
    %v1245 = vcvt.f32.s32 %v1244
    %v1246 = vcvt.f32.s32 %v1240
    %v1247 = vshll.u32 %v1246, 16
    %v1248 = vadd.s32 %v1247, %v1245
    %v1249 = vand.u32 %v1187, 65535
    %v1250 = vshra.s32 %v1187, 16
    %v1251 = vcvt.s32.f32 %v1249
    %v1252 = vcvt.s32.f32 %v1250
    %1253 = vmin.xlane.f32.xlu0 %v1252
    %v1254 = vpop.xlane.xlu0 %1253
    %vm1255 = vcmp.eq.f32.partialorder %v1252, %v1254
    %v1256 = vsel %vm1255, %v1251, inf
    %1257 = vmin.xlane.f32.xlu0 %v1256
    %v1258 = vpop.xlane.xlu0 %1257
    %v1259 = vcvt.f32.s32 %v1258
    %v1260 = vcvt.f32.s32 %v1254
    %v1261 = vshll.u32 %v1260, 16
    %v1262 = vadd.s32 %v1261, %v1259
    %v1263 = vand.u32 %v1188, 65535
    %v1264 = vshra.s32 %v1188, 16
    %v1265 = vcvt.s32.f32 %v1263
    %v1266 = vcvt.s32.f32 %v1264
    %1267 = vmin.xlane.f32.xlu0 %v1266
    %v1268 = vpop.xlane.xlu0 %1267
    %vm1269 = vcmp.eq.f32.partialorder %v1266, %v1268
    %v1270 = vsel %vm1269, %v1265, inf
    %1271 = vmin.xlane.f32.xlu0 %v1270
    %v1272 = vpop.xlane.xlu0 %1271
    %v1273 = vcvt.f32.s32 %v1272
    %v1274 = vcvt.f32.s32 %v1268
    %v1275 = vshll.u32 %v1274, 16
    %v1276 = vadd.s32 %v1275, %v1273
    %v1277 = vand.u32 %v1189, 65535
    %v1278 = vshra.s32 %v1189, 16
    %v1279 = vcvt.s32.f32 %v1277
    %v1280 = vcvt.s32.f32 %v1278
    %1281 = vmin.xlane.f32.xlu0 %v1280
    %v1282 = vpop.xlane.xlu0 %1281
    %vm1283 = vcmp.eq.f32.partialorder %v1280, %v1282
    %v1284 = vsel %vm1283, %v1279, inf
    %1285 = vmin.xlane.f32.xlu0 %v1284
    %v1286 = vpop.xlane.xlu0 %1285
    %v1287 = vcvt.f32.s32 %v1286
    %v1288 = vcvt.f32.s32 %v1282
    %v1289 = vshll.u32 %v1288, 16
    %v1290 = vadd.s32 %v1289, %v1287
    %v1291 = vand.u32 %v1190, 65535
    %v1292 = vshra.s32 %v1190, 16
    %v1293 = vcvt.s32.f32 %v1291
    %v1294 = vcvt.s32.f32 %v1292
    %1295 = vmin.xlane.f32.xlu0 %v1294
    %v1296 = vpop.xlane.xlu0 %1295
    %vm1297 = vcmp.eq.f32.partialorder %v1294, %v1296
    %v1298 = vsel %vm1297, %v1293, inf
    %1299 = vmin.xlane.f32.xlu0 %v1298
    %v1300 = vpop.xlane.xlu0 %1299
    %v1301 = vcvt.f32.s32 %v1300
    %v1302 = vcvt.f32.s32 %v1296
    %v1303 = vshll.u32 %v1302, 16
    %v1304 = vadd.s32 %v1303, %v1301
    %v1305 = vand.u32 %v1191, 65535
    %v1306 = vshra.s32 %v1191, 16
    %v1307 = vcvt.s32.f32 %v1305
    %v1308 = vcvt.s32.f32 %v1306
    %1309 = vmin.xlane.f32.xlu0 %v1308
    %v1310 = vpop.xlane.xlu0 %1309
    %vm1311 = vcmp.eq.f32.partialorder %v1308, %v1310
    %v1312 = vsel %vm1311, %v1307, inf
    %1313 = vmin.xlane.f32.xlu0 %v1312
    %v1314 = vpop.xlane.xlu0 %1313
    %v1315 = vcvt.f32.s32 %v1314
    %v1316 = vcvt.f32.s32 %v1310
    %v1317 = vshll.u32 %v1316, 16
    %v1318 = vadd.s32 %v1317, %v1315
    %v1319 = vand.u32 %v1192, 65535
    %v1320 = vshra.s32 %v1192, 16
    %v1321 = vcvt.s32.f32 %v1319
    %v1322 = vcvt.s32.f32 %v1320
    %1323 = vmin.xlane.f32.xlu0 %v1322
    %v1324 = vpop.xlane.xlu0 %1323
    %vm1325 = vcmp.eq.f32.partialorder %v1322, %v1324
    %v1326 = vsel %vm1325, %v1321, inf
    %1327 = vmin.xlane.f32.xlu0 %v1326
    %v1328 = vpop.xlane.xlu0 %1327
    %v1329 = vcvt.f32.s32 %v1328
    %v1330 = vcvt.f32.s32 %v1324
    %v1331 = vshll.u32 %v1330, 16
    %v1332 = vadd.s32 %v1331, %v1329
    %vm1333 = vcmp.eq.s32.totalorder %v53, %v1206
    %vm1334 = vcmp.eq.s32.totalorder %v53, %v1220
    %vm1335 = vcmp.eq.s32.totalorder %v53, %v1234
    %vm1336 = vcmp.eq.s32.totalorder %v53, %v1248
    %vm1337 = vcmp.eq.s32.totalorder %v53, %v1262
    %vm1338 = vcmp.eq.s32.totalorder %v53, %v1276
    %vm1339 = vcmp.eq.s32.totalorder %v53, %v1290
    %vm1340 = vcmp.eq.s32.totalorder %v53, %v1304
    %vm1341 = vcmp.eq.s32.totalorder %v53, %v1318
    %vm1342 = vcmp.eq.s32.totalorder %v53, %v1332
    %v1343 = vsel %vm1333, 1, 0
    %v1344 = vsel %vm1334, 1, 0
    %v1345 = vsel %vm1335, 1, 0
    %v1346 = vsel %vm1336, 1, 0
    %v1347 = vsel %vm1337, 1, 0
    %v1348 = vsel %vm1338, 1, 0
    %v1349 = vsel %vm1339, 1, 0
    %v1350 = vsel %vm1340, 1, 0
    %v1351 = vsel %vm1341, 1, 0
    %v1352 = vsel %vm1342, 1, 0
    %v1353 = vcvt.s32.f32 %v1343
    %v1354 = vcvt.s32.f32 %v1344
    %v1355 = vcvt.s32.f32 %v1345
    %v1356 = vcvt.s32.f32 %v1346
    %v1357 = vcvt.s32.f32 %v1347
    %v1358 = vcvt.s32.f32 %v1348
    %v1359 = vcvt.s32.f32 %v1349
    %v1360 = vcvt.s32.f32 %v1350
    %v1361 = vcvt.s32.f32 %v1351
    %v1362 = vcvt.s32.f32 %v1352
    %v1363 = vpack.c.bf16 %v1354, %v1353
    %v1364 = vpack.c.bf16 %v1356, %v1355
    %v1365 = vpack.c.bf16 %v1358, %v1357
    %v1366 = vpack.c.bf16 %v1360, %v1359
    %v1367 = vpack.c.bf16 %v1362, %v1361
    %1368 = vmatpush.bf16.xpose.msra.mxu0 %v1085
    %1369 = vmatpush.bf16.xpose.msra.mxu0 %v1084
    %1370 = vmatpush.bf16.xpose.msra.mxu0 %v1083
    %1371 = vmatpush.bf16.xpose.msra.mxu0 %v1082
    %1372 = vmatpush.bf16.xpose.msra.mxu0 %v1081
    %1373 = vmatpush.bf16.xpose.msra.mxu0 %v1080
    %1374 = vmatpush.bf16.xpose.msra.mxu0 %v1079
    %1375 = vmatpush.bf16.xpose.msra.mxu0 %v1078
    %1376 = vmatmul.bf16.gmra.mxu0 %v1363
    %v1377 = vpop.f32.mrf.mxu0
    %v1378 = vadd.f32 0.0, %v1377
    %v1379 = vpop.f32.mrf.mxu0
    %v1380 = vadd.f32 0.0, %v1379
    %1381 = vmatmul.bf16.gmra.mxu0 %v1364
    %v1382 = vpop.f32.mrf.mxu0
    %v1383 = vadd.f32 0.0, %v1382
    %v1384 = vpop.f32.mrf.mxu0
    %v1385 = vadd.f32 0.0, %v1384
    %1386 = vmatmul.bf16.gmra.mxu0 %v1365
    %v1387 = vpop.f32.mrf.mxu0
    %v1388 = vadd.f32 0.0, %v1387
    %v1389 = vpop.f32.mrf.mxu0
    %v1390 = vadd.f32 0.0, %v1389
    %1391 = vmatmul.bf16.gmra.mxu0 %v1366
    %v1392 = vpop.f32.mrf.mxu0
    %v1393 = vadd.f32 0.0, %v1392
    %v1394 = vpop.f32.mrf.mxu0
    %v1395 = vadd.f32 0.0, %v1394
    %1396 = vmatmul.bf16.gmra.mxu0 %v1367
    %v1397 = vpop.f32.mrf.mxu0
    %v1398 = vadd.f32 0.0, %v1397
    %v1399 = vpop.f32.mrf.mxu0
    %v1400 = vadd.f32 0.0, %v1399
    %1401 = vdwg.mxu0
    %v1402 = vsub.f32 %v1378, %v1014
    %v1403 = vsub.f32 %v1380, %v1015
    %v1404 = vsub.f32 %v1383, %v1016
    %v1405 = vsub.f32 %v1385, %v1017
    %v1406 = vsub.f32 %v1388, %v1018
    %v1407 = vsub.f32 %v1390, %v1019
    %v1408 = vsub.f32 %v1393, %v1020
    %v1409 = vsub.f32 %v1395, %v1021
    %v1410 = vsub.f32 %v1398, %v1022
    %v1411 = vsub.f32 %v1400, %v1023
    %v1412 = vmul.f32 %v97, %v1402
    %v1413 = vmul.f32 %v98, %v1403
    %v1414 = vmul.f32 %v99, %v1404
    %v1415 = vmul.f32 %v100, %v1405
    %v1416 = vmul.f32 %v101, %v1406
    %v1417 = vmul.f32 %v102, %v1407
    %v1418 = vmul.f32 %v103, %v1408
    %v1419 = vmul.f32 %v104, %v1409
    %v1420 = vmul.f32 %v105, %v1410
    %v1421 = vmul.f32 %v106, %v1411
    %v1422 = vmul.f32 %v1412, %v1402
    %v1423 = vmul.f32 %v1413, %v1403
    %v1424 = vmul.f32 %v1414, %v1404
    %v1425 = vmul.f32 %v1415, %v1405
    %v1426 = vmul.f32 %v1416, %v1406
    %v1427 = vmul.f32 %v1417, %v1407
    %v1428 = vmul.f32 %v1418, %v1408
    %v1429 = vmul.f32 %v1419, %v1409
    %v1430 = vmul.f32 %v1420, %v1410
    %v1431 = vmul.f32 %v1421, %v1411
    %v1432 = vadd.f32 %v1422, %v1423
    %v1433 = vadd.f32 %v1432, %v1424
    %v1434 = vadd.f32 %v1433, %v1425
    %v1435 = vadd.f32 %v1434, %v1426
    %v1436 = vadd.f32 %v1435, %v1427
    %v1437 = vadd.f32 %v1436, %v1428
    %v1438 = vadd.f32 %v1437, %v1429
    %v1439 = vadd.f32 %v1438, %v1430
    %v1440 = vadd.f32 %v1439, %v1431
    %1441 = vadd.xlane.f32.xlu0 %v1440
    %v1442 = vpop.xlane.xlu0 %1441
    %v1443 = vrot.slane %v1442, 4
    %v1444 = vadd.f32 %v1442, %v1443
    %v1445 = vrot.slane %v1444, 2
    %v1446 = vadd.f32 %v1444, %v1445
    %v1447 = vrot.slane %v1446, 1
    %v1448 = vadd.f32 %v1446, %v1447
    %s1449 = vtos %v1448
    %s1450 = sadd.f32 %s1003, %s1449
    %v1451 = vadd.f32 %v1004, %v1378
    %v1452 = vadd.f32 %v1005, %v1380
    %v1453 = vadd.f32 %v1006, %v1383
    %v1454 = vadd.f32 %v1007, %v1385
    %v1455 = vadd.f32 %v1008, %v1388
    %v1456 = vadd.f32 %v1009, %v1390
    %v1457 = vadd.f32 %v1010, %v1393
    %v1458 = vadd.f32 %v1011, %v1395
    %v1459 = vadd.f32 %v1012, %v1398
    %v1460 = vadd.f32 %v1013, %v1400
    %v1461 = vsub.f32 %v1014, %v1378
    %v1462 = vsub.f32 %v1015, %v1380
    %v1463 = vsub.f32 %v1016, %v1383
    %v1464 = vsub.f32 %v1017, %v1385
    %v1465 = vsub.f32 %v1018, %v1388
    %v1466 = vsub.f32 %v1019, %v1390
    %v1467 = vsub.f32 %v1020, %v1393
    %v1468 = vsub.f32 %v1021, %v1395
    %v1469 = vsub.f32 %v1022, %v1398
    %v1470 = vsub.f32 %v1023, %v1400
    %s1471 = scalar_lea.vmem [#allocation2], 192
    %v1472 = vld [vmem:[%s1471] sm:$0xf]
    %v1473 = vld [vmem:[%s1471 + $0x4] sm:$0xf]
    %v1474 = vld [vmem:[%s1471 + $0x8] sm:$0xf]
    %v1475 = vld [vmem:[%s1471 + $0xc] sm:$0xf]
    %v1476 = vld [vmem:[%s1471 + $0x10] sm:$0xf]
    %v1477 = vld [vmem:[%s1471 + $0x14] sm:$0xf]
    %v1478 = vld [vmem:[%s1471 + $0x18] sm:$0xf]
    %v1479 = vld [vmem:[%s1471 + $0x1c] sm:$0xf]
    %v1480 = vld [vmem:[%s1471 + $0x20] sm:$0xf]
    %v1481 = vld [vmem:[%s1471 + $0x24] sm:$0xf]
    %v1482 = vld [vmem:[%s1471 + $0x28] sm:$0xf]
    %v1483 = vld [vmem:[%s1471 + $0x2c] sm:$0xf]
    %v1484 = vld [vmem:[%s1471 + $0x30] sm:$0xf]
    %v1485 = vld [vmem:[%s1471 + $0x34] sm:$0xf]
    %v1486 = vld [vmem:[%s1471 + $0x38] sm:$0xf]
    %v1487 = vld [vmem:[%s1471 + $0x3c] sm:$0xf]
    %v1488 = vpack.c.bf16 %v1462, %v1461
    %v1489 = vpack.c.bf16 %v1464, %v1463
    %v1490 = vpack.c.bf16 %v1466, %v1465
    %v1491 = vpack.c.bf16 %v1468, %v1467
    %v1492 = vpack.c.bf16 %v1470, %v1469
    %v1509 = vunpack.c.l.b16 %v1472
    %v1510 = vunpack.c.l.b16 %v1473
    %v1511 = vunpack.c.l.b16 %v1474
    %v1512 = vunpack.c.l.b16 %v1475
    %v1513 = vunpack.c.l.b16 %v1476
    %v1514 = vunpack.c.l.b16 %v1477
    %v1515 = vunpack.c.l.b16 %v1478
    %v1516 = vunpack.c.l.b16 %v1479
    %v1517 = vunpack.c.l.b16 %v1480
    %v1518 = vunpack.c.l.b16 %v1481
    %v1519 = vunpack.c.l.b16 %v1482
    %v1520 = vunpack.c.l.b16 %v1483
    %v1521 = vunpack.c.l.b16 %v1484
    %v1522 = vunpack.c.l.b16 %v1485
    %v1523 = vunpack.c.l.b16 %v1486
    %v1524 = vunpack.c.l.b16 %v1487
    %v1525 = vpack.c.b16 %v1510, %v1509
    %v1526 = vpack.c.b16 %v1512, %v1511
    %v1527 = vpack.c.b16 %v1514, %v1513
    %v1528 = vpack.c.b16 %v1516, %v1515
    %v1529 = vpack.c.b16 %v1518, %v1517
    %v1530 = vpack.c.b16 %v1520, %v1519
    %v1531 = vpack.c.b16 %v1522, %v1521
    %v1532 = vpack.c.b16 %v1524, %v1523
    %1541 = vmatpush.bf16.msra.mxu0 %v1532
    %1542 = vmatpush.bf16.msra.mxu0 %v1531
    %1543 = vmatpush.bf16.msra.mxu0 %v1530
    %1544 = vmatpush.bf16.msra.mxu0 %v1529
    %1545 = vmatpush.bf16.msra.mxu0 %v1528
    %1546 = vmatpush.bf16.msra.mxu0 %v1527
    %1547 = vmatpush.bf16.msra.mxu0 %v1526
    %1548 = vmatpush.bf16.msra.mxu0 %v1525
    %1549 = vmatmul.bf16.gmra.mxu0 %v1488
    %v1550 = vpop.f32.mrf.mxu0
    %v1551 = vadd.f32 0.0, %v1550
    %v1552 = vpop.f32.mrf.mxu0
    %v1553 = vadd.f32 0.0, %v1552
    %1554 = vmatmul.bf16.gmra.mxu0 %v1489
    %v1555 = vpop.f32.mrf.mxu0
    %v1556 = vadd.f32 0.0, %v1555
    %v1557 = vpop.f32.mrf.mxu0
    %v1558 = vadd.f32 0.0, %v1557
    %1559 = vmatmul.bf16.gmra.mxu0 %v1490
    %v1560 = vpop.f32.mrf.mxu0
    %v1561 = vadd.f32 0.0, %v1560
    %v1562 = vpop.f32.mrf.mxu0
    %v1563 = vadd.f32 0.0, %v1562
    %1564 = vmatmul.bf16.gmra.mxu0 %v1491
    %v1565 = vpop.f32.mrf.mxu0
    %v1566 = vadd.f32 0.0, %v1565
    %v1567 = vpop.f32.mrf.mxu0
    %v1568 = vadd.f32 0.0, %v1567
    %1569 = vmatmul.bf16.gmra.mxu0 %v1492
    %v1570 = vpop.f32.mrf.mxu0
    %v1571 = vadd.f32 0.0, %v1570
    %v1572 = vpop.f32.mrf.mxu0
    %v1573 = vadd.f32 0.0, %v1572
    %1574 = vdwg.mxu0
    %s1575 = scalar_lea.vmem %s2, 3
    %v1576 = vld [vmem:[%s1575] sm:$0x1]
    %v1577 = vmul.f32 %v1551, 2.0
    %v1578 = vmul.f32 %v1553, 2.0
    %v1579 = vmul.f32 %v1556, 2.0
    %v1580 = vmul.f32 %v1558, 2.0
    %v1581 = vmul.f32 %v1561, 2.0
    %v1582 = vmul.f32 %v1563, 2.0
    %v1583 = vmul.f32 %v1566, 2.0
    %v1584 = vmul.f32 %v1568, 2.0
    %v1585 = vmul.f32 %v1571, 2.0
    %v1586 = vmul.f32 %v1573, 2.0
    %v1588 = vperm.slane %v1576, 0
    %v1590 = vsub.f32 %v1588, %v1577
    %v1591 = vsub.f32 %v1588, %v1578
    %v1592 = vsub.f32 %v1588, %v1579
    %v1593 = vsub.f32 %v1588, %v1580
    %v1594 = vsub.f32 %v1588, %v1581
    %v1595 = vsub.f32 %v1588, %v1582
    %v1596 = vsub.f32 %v1588, %v1583
    %v1597 = vsub.f32 %v1588, %v1584
    %v1598 = vsub.f32 %v1588, %v1585
    %v1599 = vsub.f32 %v1588, %v1586
    %1600 = vmin.xlane.f32.xlu0 %v1590
    %v1601 = vpop.xlane.xlu0 %1600
    %1602 = vmin.xlane.f32.xlu0 %v1591
    %v1603 = vpop.xlane.xlu0 %1602
    %1604 = vmin.xlane.f32.xlu0 %v1592
    %v1605 = vpop.xlane.xlu0 %1604
    %1606 = vmin.xlane.f32.xlu0 %v1593
    %v1607 = vpop.xlane.xlu0 %1606
    %1608 = vmin.xlane.f32.xlu0 %v1594
    %v1609 = vpop.xlane.xlu0 %1608
    %1610 = vmin.xlane.f32.xlu0 %v1595
    %v1611 = vpop.xlane.xlu0 %1610
    %1612 = vmin.xlane.f32.xlu0 %v1596
    %v1613 = vpop.xlane.xlu0 %1612
    %1614 = vmin.xlane.f32.xlu0 %v1597
    %v1615 = vpop.xlane.xlu0 %1614
    %1616 = vmin.xlane.f32.xlu0 %v1598
    %v1617 = vpop.xlane.xlu0 %1616
    %1618 = vmin.xlane.f32.xlu0 %v1599
    %v1619 = vpop.xlane.xlu0 %1618
    %vm1620 = vcmp.le.f32.partialorder %v1590, %v1601
    %vm1621 = vcmp.le.f32.partialorder %v1591, %v1603
    %vm1622 = vcmp.le.f32.partialorder %v1592, %v1605
    %vm1623 = vcmp.le.f32.partialorder %v1593, %v1607
    %vm1624 = vcmp.le.f32.partialorder %v1594, %v1609
    %vm1625 = vcmp.le.f32.partialorder %v1595, %v1611
    %vm1626 = vcmp.le.f32.partialorder %v1596, %v1613
    %vm1627 = vcmp.le.f32.partialorder %v1597, %v1615
    %vm1628 = vcmp.le.f32.partialorder %v1598, %v1617
    %vm1629 = vcmp.le.f32.partialorder %v1599, %v1619
    %v1630 = vsel %vm1620, %v53, 128
    %v1631 = vsel %vm1621, %v53, 128
    %v1632 = vsel %vm1622, %v53, 128
    %v1633 = vsel %vm1623, %v53, 128
    %v1634 = vsel %vm1624, %v53, 128
    %v1635 = vsel %vm1625, %v53, 128
    %v1636 = vsel %vm1626, %v53, 128
    %v1637 = vsel %vm1627, %v53, 128
    %v1638 = vsel %vm1628, %v53, 128
    %v1639 = vsel %vm1629, %v53, 128
    %v1640 = vand.u32 %v1630, 65535
    %v1641 = vshra.s32 %v1630, 16
    %v1642 = vcvt.s32.f32 %v1640
    %v1643 = vcvt.s32.f32 %v1641
    %1644 = vmin.xlane.f32.xlu0 %v1643
    %v1645 = vpop.xlane.xlu0 %1644
    %vm1646 = vcmp.eq.f32.partialorder %v1643, %v1645
    %v1647 = vsel %vm1646, %v1642, inf
    %1648 = vmin.xlane.f32.xlu0 %v1647
    %v1649 = vpop.xlane.xlu0 %1648
    %v1650 = vcvt.f32.s32 %v1649
    %v1651 = vcvt.f32.s32 %v1645
    %v1652 = vshll.u32 %v1651, 16
    %v1653 = vadd.s32 %v1652, %v1650
    %v1654 = vand.u32 %v1631, 65535
    %v1655 = vshra.s32 %v1631, 16
    %v1656 = vcvt.s32.f32 %v1654
    %v1657 = vcvt.s32.f32 %v1655
    %1658 = vmin.xlane.f32.xlu0 %v1657
    %v1659 = vpop.xlane.xlu0 %1658
    %vm1660 = vcmp.eq.f32.partialorder %v1657, %v1659
    %v1661 = vsel %vm1660, %v1656, inf
    %1662 = vmin.xlane.f32.xlu0 %v1661
    %v1663 = vpop.xlane.xlu0 %1662
    %v1664 = vcvt.f32.s32 %v1663
    %v1665 = vcvt.f32.s32 %v1659
    %v1666 = vshll.u32 %v1665, 16
    %v1667 = vadd.s32 %v1666, %v1664
    %v1668 = vand.u32 %v1632, 65535
    %v1669 = vshra.s32 %v1632, 16
    %v1670 = vcvt.s32.f32 %v1668
    %v1671 = vcvt.s32.f32 %v1669
    %1672 = vmin.xlane.f32.xlu0 %v1671
    %v1673 = vpop.xlane.xlu0 %1672
    %vm1674 = vcmp.eq.f32.partialorder %v1671, %v1673
    %v1675 = vsel %vm1674, %v1670, inf
    %1676 = vmin.xlane.f32.xlu0 %v1675
    %v1677 = vpop.xlane.xlu0 %1676
    %v1678 = vcvt.f32.s32 %v1677
    %v1679 = vcvt.f32.s32 %v1673
    %v1680 = vshll.u32 %v1679, 16
    %v1681 = vadd.s32 %v1680, %v1678
    %v1682 = vand.u32 %v1633, 65535
    %v1683 = vshra.s32 %v1633, 16
    %v1684 = vcvt.s32.f32 %v1682
    %v1685 = vcvt.s32.f32 %v1683
    %1686 = vmin.xlane.f32.xlu0 %v1685
    %v1687 = vpop.xlane.xlu0 %1686
    %vm1688 = vcmp.eq.f32.partialorder %v1685, %v1687
    %v1689 = vsel %vm1688, %v1684, inf
    %1690 = vmin.xlane.f32.xlu0 %v1689
    %v1691 = vpop.xlane.xlu0 %1690
    %v1692 = vcvt.f32.s32 %v1691
    %v1693 = vcvt.f32.s32 %v1687
    %v1694 = vshll.u32 %v1693, 16
    %v1695 = vadd.s32 %v1694, %v1692
    %v1696 = vand.u32 %v1634, 65535
    %v1697 = vshra.s32 %v1634, 16
    %v1698 = vcvt.s32.f32 %v1696
    %v1699 = vcvt.s32.f32 %v1697
    %1700 = vmin.xlane.f32.xlu0 %v1699
    %v1701 = vpop.xlane.xlu0 %1700
    %vm1702 = vcmp.eq.f32.partialorder %v1699, %v1701
    %v1703 = vsel %vm1702, %v1698, inf
    %1704 = vmin.xlane.f32.xlu0 %v1703
    %v1705 = vpop.xlane.xlu0 %1704
    %v1706 = vcvt.f32.s32 %v1705
    %v1707 = vcvt.f32.s32 %v1701
    %v1708 = vshll.u32 %v1707, 16
    %v1709 = vadd.s32 %v1708, %v1706
    %v1710 = vand.u32 %v1635, 65535
    %v1711 = vshra.s32 %v1635, 16
    %v1712 = vcvt.s32.f32 %v1710
    %v1713 = vcvt.s32.f32 %v1711
    %1714 = vmin.xlane.f32.xlu0 %v1713
    %v1715 = vpop.xlane.xlu0 %1714
    %vm1716 = vcmp.eq.f32.partialorder %v1713, %v1715
    %v1717 = vsel %vm1716, %v1712, inf
    %1718 = vmin.xlane.f32.xlu0 %v1717
    %v1719 = vpop.xlane.xlu0 %1718
    %v1720 = vcvt.f32.s32 %v1719
    %v1721 = vcvt.f32.s32 %v1715
    %v1722 = vshll.u32 %v1721, 16
    %v1723 = vadd.s32 %v1722, %v1720
    %v1724 = vand.u32 %v1636, 65535
    %v1725 = vshra.s32 %v1636, 16
    %v1726 = vcvt.s32.f32 %v1724
    %v1727 = vcvt.s32.f32 %v1725
    %1728 = vmin.xlane.f32.xlu0 %v1727
    %v1729 = vpop.xlane.xlu0 %1728
    %vm1730 = vcmp.eq.f32.partialorder %v1727, %v1729
    %v1731 = vsel %vm1730, %v1726, inf
    %1732 = vmin.xlane.f32.xlu0 %v1731
    %v1733 = vpop.xlane.xlu0 %1732
    %v1734 = vcvt.f32.s32 %v1733
    %v1735 = vcvt.f32.s32 %v1729
    %v1736 = vshll.u32 %v1735, 16
    %v1737 = vadd.s32 %v1736, %v1734
    %v1738 = vand.u32 %v1637, 65535
    %v1739 = vshra.s32 %v1637, 16
    %v1740 = vcvt.s32.f32 %v1738
    %v1741 = vcvt.s32.f32 %v1739
    %1742 = vmin.xlane.f32.xlu0 %v1741
    %v1743 = vpop.xlane.xlu0 %1742
    %vm1744 = vcmp.eq.f32.partialorder %v1741, %v1743
    %v1745 = vsel %vm1744, %v1740, inf
    %1746 = vmin.xlane.f32.xlu0 %v1745
    %v1747 = vpop.xlane.xlu0 %1746
    %v1748 = vcvt.f32.s32 %v1747
    %v1749 = vcvt.f32.s32 %v1743
    %v1750 = vshll.u32 %v1749, 16
    %v1751 = vadd.s32 %v1750, %v1748
    %v1752 = vand.u32 %v1638, 65535
    %v1753 = vshra.s32 %v1638, 16
    %v1754 = vcvt.s32.f32 %v1752
    %v1755 = vcvt.s32.f32 %v1753
    %1756 = vmin.xlane.f32.xlu0 %v1755
    %v1757 = vpop.xlane.xlu0 %1756
    %vm1758 = vcmp.eq.f32.partialorder %v1755, %v1757
    %v1759 = vsel %vm1758, %v1754, inf
    %1760 = vmin.xlane.f32.xlu0 %v1759
    %v1761 = vpop.xlane.xlu0 %1760
    %v1762 = vcvt.f32.s32 %v1761
    %v1763 = vcvt.f32.s32 %v1757
    %v1764 = vshll.u32 %v1763, 16
    %v1765 = vadd.s32 %v1764, %v1762
    %v1766 = vand.u32 %v1639, 65535
    %v1767 = vshra.s32 %v1639, 16
    %v1768 = vcvt.s32.f32 %v1766
    %v1769 = vcvt.s32.f32 %v1767
    %1770 = vmin.xlane.f32.xlu0 %v1769
    %v1771 = vpop.xlane.xlu0 %1770
    %vm1772 = vcmp.eq.f32.partialorder %v1769, %v1771
    %v1773 = vsel %vm1772, %v1768, inf
    %1774 = vmin.xlane.f32.xlu0 %v1773
    %v1775 = vpop.xlane.xlu0 %1774
    %v1776 = vcvt.f32.s32 %v1775
    %v1777 = vcvt.f32.s32 %v1771
    %v1778 = vshll.u32 %v1777, 16
    %v1779 = vadd.s32 %v1778, %v1776
    %vm1780 = vcmp.eq.s32.totalorder %v53, %v1653
    %vm1781 = vcmp.eq.s32.totalorder %v53, %v1667
    %vm1782 = vcmp.eq.s32.totalorder %v53, %v1681
    %vm1783 = vcmp.eq.s32.totalorder %v53, %v1695
    %vm1784 = vcmp.eq.s32.totalorder %v53, %v1709
    %vm1785 = vcmp.eq.s32.totalorder %v53, %v1723
    %vm1786 = vcmp.eq.s32.totalorder %v53, %v1737
    %vm1787 = vcmp.eq.s32.totalorder %v53, %v1751
    %vm1788 = vcmp.eq.s32.totalorder %v53, %v1765
    %vm1789 = vcmp.eq.s32.totalorder %v53, %v1779
    %v1790 = vsel %vm1780, 1, 0
    %v1791 = vsel %vm1781, 1, 0
    %v1792 = vsel %vm1782, 1, 0
    %v1793 = vsel %vm1783, 1, 0
    %v1794 = vsel %vm1784, 1, 0
    %v1795 = vsel %vm1785, 1, 0
    %v1796 = vsel %vm1786, 1, 0
    %v1797 = vsel %vm1787, 1, 0
    %v1798 = vsel %vm1788, 1, 0
    %v1799 = vsel %vm1789, 1, 0
    %v1800 = vcvt.s32.f32 %v1790
    %v1801 = vcvt.s32.f32 %v1791
    %v1802 = vcvt.s32.f32 %v1792
    %v1803 = vcvt.s32.f32 %v1793
    %v1804 = vcvt.s32.f32 %v1794
    %v1805 = vcvt.s32.f32 %v1795
    %v1806 = vcvt.s32.f32 %v1796
    %v1807 = vcvt.s32.f32 %v1797
    %v1808 = vcvt.s32.f32 %v1798
    %v1809 = vcvt.s32.f32 %v1799
    %v1810 = vpack.c.bf16 %v1801, %v1800
    %v1811 = vpack.c.bf16 %v1803, %v1802
    %v1812 = vpack.c.bf16 %v1805, %v1804
    %v1813 = vpack.c.bf16 %v1807, %v1806
    %v1814 = vpack.c.bf16 %v1809, %v1808
    %1815 = vmatpush.bf16.xpose.msra.mxu0 %v1532
    %1816 = vmatpush.bf16.xpose.msra.mxu0 %v1531
    %1817 = vmatpush.bf16.xpose.msra.mxu0 %v1530
    %1818 = vmatpush.bf16.xpose.msra.mxu0 %v1529
    %1819 = vmatpush.bf16.xpose.msra.mxu0 %v1528
    %1820 = vmatpush.bf16.xpose.msra.mxu0 %v1527
    %1821 = vmatpush.bf16.xpose.msra.mxu0 %v1526
    %1822 = vmatpush.bf16.xpose.msra.mxu0 %v1525
    %1823 = vmatmul.bf16.gmra.mxu0 %v1810
    %v1824 = vpop.f32.mrf.mxu0
    %v1825 = vadd.f32 0.0, %v1824
    %v1826 = vpop.f32.mrf.mxu0
    %v1827 = vadd.f32 0.0, %v1826
    %1828 = vmatmul.bf16.gmra.mxu0 %v1811
    %v1829 = vpop.f32.mrf.mxu0
    %v1830 = vadd.f32 0.0, %v1829
    %v1831 = vpop.f32.mrf.mxu0
    %v1832 = vadd.f32 0.0, %v1831
    %1833 = vmatmul.bf16.gmra.mxu0 %v1812
    %v1834 = vpop.f32.mrf.mxu0
    %v1835 = vadd.f32 0.0, %v1834
    %v1836 = vpop.f32.mrf.mxu0
    %v1837 = vadd.f32 0.0, %v1836
    %1838 = vmatmul.bf16.gmra.mxu0 %v1813
    %v1839 = vpop.f32.mrf.mxu0
    %v1840 = vadd.f32 0.0, %v1839
    %v1841 = vpop.f32.mrf.mxu0
    %v1842 = vadd.f32 0.0, %v1841
    %1843 = vmatmul.bf16.gmra.mxu0 %v1814
    %v1844 = vpop.f32.mrf.mxu0
    %v1845 = vadd.f32 0.0, %v1844
    %v1846 = vpop.f32.mrf.mxu0
    %v1847 = vadd.f32 0.0, %v1846
    %1848 = vdwg.mxu0
    %v1849 = vsub.f32 %v1825, %v1461
    %v1850 = vsub.f32 %v1827, %v1462
    %v1851 = vsub.f32 %v1830, %v1463
    %v1852 = vsub.f32 %v1832, %v1464
    %v1853 = vsub.f32 %v1835, %v1465
    %v1854 = vsub.f32 %v1837, %v1466
    %v1855 = vsub.f32 %v1840, %v1467
    %v1856 = vsub.f32 %v1842, %v1468
    %v1857 = vsub.f32 %v1845, %v1469
    %v1858 = vsub.f32 %v1847, %v1470
    %v1859 = vmul.f32 %v97, %v1849
    %v1860 = vmul.f32 %v98, %v1850
    %v1861 = vmul.f32 %v99, %v1851
    %v1862 = vmul.f32 %v100, %v1852
    %v1863 = vmul.f32 %v101, %v1853
    %v1864 = vmul.f32 %v102, %v1854
    %v1865 = vmul.f32 %v103, %v1855
    %v1866 = vmul.f32 %v104, %v1856
    %v1867 = vmul.f32 %v105, %v1857
    %v1868 = vmul.f32 %v106, %v1858
    %v1869 = vmul.f32 %v1859, %v1849
    %v1870 = vmul.f32 %v1860, %v1850
    %v1871 = vmul.f32 %v1861, %v1851
    %v1872 = vmul.f32 %v1862, %v1852
    %v1873 = vmul.f32 %v1863, %v1853
    %v1874 = vmul.f32 %v1864, %v1854
    %v1875 = vmul.f32 %v1865, %v1855
    %v1876 = vmul.f32 %v1866, %v1856
    %v1877 = vmul.f32 %v1867, %v1857
    %v1878 = vmul.f32 %v1868, %v1858
    %v1879 = vadd.f32 %v1869, %v1870
    %v1880 = vadd.f32 %v1879, %v1871
    %v1881 = vadd.f32 %v1880, %v1872
    %v1882 = vadd.f32 %v1881, %v1873
    %v1883 = vadd.f32 %v1882, %v1874
    %v1884 = vadd.f32 %v1883, %v1875
    %v1885 = vadd.f32 %v1884, %v1876
    %v1886 = vadd.f32 %v1885, %v1877
    %v1887 = vadd.f32 %v1886, %v1878
    %1888 = vadd.xlane.f32.xlu0 %v1887
    %v1889 = vpop.xlane.xlu0 %1888
    %v1890 = vrot.slane %v1889, 4
    %v1891 = vadd.f32 %v1889, %v1890
    %v1892 = vrot.slane %v1891, 2
    %v1893 = vadd.f32 %v1891, %v1892
    %v1894 = vrot.slane %v1893, 1
    %v1895 = vadd.f32 %v1893, %v1894
    %s1896 = vtos %v1895
    %s1897 = sadd.f32 %s1450, %s1896
    %v1898 = vadd.f32 %v1451, %v1825
    %v1899 = vadd.f32 %v1452, %v1827
    %v1900 = vadd.f32 %v1453, %v1830
    %v1901 = vadd.f32 %v1454, %v1832
    %v1902 = vadd.f32 %v1455, %v1835
    %v1903 = vadd.f32 %v1456, %v1837
    %v1904 = vadd.f32 %v1457, %v1840
    %v1905 = vadd.f32 %v1458, %v1842
    %v1906 = vadd.f32 %v1459, %v1845
    %v1907 = vadd.f32 %v1460, %v1847
    %v1908 = vpack.c.bf16 %v1898, %v1898
    %v1909 = vpack.c.bf16 %v1899, %v1899
    %v1910 = vpack.c.bf16 %v1900, %v1900
    %v1911 = vpack.c.bf16 %v1901, %v1901
    %v1912 = vpack.c.bf16 %v1902, %v1902
    %v1913 = vpack.c.bf16 %v1903, %v1903
    %v1914 = vpack.c.bf16 %v1904, %v1904
    %v1915 = vpack.c.bf16 %v1905, %v1905
    %v1916 = vpack.c.bf16 %v1906, %v1906
    %v1917 = vpack.c.bf16 %v1907, %v1907
    %1918 = vst [vmem:[%s3] sm:$0xf] %v1908
    %1919 = vst [vmem:[%s3 + $0x4] sm:$0xf] %v1909
    %1920 = vst [vmem:[%s3 + $0x8] sm:$0xf] %v1910
    %1921 = vst [vmem:[%s3 + $0xc] sm:$0xf] %v1911
    %1922 = vst [vmem:[%s3 + $0x10] sm:$0xf] %v1912
    %1923 = vst [vmem:[%s3 + $0x14] sm:$0xf] %v1913
    %1924 = vst [vmem:[%s3 + $0x18] sm:$0xf] %v1914
    %1925 = vst [vmem:[%s3 + $0x1c] sm:$0xf] %v1915
    %1926 = vst [vmem:[%s3 + $0x20] sm:$0xf] %v1916
    %1927 = vst [vmem:[%s3 + $0x24] sm:$0xf] %v1917
    %vm1928 = vcmp.eq.s32.totalorder %v53, 0
    %v1929 = vstv %s1897
    %v1930 = vsel %vm1928, %v1929, 0.0
    %1931 = vst [vmem:[%s4] sm:$0x1] %v1930
    // Predicated region
    $region18: #{encodec_rvq_forward.4} parent=1 // pred_check
      _
    $region19: #{encodec_rvq_forward.4} parent=1 // pred_check_branch
      %1933 = sbr.rel (0) target = $region21
    $region20: #{encodec_rvq_forward.4} parent=1 // pred_region
      _
    $region21: #{encodec_rvq_forward.4} parent=1 // pred_fallthru
      _
    // Predicated region
    $region22: #{encodec_rvq_forward.4} parent=1 // pred_check
      _
    $region23: #{encodec_rvq_forward.4} parent=1 // pred_check_branch
      %1935 = sbr.rel (0) target = $region25
    $region24: #{encodec_rvq_forward.4} parent=1 // pred_region
      _
    $region25: #{encodec_rvq_forward.4} parent=1 // pred_fallthru
      _
    // Predicated region
    $region26: #{encodec_rvq_forward.4} parent=1 // pred_check
      _
    $region27: #{encodec_rvq_forward.4} parent=1 // pred_check_branch
      %1937 = sbr.rel (0) target = $region29
    $region28: #{encodec_rvq_forward.4} parent=1 // pred_region
      _
    $region29: #{encodec_rvq_forward.4} parent=1 // pred_fallthru
      _
    // Predicated region
    $region30: #{encodec_rvq_forward.4} parent=1 // pred_check
      _
    $region31: #{encodec_rvq_forward.4} parent=1 // pred_check_branch
      %1939 = sbr.rel (0) target = $region33
    $region32: #{encodec_rvq_forward.4} parent=1 // pred_region
      _
    $region33: #{encodec_rvq_forward.4} parent=1 // pred_fallthru
      _
    %1940 = vsyncpa [#allocation3], 1

</llo_original>
